<compile_context>
chip_gen: v6e
topology: v6e:2x2x1
jax: 0.10.0
libtpu: 0.0.40
codegen_flags: <defaults>
</compile_context>

<pallas_src>
import functools
import math

import jax
import jax.numpy as jnp
from jax.experimental import pallas as pl
from jax.experimental.pallas import tpu as pltpu

EPS = 1e-5
NEG_INF = -1e30  # large finite negative (safer than -inf if rows ever fully masked)


# ----------------------------- in-kernel math -------------------------------

def _layernorm(x, scale, shift):
    # matches custom LayerNorm: biased variance, eps=1e-5, scale & shift
    mean = jnp.mean(x, axis=-1, keepdims=True)
    var = jnp.mean((x - mean) ** 2, axis=-1, keepdims=True)
    return (x - mean) / jnp.sqrt(var + EPS) * scale + shift


def _gelu(x):
    # tanh-approximation GELU
    return 0.5 * x * (1.0 + jnp.tanh(
        jnp.sqrt(2.0 / jnp.pi) * (x + 0.044715 * x * x * x)))


# ----------------------------- hw / tiling helpers ---------------------------

def _tpu_vmem_bytes():
    try:
        return int(pltpu.get_tpu_info().vmem_capacity_bytes)
    except Exception:
        return 64 << 20  # conservative: smallest per-core VMEM of any generation


def _pick_seq_tile(s):
    """Q-tile size: lane/MXU-friendly multiples of 128 for long S, 8-row tiles
    for small S (keeps the second-to-last block dim a multiple of 8)."""
    for c in (512, 256, 128):
        if s % c == 0:
            return c
    if s > 8 and s % 8 == 0:
        return 8
    return s


def _pick_vocab_tile(v, vmem_bytes):
    """Lane-dense vocab tile (multiple of 128), capped lower on small-VMEM
    generations (v7x). Falls back to full V if nothing divides."""
    cap = 1024 if vmem_bytes <= (96 << 20) else 2048
    for c in (2048, 1024, 512, 256, 128):
        if c <= cap and c < v and v % c == 0:
            return c
    return v


def _vmem_limit_bytes(block_bytes, scratch_bytes, intermediate_bytes):
    cap = _tpu_vmem_bytes()
    # 2x block bytes for double buffering + scratch + live intermediates + headroom
    need = 2 * int(block_bytes) + int(scratch_bytes) + int(intermediate_bytes) + (8 << 20)
    return int(min(max(need, 32 << 20), cap))


def _weight_spec(a):
    """Grid-invariant (replicated) weight block: block index never changes, so
    Pallas does not re-DMA it across grid steps."""
    nd = a.ndim
    return pl.BlockSpec(a.shape, lambda b, j, _nd=nd: (0,) * _nd)


# ----------------------------- Pallas kernels --------------------------------

def transformer_block_kernel(x_ref,
                             ln1_s_ref, ln1_b_ref,
                             wq_ref, bq_ref, wk_ref, bk_ref, wv_ref, bv_ref,
                             wo_ref, bo_ref,
                             ln2_s_ref, ln2_b_ref,
                             w1_ref, b1_ref, w2_ref, b2_ref,
                             o_ref, k_cache, v_cache, *, n_heads, q_tile):
    S, D = x_ref.shape[1], x_ref.shape[2]
    H = n_heads
    dh = D // H
    TQ = q_tile

    qi = pl.program_id(1)
    q_start = pl.multiple_of(qi * TQ, TQ)

    # ---- K/V projection + LN over the whole sequence: once per (batch, layer) ----
    @pl.when(qi == 0)
    def _():
        h_kv = _layernorm(x_ref[0], ln1_s_ref[...], ln1_b_ref[...])        # (S, D) f32
        hkv_b = h_kv.astype(jnp.bfloat16)
        k = jnp.dot(hkv_b, wk_ref[...],
                    preferred_element_type=jnp.float32) + bk_ref[...]
        v = jnp.dot(hkv_b, wv_ref[...],
                    preferred_element_type=jnp.float32) + bv_ref[...]
        k_cache[...] = k.astype(jnp.bfloat16)                              # bf16 cache
        v_cache[...] = v.astype(jnp.bfloat16)

    # ---- attention sub-layer (pre-norm, causal MHA, residual) for this Q tile ----
    x_q = x_ref[0, pl.ds(q_start, TQ), :]                                  # (TQ, D)
    h_q = _layernorm(x_q, ln1_s_ref[...], ln1_b_ref[...])
    q = jnp.dot(h_q.astype(jnp.bfloat16), wq_ref[...],
                preferred_element_type=jnp.float32) + bq_ref[...]          # (TQ, D) f32

    # batched-heads layout: (H, TQ, dh) / (H, S, dh); single relayout per tile,
    # no per-head lane slicing and no `.T`.
    q3 = q.astype(jnp.bfloat16).reshape(TQ, H, dh).transpose(1, 0, 2)
    k3 = k_cache[...].reshape(S, H, dh).transpose(1, 0, 2)
    v3 = v_cache[...].reshape(S, H, dh).transpose(1, 0, 2)

    s = jnp.einsum("hqd,hkd->hqk", q3, k3,
                   preferred_element_type=jnp.float32) * (1.0 / math.sqrt(dh))
    row = q_start + jax.lax.broadcasted_iota(jnp.int32, (TQ, S), 0)
    col = jax.lax.broadcasted_iota(jnp.int32, (TQ, S), 1)
    s = jnp.where((col <= row)[None, :, :], s, NEG_INF)
    m = jnp.max(s, axis=-1, keepdims=True)
    e = jnp.exp(s - m)                                                     # f32 EUP
    p = e * pl.reciprocal(jnp.sum(e, axis=-1, keepdims=True), approx=True)
    ctx3 = jnp.einsum("hqk,hkd->hqd", p.astype(jnp.bfloat16), v3,
                      preferred_element_type=jnp.float32)                  # (H, TQ, dh)
    ctx = ctx3.transpose(1, 0, 2).reshape(TQ, D)                           # (TQ, D) f32

    attn_out = jnp.dot(ctx.astype(jnp.bfloat16), wo_ref[...],
                       preferred_element_type=jnp.float32) + bo_ref[...]
    x1 = x_q + attn_out                     # dropout(p=0) == identity

    # ---- feed-forward sub-layer (pre-norm, Linear-GELU-Linear, residual) ----
    h = _layernorm(x1, ln2_s_ref[...], ln2_b_ref[...])
    h = jnp.dot(h.astype(jnp.bfloat16), w1_ref[...],
                preferred_element_type=jnp.float32) + b1_ref[...]
    h = _gelu(h)
    h = jnp.dot(h.astype(jnp.bfloat16), w2_ref[...],
                preferred_element_type=jnp.float32) + b2_ref[...]
    o_ref[0] = (x1 + h).astype(o_ref.dtype)


def final_norm_proj_kernel(x_ref, ln_s_ref, ln_b_ref, w_out_ref, o_ref, h_scr):
    # final LayerNorm computed once per batch element (hoisted out of vocab loop)
    @pl.when(pl.program_id(1) == 0)
    def _():
        h_scr[...] = _layernorm(x_ref[0], ln_s_ref[...],
                                ln_b_ref[...]).astype(jnp.bfloat16)
    o_ref[0] = jnp.dot(h_scr[...], w_out_ref[...],
                       preferred_element_type=jnp.float32).astype(o_ref.dtype)


# ----------------------------- wrappers ---------------------------------------

def transformer_block(x, p, n_heads):
    B, S, D = x.shape
    TQ = _pick_seq_tile(S)
    bf16 = jnp.bfloat16
    weights = [p["ln1_s"], p["ln1_b"],
               p["wq"].astype(bf16), p["bq"],
               p["wk"].astype(bf16), p["bk"],
               p["wv"].astype(bf16), p["bv"],
               p["wo"].astype(bf16), p["bo"],
               p["ln2_s"], p["ln2_b"],
               p["w1"].astype(bf16), p["b1"],
               p["w2"].astype(bf16), p["b2"]]

    block_bytes = (S * D * 4) + (TQ * D * 4) + sum(
        int(w.size) * w.dtype.itemsize for w in weights)
    scratch_bytes = 2 * S * D * 2                          # bf16 K/V caches
    interm_bytes = (n_heads * TQ * S * 4) + (TQ * 4 * D * 4) \
                   + 4 * (TQ * D * 4) + (S * D * 4)        # scores, ffn hidden, q/ctx, LN(x)
    vmem_limit = _vmem_limit_bytes(block_bytes, scratch_bytes, interm_bytes)

    return pl.pallas_call(
        functools.partial(transformer_block_kernel, n_heads=n_heads, q_tile=TQ),
        out_shape=jax.ShapeDtypeStruct((B, S, D), x.dtype),
        grid_spec=pltpu.PrefetchScalarGridSpec(
            num_scalar_prefetch=0,
            grid=(B, S // TQ),
            in_specs=[pl.BlockSpec((1, S, D), lambda b, qi: (b, 0, 0))]
                     + [_weight_spec(w) for w in weights],
            out_specs=pl.BlockSpec((1, TQ, D), lambda b, qi: (b, qi, 0)),
            scratch_shapes=[pltpu.VMEM((S, D), jnp.bfloat16),   # K cache
                            pltpu.VMEM((S, D), jnp.bfloat16)],  # V cache
        ),
        compiler_params=pltpu.CompilerParams(
            # qi axis is "arbitrary": K/V caches filled at qi==0 and reused.
            dimension_semantics=("parallel", "arbitrary"),
            vmem_limit_bytes=vmem_limit),
    )(x, *weights)


def final_norm_and_logits(x, ln_s, ln_b, w_out):
    B, S, D = x.shape
    V = w_out.shape[1]
    vmem = _tpu_vmem_bytes()
    TN = _pick_vocab_tile(V, vmem)
    w_out_b = w_out.astype(jnp.bfloat16)

    block_bytes = (S * D * 4) + (S * TN * 4) + (D * TN * 2) + 2 * D * 4
    scratch_bytes = S * D * 2                               # bf16 LN(x) scratch
    interm_bytes = S * D * 4
    vmem_limit = _vmem_limit_bytes(block_bytes, scratch_bytes, interm_bytes)

    return pl.pallas_call(
        final_norm_proj_kernel,
        out_shape=jax.ShapeDtypeStruct((B, S, V), x.dtype),
        grid_spec=pltpu.PrefetchScalarGridSpec(
            num_scalar_prefetch=0,
            grid=(B, V // TN),
            in_specs=[pl.BlockSpec((1, S, D), lambda b, j: (b, 0, 0)),
                      _weight_spec(ln_s), _weight_spec(ln_b),
                      pl.BlockSpec((D, TN), lambda b, j: (0, j))],
            out_specs=pl.BlockSpec((1, S, TN), lambda b, j: (b, 0, j)),
            scratch_shapes=[pltpu.VMEM((S, D), jnp.bfloat16)],
        ),
        compiler_params=pltpu.CompilerParams(
            # vocab axis "arbitrary": LN(x) scratch filled at j==0 and reused.
            dimension_semantics=("parallel", "arbitrary"),
            vmem_limit_bytes=vmem_limit),
    )(x, ln_s, ln_b, w_out_b)


def gpt_forward(tokens, params, n_heads):
    # embeddings (glue: gathers in plain JAX)
    B, S = tokens.shape
    tok_emb = jnp.take(params["tok_emb"], tokens, axis=0)      # (B, S, D)
    pos_emb = params["pos_emb"][:S]                            # (S, D)
    x = tok_emb + pos_emb[None, :, :]
    # dropout(p=0) is identity
    for blk in params["blocks"]:
        x = transformer_block(x, blk, n_heads)
    logits = final_norm_and_logits(x, params["fln_s"], params["fln_b"],
                                   params["w_out"])
    return logits


# ----------------------------- pure-JAX reference (f32) -----------------------

def _ref_block(x, p, n_heads):
    B, S, D = x.shape
    dh = D // n_heads
    sc = x
    h = _layernorm(x, p["ln1_s"], p["ln1_b"])
    q = h @ p["wq"] + p["bq"]
    k = h @ p["wk"] + p["bk"]
    v = h @ p["wv"] + p["bv"]
    q = q.reshape(B, S, n_heads, dh).transpose(0, 2, 1, 3)
    k = k.reshape(B, S, n_heads, dh).transpose(0, 2, 1, 3)
    v = v.reshape(B, S, n_heads, dh).transpose(0, 2, 1, 3)
    scores = jnp.einsum("bhqd,bhkd->bhqk", q, k) / math.sqrt(dh)
    mask = jnp.tril(jnp.ones((S, S), bool))
    scores = jnp.where(mask, scores, -jnp.inf)
    attn = jax.nn.softmax(scores, axis=-1)
    ctx = jnp.einsum("bhqk,bhkd->bhqd", attn, v).transpose(0, 2, 1, 3).reshape(B, S, D)
    x = sc + (ctx @ p["wo"] + p["bo"])
    sc = x
    h = _layernorm(x, p["ln2_s"], p["ln2_b"])
    h = _gelu(h @ p["w1"] + p["b1"]) @ p["w2"] + p["b2"]
    return sc + h


def gpt_forward_ref(tokens, params, n_heads):
    B, S = tokens.shape
    x = jnp.take(params["tok_emb"], tokens, axis=0) + params["pos_emb"][:S][None]
    for blk in params["blocks"]:
        x = _ref_block(x, blk, n_heads)
    x = _layernorm(x, params["fln_s"], params["fln_b"])
    return x @ params["w_out"]


# ----------------------------- param init -------------------------------------

def init_params(key, vocab, ctx_len, d, n_layers):
    def nrm(k, shape, scale=0.02):
        return (scale * jax.random.normal(k, shape)).astype(jnp.float32)

    keys = jax.random.split(key, 2 + n_layers)
    params = {
        "tok_emb": nrm(keys[0], (vocab, d)),
        "pos_emb": nrm(keys[1], (ctx_len, d)),
        "fln_s": jnp.ones((1, d), jnp.float32),
        "fln_b": jnp.zeros((1, d), jnp.float32),
        "blocks": [],
    }
    for li in range(n_layers):
        ks = jax.random.split(keys[2 + li], 8)
        blk = {
            "ln1_s": jnp.ones((1, d), jnp.float32),
            "ln1_b": jnp.zeros((1, d), jnp.float32),
            "wq": nrm(ks[0], (d, d)), "bq": jnp.zeros((1, d), jnp.float32),
            "wk": nrm(ks[1], (d, d)), "bk": jnp.zeros((1, d), jnp.float32),
            "wv": nrm(ks[2], (d, d)), "bv": jnp.zeros((1, d), jnp.float32),
            "wo": nrm(ks[3], (d, d)), "bo": nrm(ks[4], (1, d)),
            "ln2_s": jnp.ones((1, d), jnp.float32),
            "ln2_b": jnp.zeros((1, d), jnp.float32),
            "w1": nrm(ks[5], (d, 4 * d)), "b1": jnp.zeros((1, 4 * d), jnp.float32),
            "w2": nrm(ks[6], (4 * d, d)), "b2": jnp.zeros((1, d), jnp.float32),
        }
        params["blocks"].append(blk)
    params["w_out"] = nrm(jax.random.split(keys[-1], 9)[-1], (d, vocab))
    return params


# ----------------------------- main --------------------------------------------

if __name__ == "__main__":
    # small GPT config: 2 query tiles (exercises the K/V-cache @pl.when path),
    # 2 vocab tiles, and dh=128 so head contractions are lane/MXU aligned.
    VOCAB = 256
    CTX_LEN = 32
    EMB_DIM = 256
    N_HEADS = 2
    N_LAYERS = 2
    BATCH, SEQ = 2, 16

    key = jax.random.PRNGKey(0)
    kp, kx = jax.random.split(key)
    params = init_params(kp, VOCAB, CTX_LEN, EMB_DIM, N_LAYERS)
    tokens = jax.random.randint(kx, (BATCH, SEQ), 0, VOCAB, dtype=jnp.int32)

    logits = gpt_forward(tokens, params, N_HEADS)
    logits = jax.block_until_ready(logits)
    assert logits.shape == (BATCH, SEQ, VOCAB)

    # f32 reference; kernels use bf16 MXU inputs with f32 accumulation, so the
    # comparison tolerance is loosened accordingly.
    ref = gpt_forward_ref(tokens, params, N_HEADS)
    max_err = float(jnp.max(jnp.abs(logits - ref)))
    assert jnp.allclose(logits, ref, rtol=5e-2, atol=2e-2), \
        f"mismatch vs reference (max abs err {max_err})"

    print("KERNEL_OK")
</pallas_src>

<mosaic_0001>
module attributes {stable_mosaic.version = 11 : i64} {
  func.func @transformer_block_kernel(%arg0: i32, %arg1: i32, %arg2: memref<1x16x256xf32, #tpu.memory_space<vmem>>, %arg3: memref<1x256xf32, #tpu.memory_space<vmem>>, %arg4: memref<1x256xf32, #tpu.memory_space<vmem>>, %arg5: memref<256x256xbf16, #tpu.memory_space<vmem>>, %arg6: memref<1x256xf32, #tpu.memory_space<vmem>>, %arg7: memref<256x256xbf16, #tpu.memory_space<vmem>>, %arg8: memref<1x256xf32, #tpu.memory_space<vmem>>, %arg9: memref<256x256xbf16, #tpu.memory_space<vmem>>, %arg10: memref<1x256xf32, #tpu.memory_space<vmem>>, %arg11: memref<256x256xbf16, #tpu.memory_space<vmem>>, %arg12: memref<1x256xf32, #tpu.memory_space<vmem>>, %arg13: memref<1x256xf32, #tpu.memory_space<vmem>>, %arg14: memref<1x256xf32, #tpu.memory_space<vmem>>, %arg15: memref<256x1024xbf16, #tpu.memory_space<vmem>>, %arg16: memref<1x1024xf32, #tpu.memory_space<vmem>>, %arg17: memref<1024x256xbf16, #tpu.memory_space<vmem>>, %arg18: memref<1x256xf32, #tpu.memory_space<vmem>>, %arg19: memref<1x8x256xf32, #tpu.memory_space<vmem>>, %arg20: memref<16x256xbf16, #tpu.memory_space<vmem>>, %arg21: memref<16x256xbf16, #tpu.memory_space<vmem>>) attributes {dimension_semantics = [#tpu.dimension_semantics<parallel>, #tpu.dimension_semantics<arbitrary>], iteration_bounds = array<i64: 2, 2>, scalar_prefetch = 0 : i64, scratch_operands = 2 : i64, tpu.core_type = #tpu.core_type<tc>, window_params = [{transform_indices = @transform_0, window_bounds = array<i64: 1, 16, 256>}, {pipeline_mode = #tpu.pipeline_mode<synchronous>, transform_indices = @transform_1, window_bounds = array<i64: 1, 256>}, {pipeline_mode = #tpu.pipeline_mode<synchronous>, transform_indices = @transform_2, window_bounds = array<i64: 1, 256>}, {pipeline_mode = #tpu.pipeline_mode<synchronous>, transform_indices = @transform_3, window_bounds = array<i64: 256, 256>}, {pipeline_mode = #tpu.pipeline_mode<synchronous>, transform_indices = @transform_4, window_bounds = array<i64: 1, 256>}, {pipeline_mode = #tpu.pipeline_mode<synchronous>, transform_indices = @transform_5, window_bounds = array<i64: 256, 256>}, {pipeline_mode = #tpu.pipeline_mode<synchronous>, transform_indices = @transform_6, window_bounds = array<i64: 1, 256>}, {pipeline_mode = #tpu.pipeline_mode<synchronous>, transform_indices = @transform_7, window_bounds = array<i64: 256, 256>}, {pipeline_mode = #tpu.pipeline_mode<synchronous>, transform_indices = @transform_8, window_bounds = array<i64: 1, 256>}, {pipeline_mode = #tpu.pipeline_mode<synchronous>, transform_indices = @transform_9, window_bounds = array<i64: 256, 256>}, {pipeline_mode = #tpu.pipeline_mode<synchronous>, transform_indices = @transform_10, window_bounds = array<i64: 1, 256>}, {pipeline_mode = #tpu.pipeline_mode<synchronous>, transform_indices = @transform_11, window_bounds = array<i64: 1, 256>}, {pipeline_mode = #tpu.pipeline_mode<synchronous>, transform_indices = @transform_12, window_bounds = array<i64: 1, 256>}, {pipeline_mode = #tpu.pipeline_mode<synchronous>, transform_indices = @transform_13, window_bounds = array<i64: 256, 1024>}, {pipeline_mode = #tpu.pipeline_mode<synchronous>, transform_indices = @transform_14, window_bounds = array<i64: 1, 1024>}, {pipeline_mode = #tpu.pipeline_mode<synchronous>, transform_indices = @transform_15, window_bounds = array<i64: 1024, 256>}, {pipeline_mode = #tpu.pipeline_mode<synchronous>, transform_indices = @transform_16, window_bounds = array<i64: 1, 256>}, {transform_indices = @transform_17, window_bounds = array<i64: 1, 8, 256>}]} {
    %c8_i32 = arith.constant 8 : i32
    %0 = arith.muli %arg1, %c8_i32 : i32
    %1 = tpu.assume_multiple %0, 8 : i32
    %c0_i32 = arith.constant 0 : i32
    %2 = arith.cmpi eq, %arg1, %c0_i32 : i32
    %3 = arith.extui %2 : i1 to i32
    %c0_i32_0 = arith.constant 0 : i32
    %4 = arith.cmpi ne, %3, %c0_i32_0 : i32
    scf.if %4 {
      %c0_56 = arith.constant 0 : index
      %c0_57 = arith.constant 0 : index
      %c0_58 = arith.constant 0 : index
      %135 = vector.load %arg2[%c0_56, %c0_57, %c0_58] : memref<1x16x256xf32, #tpu.memory_space<vmem>>, vector<1x16x256xf32>
      %136 = vector.shape_cast %135 : vector<1x16x256xf32> to vector<16x256xf32>
      %c0_59 = arith.constant 0 : index
      %c0_60 = arith.constant 0 : index
      %137 = vector.load %arg3[%c0_59, %c0_60] : memref<1x256xf32, #tpu.memory_space<vmem>>, vector<1x256xf32>
      %c0_61 = arith.constant 0 : index
      %c0_62 = arith.constant 0 : index
      %138 = vector.load %arg4[%c0_61, %c0_62] : memref<1x256xf32, #tpu.memory_space<vmem>>, vector<1x256xf32>
      %cst_63 = arith.constant dense<0.000000e+00> : vector<16xf32>
      %139 = vector.multi_reduction <add>, %136, %cst_63 [1] : vector<16x256xf32> to vector<16xf32>
      %140 = vector.shape_cast %139 : vector<16xf32> to vector<16x1xf32>
      %cst_64 = arith.constant 2.560000e+02 : f32
      %141 = vector.broadcast %cst_64 : f32 to vector<16x1xf32>
      %142 = arith.divf %140, %141 : vector<16x1xf32>
      %143 = vector.broadcast %142 : vector<16x1xf32> to vector<16x256xf32>
      %144 = arith.subf %136, %143 : vector<16x256xf32>
      %145 = arith.mulf %144, %144 : vector<16x256xf32>
      %cst_65 = arith.constant dense<0.000000e+00> : vector<16xf32>
      %146 = vector.multi_reduction <add>, %145, %cst_65 [1] : vector<16x256xf32> to vector<16xf32>
      %147 = vector.shape_cast %146 : vector<16xf32> to vector<16x1xf32>
      %cst_66 = arith.constant 2.560000e+02 : f32
      %148 = vector.broadcast %cst_66 : f32 to vector<16x1xf32>
      %149 = arith.divf %147, %148 : vector<16x1xf32>
      %150 = vector.broadcast %142 : vector<16x1xf32> to vector<16x256xf32>
      %151 = arith.subf %136, %150 : vector<16x256xf32>
      %cst_67 = arith.constant 9.99999974E-6 : f32
      %152 = vector.broadcast %cst_67 : f32 to vector<16x1xf32>
      %153 = arith.addf %149, %152 : vector<16x1xf32>
      %154 = math.sqrt %153 : vector<16x1xf32>
      %155 = vector.broadcast %154 : vector<16x1xf32> to vector<16x256xf32>
      %156 = arith.divf %151, %155 : vector<16x256xf32>
      %157 = vector.broadcast %137 : vector<1x256xf32> to vector<16x256xf32>
      %158 = arith.mulf %156, %157 : vector<16x256xf32>
      %159 = vector.broadcast %138 : vector<1x256xf32> to vector<16x256xf32>
      %160 = arith.addf %158, %159 : vector<16x256xf32>
      %161 = arith.truncf %160 : vector<16x256xf32> to vector<16x256xbf16>
      %c0_68 = arith.constant 0 : index
      %c0_69 = arith.constant 0 : index
      %162 = vector.load %arg7[%c0_68, %c0_69] : memref<256x256xbf16, #tpu.memory_space<vmem>>, vector<256x256xbf16>
      %cst_70 = arith.constant dense<0.000000e+00> : vector<16x256xf32>
      %163 = tpu.matmul %161, %162, %cst_70 {dimension_numbers = #tpu.dot_dimension_numbers<[1], [0], [0], [1], [0, 0, 1, 1], [], []>} : vector<16x256xbf16>, vector<256x256xbf16>, vector<16x256xf32> -> vector<16x256xf32>
      %c0_71 = arith.constant 0 : index
      %c0_72 = arith.constant 0 : index
      %164 = vector.load %arg8[%c0_71, %c0_72] : memref<1x256xf32, #tpu.memory_space<vmem>>, vector<1x256xf32>
      %165 = vector.broadcast %164 : vector<1x256xf32> to vector<16x256xf32>
      %166 = arith.addf %163, %165 : vector<16x256xf32>
      %c0_73 = arith.constant 0 : index
      %c0_74 = arith.constant 0 : index
      %167 = vector.load %arg9[%c0_73, %c0_74] : memref<256x256xbf16, #tpu.memory_space<vmem>>, vector<256x256xbf16>
      %cst_75 = arith.constant dense<0.000000e+00> : vector<16x256xf32>
      %168 = tpu.matmul %161, %167, %cst_75 {dimension_numbers = #tpu.dot_dimension_numbers<[1], [0], [0], [1], [0, 0, 1, 1], [], []>} : vector<16x256xbf16>, vector<256x256xbf16>, vector<16x256xf32> -> vector<16x256xf32>
      %c0_76 = arith.constant 0 : index
      %c0_77 = arith.constant 0 : index
      %169 = vector.load %arg10[%c0_76, %c0_77] : memref<1x256xf32, #tpu.memory_space<vmem>>, vector<1x256xf32>
      %170 = vector.broadcast %169 : vector<1x256xf32> to vector<16x256xf32>
      %171 = arith.addf %168, %170 : vector<16x256xf32>
      %172 = arith.truncf %166 : vector<16x256xf32> to vector<16x256xbf16>
      %c0_78 = arith.constant 0 : index
      %c0_79 = arith.constant 0 : index
      %173 = vector.load %arg20[%c0_78, %c0_79] : memref<16x256xbf16, #tpu.memory_space<vmem>>, vector<16x256xbf16>
      tpu.vector_store %arg20[%c0_78, %c0_79], %172 {strides = array<i32>} : memref<16x256xbf16, #tpu.memory_space<vmem>>, vector<16x256xbf16>,
      %174 = arith.truncf %171 : vector<16x256xf32> to vector<16x256xbf16>
      %c0_80 = arith.constant 0 : index
      %c0_81 = arith.constant 0 : index
      %175 = vector.load %arg21[%c0_80, %c0_81] : memref<16x256xbf16, #tpu.memory_space<vmem>>, vector<16x256xbf16>
      tpu.vector_store %arg21[%c0_80, %c0_81], %174 {strides = array<i32>} : memref<16x256xbf16, #tpu.memory_space<vmem>>, vector<16x256xbf16>,
    } else {
    }
    %c0 = arith.constant 0 : index
    %5 = arith.index_cast %1 : i32 to index
    %c0_1 = arith.constant 0 : index
    %6 = vector.load %arg2[%c0, %5, %c0_1] : memref<1x16x256xf32, #tpu.memory_space<vmem>>, vector<1x8x256xf32>
    %7 = vector.shape_cast %6 : vector<1x8x256xf32> to vector<8x256xf32>
    %c0_2 = arith.constant 0 : index
    %c0_3 = arith.constant 0 : index
    %8 = vector.load %arg3[%c0_2, %c0_3] : memref<1x256xf32, #tpu.memory_space<vmem>>, vector<1x256xf32>
    %c0_4 = arith.constant 0 : index
    %c0_5 = arith.constant 0 : index
    %9 = vector.load %arg4[%c0_4, %c0_5] : memref<1x256xf32, #tpu.memory_space<vmem>>, vector<1x256xf32>
    %cst = arith.constant dense<0.000000e+00> : vector<8xf32>
    %10 = vector.multi_reduction <add>, %7, %cst [1] : vector<8x256xf32> to vector<8xf32>
    %11 = vector.shape_cast %10 : vector<8xf32> to vector<8x1xf32>
    %cst_6 = arith.constant 2.560000e+02 : f32
    %12 = vector.broadcast %cst_6 : f32 to vector<8x1xf32>
    %13 = arith.divf %11, %12 : vector<8x1xf32>
    %14 = vector.broadcast %13 : vector<8x1xf32> to vector<8x256xf32>
    %15 = arith.subf %7, %14 : vector<8x256xf32>
    %16 = arith.mulf %15, %15 : vector<8x256xf32>
    %cst_7 = arith.constant dense<0.000000e+00> : vector<8xf32>
    %17 = vector.multi_reduction <add>, %16, %cst_7 [1] : vector<8x256xf32> to vector<8xf32>
    %18 = vector.shape_cast %17 : vector<8xf32> to vector<8x1xf32>
    %cst_8 = arith.constant 2.560000e+02 : f32
    %19 = vector.broadcast %cst_8 : f32 to vector<8x1xf32>
    %20 = arith.divf %18, %19 : vector<8x1xf32>
    %21 = vector.broadcast %13 : vector<8x1xf32> to vector<8x256xf32>
    %22 = arith.subf %7, %21 : vector<8x256xf32>
    %cst_9 = arith.constant 9.99999974E-6 : f32
    %23 = vector.broadcast %cst_9 : f32 to vector<8x1xf32>
    %24 = arith.addf %20, %23 : vector<8x1xf32>
    %25 = math.sqrt %24 : vector<8x1xf32>
    %26 = vector.broadcast %25 : vector<8x1xf32> to vector<8x256xf32>
    %27 = arith.divf %22, %26 : vector<8x256xf32>
    %28 = vector.broadcast %8 : vector<1x256xf32> to vector<8x256xf32>
    %29 = arith.mulf %27, %28 : vector<8x256xf32>
    %30 = vector.broadcast %9 : vector<1x256xf32> to vector<8x256xf32>
    %31 = arith.addf %29, %30 : vector<8x256xf32>
    %32 = arith.truncf %31 : vector<8x256xf32> to vector<8x256xbf16>
    %c0_10 = arith.constant 0 : index
    %c0_11 = arith.constant 0 : index
    %33 = vector.load %arg5[%c0_10, %c0_11] : memref<256x256xbf16, #tpu.memory_space<vmem>>, vector<256x256xbf16>
    %cst_12 = arith.constant dense<0.000000e+00> : vector<8x256xf32>
    %34 = tpu.matmul %32, %33, %cst_12 {dimension_numbers = #tpu.dot_dimension_numbers<[1], [0], [0], [1], [0, 0, 1, 1], [], []>} : vector<8x256xbf16>, vector<256x256xbf16>, vector<8x256xf32> -> vector<8x256xf32>
    %c0_13 = arith.constant 0 : index
    %c0_14 = arith.constant 0 : index
    %35 = vector.load %arg6[%c0_13, %c0_14] : memref<1x256xf32, #tpu.memory_space<vmem>>, vector<1x256xf32>
    %36 = vector.broadcast %35 : vector<1x256xf32> to vector<8x256xf32>
    %37 = arith.addf %34, %36 : vector<8x256xf32>
    %38 = arith.truncf %37 : vector<8x256xf32> to vector<8x256xbf16>
    %39 = vector.shape_cast %38 : vector<8x256xbf16> to vector<8x2x128xbf16>
    %40 = tpu.transpose %39, [1, 0, 2] : vector<8x2x128xbf16> -> vector<2x8x128xbf16>
    %c0_15 = arith.constant 0 : index
    %c0_16 = arith.constant 0 : index
    %41 = vector.load %arg20[%c0_15, %c0_16] : memref<16x256xbf16, #tpu.memory_space<vmem>>, vector<16x256xbf16>
    %42 = vector.shape_cast %41 : vector<16x256xbf16> to vector<16x2x128xbf16>
    %43 = tpu.transpose %42, [1, 0, 2] : vector<16x2x128xbf16> -> vector<2x16x128xbf16>
    %c0_17 = arith.constant 0 : index
    %c0_18 = arith.constant 0 : index
    %44 = vector.load %arg21[%c0_17, %c0_18] : memref<16x256xbf16, #tpu.memory_space<vmem>>, vector<16x256xbf16>
    %45 = vector.shape_cast %44 : vector<16x256xbf16> to vector<16x2x128xbf16>
    %46 = tpu.transpose %45, [1, 0, 2] : vector<16x2x128xbf16> -> vector<2x16x128xbf16>
    "tpu.trace_start"() <{level = 10 : i32, message = "hqd,hkd->hqk"}> : () -> ()
    %cst_19 = arith.constant dense<0.000000e+00> : vector<2x8x16xf32>
    %47 = tpu.matmul %40, %43, %cst_19 {dimension_numbers = #tpu.dot_dimension_numbers<[2], [2], [1], [1], [0, 0, 0, 1, 1, 1], [0], [0]>} : vector<2x8x128xbf16>, vector<2x16x128xbf16>, vector<2x8x16xf32> -> vector<2x8x16xf32>
    "tpu.trace_stop"() : () -> ()
    %cst_20 = arith.constant 0.0883883461 : f32
    %48 = vector.broadcast %cst_20 : f32 to vector<2x8x16xf32>
    %49 = arith.mulf %47, %48 : vector<2x8x16xf32>
    %50 = tpu.iota {dimensions = array<i32: 0>} : vector<8x16xi32>
    %51 = vector.broadcast %1 : i32 to vector<8x16xi32>
    %52 = arith.addi %51, %50 : vector<8x16xi32>
    %53 = tpu.iota {dimensions = array<i32: 1>} : vector<8x16xi32>
    %54 = arith.cmpi sle, %53, %52 : vector<8x16xi32>
    %55 = vector.shape_cast %54 : vector<8x16xi1> to vector<1x8x16xi1>
    %cst_21 = arith.constant -1.000000e+30 : f32
    %56 = vector.shape_cast %55 : vector<1x8x16xi1> to vector<1x8x16xi1>
    %57 = vector.broadcast %56 : vector<1x8x16xi1> to vector<2x8x16xi1>
    %58 = vector.broadcast %cst_21 : f32 to vector<2x8x16xf32>
    %59 = arith.select %57, %49, %58 : vector<2x8x16xi1>, vector<2x8x16xf32>
    %cst_22 = arith.constant dense<0xFF800000> : vector<2x8xf32>
    %60 = vector.multi_reduction <maximumf>, %59, %cst_22 [2] : vector<2x8x16xf32> to vector<2x8xf32>
    %61 = vector.shape_cast %60 : vector<2x8xf32> to vector<2x8x1xf32>
    %62 = vector.broadcast %61 : vector<2x8x1xf32> to vector<2x8x16xf32>
    %63 = arith.subf %59, %62 : vector<2x8x16xf32>
    %64 = math.exp %63 : vector<2x8x16xf32>
    %cst_23 = arith.constant dense<0.000000e+00> : vector<2x8xf32>
    %65 = vector.multi_reduction <add>, %64, %cst_23 [2] : vector<2x8x16xf32> to vector<2x8xf32>
    %66 = vector.shape_cast %65 : vector<2x8xf32> to vector<2x8x1xf32>
    %67 = tpu.reciprocal %66 {approx = true} : vector<2x8x1xf32> -> vector<2x8x1xf32>
    %68 = vector.broadcast %67 : vector<2x8x1xf32> to vector<2x8x16xf32>
    %69 = arith.mulf %64, %68 : vector<2x8x16xf32>
    %70 = arith.truncf %69 : vector<2x8x16xf32> to vector<2x8x16xbf16>
    "tpu.trace_start"() <{level = 10 : i32, message = "hqk,hkd->hqd"}> : () -> ()
    %cst_24 = arith.constant dense<0.000000e+00> : vector<2x8x128xf32>
    %71 = tpu.matmul %70, %46, %cst_24 {dimension_numbers = #tpu.dot_dimension_numbers<[2], [1], [1], [2], [0, 0, 0, 1, 1, 2], [0], [0]>} : vector<2x8x16xbf16>, vector<2x16x128xbf16>, vector<2x8x128xf32> -> vector<2x8x128xf32>
    "tpu.trace_stop"() : () -> ()
    %72 = tpu.transpose %71, [1, 0, 2] : vector<2x8x128xf32> -> vector<8x2x128xf32>
    %73 = vector.shape_cast %72 : vector<8x2x128xf32> to vector<8x256xf32>
    %74 = arith.truncf %73 : vector<8x256xf32> to vector<8x256xbf16>
    %c0_25 = arith.constant 0 : index
    %c0_26 = arith.constant 0 : index
    %75 = vector.load %arg11[%c0_25, %c0_26] : memref<256x256xbf16, #tpu.memory_space<vmem>>, vector<256x256xbf16>
    %cst_27 = arith.constant dense<0.000000e+00> : vector<8x256xf32>
    %76 = tpu.matmul %74, %75, %cst_27 {dimension_numbers = #tpu.dot_dimension_numbers<[1], [0], [0], [1], [0, 0, 1, 1], [], []>} : vector<8x256xbf16>, vector<256x256xbf16>, vector<8x256xf32> -> vector<8x256xf32>
    %c0_28 = arith.constant 0 : index
    %c0_29 = arith.constant 0 : index
    %77 = vector.load %arg12[%c0_28, %c0_29] : memref<1x256xf32, #tpu.memory_space<vmem>>, vector<1x256xf32>
    %78 = vector.broadcast %77 : vector<1x256xf32> to vector<8x256xf32>
    %79 = arith.addf %76, %78 : vector<8x256xf32>
    %80 = arith.addf %7, %79 : vector<8x256xf32>
    %c0_30 = arith.constant 0 : index
    %c0_31 = arith.constant 0 : index
    %81 = vector.load %arg13[%c0_30, %c0_31] : memref<1x256xf32, #tpu.memory_space<vmem>>, vector<1x256xf32>
    %c0_32 = arith.constant 0 : index
    %c0_33 = arith.constant 0 : index
    %82 = vector.load %arg14[%c0_32, %c0_33] : memref<1x256xf32, #tpu.memory_space<vmem>>, vector<1x256xf32>
    %cst_34 = arith.constant dense<0.000000e+00> : vector<8xf32>
    %83 = vector.multi_reduction <add>, %80, %cst_34 [1] : vector<8x256xf32> to vector<8xf32>
    %84 = vector.shape_cast %83 : vector<8xf32> to vector<8x1xf32>
    %cst_35 = arith.constant 2.560000e+02 : f32
    %85 = vector.broadcast %cst_35 : f32 to vector<8x1xf32>
    %86 = arith.divf %84, %85 : vector<8x1xf32>
    %87 = vector.broadcast %86 : vector<8x1xf32> to vector<8x256xf32>
    %88 = arith.subf %80, %87 : vector<8x256xf32>
    %89 = arith.mulf %88, %88 : vector<8x256xf32>
    %cst_36 = arith.constant dense<0.000000e+00> : vector<8xf32>
    %90 = vector.multi_reduction <add>, %89, %cst_36 [1] : vector<8x256xf32> to vector<8xf32>
    %91 = vector.shape_cast %90 : vector<8xf32> to vector<8x1xf32>
    %cst_37 = arith.constant 2.560000e+02 : f32
    %92 = vector.broadcast %cst_37 : f32 to vector<8x1xf32>
    %93 = arith.divf %91, %92 : vector<8x1xf32>
    %94 = vector.broadcast %86 : vector<8x1xf32> to vector<8x256xf32>
    %95 = arith.subf %80, %94 : vector<8x256xf32>
    %cst_38 = arith.constant 9.99999974E-6 : f32
    %96 = vector.broadcast %cst_38 : f32 to vector<8x1xf32>
    %97 = arith.addf %93, %96 : vector<8x1xf32>
    %98 = math.sqrt %97 : vector<8x1xf32>
    %99 = vector.broadcast %98 : vector<8x1xf32> to vector<8x256xf32>
    %100 = arith.divf %95, %99 : vector<8x256xf32>
    %101 = vector.broadcast %81 : vector<1x256xf32> to vector<8x256xf32>
    %102 = arith.mulf %100, %101 : vector<8x256xf32>
    %103 = vector.broadcast %82 : vector<1x256xf32> to vector<8x256xf32>
    %104 = arith.addf %102, %103 : vector<8x256xf32>
    %105 = arith.truncf %104 : vector<8x256xf32> to vector<8x256xbf16>
    %c0_39 = arith.constant 0 : index
    %c0_40 = arith.constant 0 : index
    %106 = vector.load %arg15[%c0_39, %c0_40] : memref<256x1024xbf16, #tpu.memory_space<vmem>>, vector<256x1024xbf16>
    %cst_41 = arith.constant dense<0.000000e+00> : vector<8x1024xf32>
    %107 = tpu.matmul %105, %106, %cst_41 {dimension_numbers = #tpu.dot_dimension_numbers<[1], [0], [0], [1], [0, 0, 1, 1], [], []>} : vector<8x256xbf16>, vector<256x1024xbf16>, vector<8x1024xf32> -> vector<8x1024xf32>
    %c0_42 = arith.constant 0 : index
    %c0_43 = arith.constant 0 : index
    %108 = vector.load %arg16[%c0_42, %c0_43] : memref<1x1024xf32, #tpu.memory_space<vmem>>, vector<1x1024xf32>
    %109 = vector.broadcast %108 : vector<1x1024xf32> to vector<8x1024xf32>
    %110 = arith.addf %107, %109 : vector<8x1024xf32>
    %cst_44 = arith.constant 5.000000e-01 : f32
    %111 = vector.broadcast %cst_44 : f32 to vector<8x1024xf32>
    %112 = arith.mulf %111, %110 : vector<8x1024xf32>
    %cst_45 = arith.constant 0.636619746 : f32
    %113 = math.sqrt %cst_45 : f32
    %cst_46 = arith.constant 4.471500e-02 : f32
    %114 = vector.broadcast %cst_46 : f32 to vector<8x1024xf32>
    %115 = arith.mulf %114, %110 : vector<8x1024xf32>
    %116 = arith.mulf %115, %110 : vector<8x1024xf32>
    %117 = arith.mulf %116, %110 : vector<8x1024xf32>
    %118 = arith.addf %110, %117 : vector<8x1024xf32>
    %119 = vector.broadcast %113 : f32 to vector<8x1024xf32>
    %120 = arith.mulf %119, %118 : vector<8x1024xf32>
    %121 = math.tanh %120 : vector<8x1024xf32>
    %cst_47 = arith.constant 1.000000e+00 : f32
    %122 = vector.broadcast %cst_47 : f32 to vector<8x1024xf32>
    %123 = arith.addf %122, %121 : vector<8x1024xf32>
    %124 = arith.mulf %112, %123 : vector<8x1024xf32>
    %125 = arith.truncf %124 : vector<8x1024xf32> to vector<8x1024xbf16>
    %c0_48 = arith.constant 0 : index
    %c0_49 = arith.constant 0 : index
    %126 = vector.load %arg17[%c0_48, %c0_49] : memref<1024x256xbf16, #tpu.memory_space<vmem>>, vector<1024x256xbf16>
    %cst_50 = arith.constant dense<0.000000e+00> : vector<8x256xf32>
    %127 = tpu.matmul %125, %126, %cst_50 {dimension_numbers = #tpu.dot_dimension_numbers<[1], [0], [0], [1], [0, 0, 1, 1], [], []>} : vector<8x1024xbf16>, vector<1024x256xbf16>, vector<8x256xf32> -> vector<8x256xf32>
    %c0_51 = arith.constant 0 : index
    %c0_52 = arith.constant 0 : index
    %128 = vector.load %arg18[%c0_51, %c0_52] : memref<1x256xf32, #tpu.memory_space<vmem>>, vector<1x256xf32>
    %129 = vector.broadcast %128 : vector<1x256xf32> to vector<8x256xf32>
    %130 = arith.addf %127, %129 : vector<8x256xf32>
    %131 = arith.addf %80, %130 : vector<8x256xf32>
    %c0_53 = arith.constant 0 : index
    %c0_54 = arith.constant 0 : index
    %c0_55 = arith.constant 0 : index
    %132 = vector.load %arg19[%c0_53, %c0_54, %c0_55] : memref<1x8x256xf32, #tpu.memory_space<vmem>>, vector<1x8x256xf32>
    %133 = vector.shape_cast %132 : vector<1x8x256xf32> to vector<8x256xf32>
    %134 = vector.shape_cast %131 : vector<8x256xf32> to vector<1x8x256xf32>
    tpu.vector_store %arg19[%c0_53, %c0_54, %c0_55], %134 {strides = array<i32>} : memref<1x8x256xf32, #tpu.memory_space<vmem>>, vector<1x8x256xf32>,
    return
  }
  func.func @transform_0(%arg0: i32, %arg1: i32) -> (i32, i32, i32) {
    %c0_i32 = arith.constant 0 : i32
    %c0_i32_0 = arith.constant 0 : i32
    %c0_i32_1 = arith.constant 0 : i32
    return %arg0, %c0_i32, %c0_i32_0 : i32, i32, i32
  }
  func.func @transform_1(%arg0: i32, %arg1: i32) -> (i32, i32) {
    %c0_i32 = arith.constant 0 : i32
    %c0_i32_0 = arith.constant 0 : i32
    %c0_i32_1 = arith.constant 0 : i32
    return %c0_i32, %c0_i32_0 : i32, i32
  }
  func.func @transform_2(%arg0: i32, %arg1: i32) -> (i32, i32) {
    %c0_i32 = arith.constant 0 : i32
    %c0_i32_0 = arith.constant 0 : i32
    %c0_i32_1 = arith.constant 0 : i32
    return %c0_i32, %c0_i32_0 : i32, i32
  }
  func.func @transform_3(%arg0: i32, %arg1: i32) -> (i32, i32) {
    %c0_i32 = arith.constant 0 : i32
    %c0_i32_0 = arith.constant 0 : i32
    %c0_i32_1 = arith.constant 0 : i32
    return %c0_i32, %c0_i32_0 : i32, i32
  }
  func.func @transform_4(%arg0: i32, %arg1: i32) -> (i32, i32) {
    %c0_i32 = arith.constant 0 : i32
    %c0_i32_0 = arith.constant 0 : i32
    %c0_i32_1 = arith.constant 0 : i32
    return %c0_i32, %c0_i32_0 : i32, i32
  }
  func.func @transform_5(%arg0: i32, %arg1: i32) -> (i32, i32) {
    %c0_i32 = arith.constant 0 : i32
    %c0_i32_0 = arith.constant 0 : i32
    %c0_i32_1 = arith.constant 0 : i32
    return %c0_i32, %c0_i32_0 : i32, i32
  }
  func.func @transform_6(%arg0: i32, %arg1: i32) -> (i32, i32) {
    %c0_i32 = arith.constant 0 : i32
    %c0_i32_0 = arith.constant 0 : i32
    %c0_i32_1 = arith.constant 0 : i32
    return %c0_i32, %c0_i32_0 : i32, i32
  }
  func.func @transform_7(%arg0: i32, %arg1: i32) -> (i32, i32) {
    %c0_i32 = arith.constant 0 : i32
    %c0_i32_0 = arith.constant 0 : i32
    %c0_i32_1 = arith.constant 0 : i32
    return %c0_i32, %c0_i32_0 : i32, i32
  }
  func.func @transform_8(%arg0: i32, %arg1: i32) -> (i32, i32) {
    %c0_i32 = arith.constant 0 : i32
    %c0_i32_0 = arith.constant 0 : i32
    %c0_i32_1 = arith.constant 0 : i32
    return %c0_i32, %c0_i32_0 : i32, i32
  }
  func.func @transform_9(%arg0: i32, %arg1: i32) -> (i32, i32) {
    %c0_i32 = arith.constant 0 : i32
    %c0_i32_0 = arith.constant 0 : i32
    %c0_i32_1 = arith.constant 0 : i32
    return %c0_i32, %c0_i32_0 : i32, i32
  }
  func.func @transform_10(%arg0: i32, %arg1: i32) -> (i32, i32) {
    %c0_i32 = arith.constant 0 : i32
    %c0_i32_0 = arith.constant 0 : i32
    %c0_i32_1 = arith.constant 0 : i32
    return %c0_i32, %c0_i32_0 : i32, i32
  }
  func.func @transform_11(%arg0: i32, %arg1: i32) -> (i32, i32) {
    %c0_i32 = arith.constant 0 : i32
    %c0_i32_0 = arith.constant 0 : i32
    %c0_i32_1 = arith.constant 0 : i32
    return %c0_i32, %c0_i32_0 : i32, i32
  }
  func.func @transform_12(%arg0: i32, %arg1: i32) -> (i32, i32) {
    %c0_i32 = arith.constant 0 : i32
    %c0_i32_0 = arith.constant 0 : i32
    %c0_i32_1 = arith.constant 0 : i32
    return %c0_i32, %c0_i32_0 : i32, i32
  }
  func.func @transform_13(%arg0: i32, %arg1: i32) -> (i32, i32) {
    %c0_i32 = arith.constant 0 : i32
    %c0_i32_0 = arith.constant 0 : i32
    %c0_i32_1 = arith.constant 0 : i32
    return %c0_i32, %c0_i32_0 : i32, i32
  }
  func.func @transform_14(%arg0: i32, %arg1: i32) -> (i32, i32) {
    %c0_i32 = arith.constant 0 : i32
    %c0_i32_0 = arith.constant 0 : i32
    %c0_i32_1 = arith.constant 0 : i32
    return %c0_i32, %c0_i32_0 : i32, i32
  }
  func.func @transform_15(%arg0: i32, %arg1: i32) -> (i32, i32) {
    %c0_i32 = arith.constant 0 : i32
    %c0_i32_0 = arith.constant 0 : i32
    %c0_i32_1 = arith.constant 0 : i32
    return %c0_i32, %c0_i32_0 : i32, i32
  }
  func.func @transform_16(%arg0: i32, %arg1: i32) -> (i32, i32) {
    %c0_i32 = arith.constant 0 : i32
    %c0_i32_0 = arith.constant 0 : i32
    %c0_i32_1 = arith.constant 0 : i32
    return %c0_i32, %c0_i32_0 : i32, i32
  }
  func.func @transform_17(%arg0: i32, %arg1: i32) -> (i32, i32, i32) {
    %c0_i32 = arith.constant 0 : i32
    %c0_i32_0 = arith.constant 0 : i32
    return %arg0, %arg1, %c0_i32 : i32, i32, i32
  }
}

</mosaic_0001>

<llo_original>
// kernel: tpu_custom_call.1
$region0: #{tpu_custom_call.1}
  #allocation0 [shape = 'u32[]', space=smem, size = 0x4, offset = 0x4, fixed_abs, tag = 'smem constant byte address 0x4 - core index']
  #allocation1 [shape = 'u32[144,128]{1,0:T(1,128)}', space=vmem, size = 0x12000, scoped, tag = 'internal scratch']
  #allocation2 [shape = 'bf16[16,256]{1,0:T(8,128)(2,1)}', space=vmem, size = 0x2000, scoped, tag = 'scratch operand']
  #allocation3 [shape = 'bf16[16,256]{1,0:T(8,128)(2,1)}', space=vmem, size = 0x2000, scoped, tag = 'scratch operand']
  %s0 = inlined_call_operand.hbm [shape: f32[2,16,256], index: 0, kind: input, shape index: {}]
  %s1 = inlined_call_operand.hbm [shape: f32[1,256], index: 1, kind: input, shape index: {}]
  %s2 = inlined_call_operand.vmem [shape: f32[1,256], index: 2, kind: input, shape index: {}]
  %s3 = inlined_call_operand.hbm [shape: bf16[256,256], index: 3, kind: input, shape index: {}]
  %s4 = inlined_call_operand.vmem [shape: f32[1,256], index: 4, kind: input, shape index: {}]
  %s5 = inlined_call_operand.hbm [shape: bf16[256,256], index: 5, kind: input, shape index: {}]
  %s6 = inlined_call_operand.vmem [shape: f32[1,256], index: 6, kind: input, shape index: {}]
  %s7 = inlined_call_operand.hbm [shape: bf16[256,256], index: 7, kind: input, shape index: {}]
  %s8 = inlined_call_operand.vmem [shape: f32[1,256], index: 8, kind: input, shape index: {}]
  %s9 = inlined_call_operand.hbm [shape: bf16[256,256], index: 9, kind: input, shape index: {}]
  %s10 = inlined_call_operand.vmem [shape: f32[1,256], index: 10, kind: input, shape index: {}]
  %s11 = inlined_call_operand.vmem [shape: f32[1,256], index: 11, kind: input, shape index: {}]
  %s12 = inlined_call_operand.hbm [shape: f32[1,256], index: 12, kind: input, shape index: {}]
  %s13 = inlined_call_operand.hbm [shape: bf16[256,1024], index: 13, kind: input, shape index: {}]
  %s14 = inlined_call_operand.vmem [shape: f32[1,1024], index: 14, kind: input, shape index: {}]
  %s15 = inlined_call_operand.hbm [shape: bf16[1024,256], index: 15, kind: input, shape index: {}]
  %s16 = inlined_call_operand.vmem [shape: f32[1,256], index: 16, kind: input, shape index: {}]
  %s17 = inlined_call_operand.hbm [shape: f32[2,16,256], index: 17, kind: output, shape index: {}]
  %s18 = sld [smem:[#allocation0]]
  $region141: #{tpu_custom_call.1} parent=0
    _
  %s20 = ssub.s32 1, %s18
  %s21 = scalar_select 0, %s20, %s18
  $region1: #{tpu_custom_call.1} parent=0
    #allocation4 [shape = 'u8[32768]{0}', space=vmem, size = 0x8000, scoped, tag = 'input window, operand 0']
    #allocation5 [shape = 's32[2]{0}', space=sflag, size = 0x8, scoped, tag = 'scoped memory for tpu_custom_call.1']
    #allocation6 [shape = 's32[2]{0}', space=sflag, size = 0x8, scoped, tag = 'scoped memory for tpu_custom_call.1']
    #allocation7 [shape = 'u8[1024]{0}', space=vmem, size = 0x400, scoped, tag = 'input window, operand 1, single buffered']
    #allocation8 [shape = 's32[1]{0}', space=sflag, size = 0x4, scoped, tag = 'scoped memory for tpu_custom_call.1']
    #allocation9 [shape = 'u8[131072]{0}', space=vmem, size = 0x20000, scoped, tag = 'input window, operand 3, single buffered']
    #allocation10 [shape = 'u8[131072]{0}', space=vmem, size = 0x20000, scoped, tag = 'input window, operand 5, single buffered']
    #allocation11 [shape = 's32[1]{0}', space=sflag, size = 0x4, scoped, tag = 'scoped memory for tpu_custom_call.1']
    #allocation12 [shape = 'u8[131072]{0}', space=vmem, size = 0x20000, scoped, tag = 'input window, operand 7, single buffered']
    #allocation13 [shape = 'u8[131072]{0}', space=vmem, size = 0x20000, scoped, tag = 'input window, operand 9, single buffered']
    #allocation14 [shape = 's32[1]{0}', space=sflag, size = 0x4, scoped, tag = 'scoped memory for tpu_custom_call.1']
    #allocation15 [shape = 'u8[1024]{0}', space=vmem, size = 0x400, scoped, tag = 'input window, operand 12, single buffered']
    #allocation16 [shape = 'u8[524288]{0}', space=vmem, size = 0x80000, scoped, tag = 'input window, operand 13, single buffered']
    #allocation17 [shape = 's32[1]{0}', space=sflag, size = 0x4, scoped, tag = 'scoped memory for tpu_custom_call.1']
    #allocation18 [shape = 'u8[524288]{0}', space=vmem, size = 0x80000, scoped, tag = 'input window, operand 15, single buffered']
    #allocation19 [shape = 'u8[16384]{0}', space=vmem, size = 0x4000, scoped, tag = 'output window, operand 0']
    %22 = vsyncpa [#allocation5], 0
    %s23 = scalar_lea.sflag [#allocation5], 1
    %24 = vsyncpa %s23, 0
    %25 = vsyncpa [#allocation8], 0
    %26 = vsyncpa [#allocation11], 0
    %27 = vsyncpa [#allocation14], 0
    %28 = vsyncpa [#allocation17], 0
    %29 = vsyncpa [#allocation6], 0
    %s30 = scalar_lea.sflag [#allocation6], 1
    %31 = vsyncpa %s30, 0
    loop: start=0, step=1, limit=6
    $region2: #{tpu_custom_call.1} parent=1 // loop_pre_header
      _
    $region3: #{tpu_custom_call.1} parent=1 // loop_header
      %s33 = sphi 0, %s37
      %p34 = scmp.ge.s32.totalorder %s33, 6
      %s40 = sphi 0, %s52
      %s41 = sphi 0, %s48
      %s42 = sphi 0, %s40
      %s43 = sphi 0, %s41
      %s44 = sphi 0, %s42
      %s45 = sphi 0, %s43
      %s55 = sphi 0, %s57
      %s58 = sphi 0, %s55
      %s59 = sphi 0, %s58
      %s75 = sphi 0, %s59
      %s79 = sphi 0, %s79
      %s81 = sphi 0, %s79
      %s82 = sphi 0, %s81
      %s96 = sphi 0, %s82
      %s100 = sphi 0, %s100
      %s102 = sphi 0, %s100
      %s103 = sphi 0, %s102
      %s117 = sphi 0, %s103
      %s121 = sphi 0, %s121
      %s123 = sphi 0, %s121
      %s124 = sphi 0, %s123
      %s138 = sphi 0, %s124
      %s142 = sphi 0, %s142
      %s144 = sphi 0, %s142
      %s145 = sphi 0, %s144
      %s159 = sphi 0, %s145
      %s163 = sphi 0, %s163
      %s165 = sphi 0, %s163
      %s166 = sphi 0, %s165
      %s180 = sphi 0, %s166
      %s184 = sphi 0, %s184
      %s186 = sphi 0, %s184
      %s187 = sphi 0, %s186
      %s201 = sphi 0, %s187
      %s205 = sphi 0, %s205
      %s207 = sphi 0, %s205
      %s208 = sphi 0, %s207
      %s222 = sphi 0, %s208
      %s226 = sphi 0, %s226
      %s228 = sphi 0, %s226
      %s229 = sphi 0, %s228
      %s243 = sphi 0, %s229
      %s247 = sphi 0, %s247
      %s249 = sphi 0, %s247
      %s250 = sphi 0, %s249
      %s264 = sphi 0, %s250
      %s268 = sphi 0, %s268
      %s270 = sphi 0, %s268
      %s271 = sphi 0, %s270
      %s285 = sphi 0, %s271
      %s289 = sphi 0, %s289
      %s291 = sphi 0, %s289
      %s292 = sphi 0, %s291
      %s306 = sphi 0, %s292
      %s310 = sphi 0, %s310
      %s312 = sphi 0, %s310
      %s313 = sphi 0, %s312
      %s327 = sphi 0, %s313
      %s331 = sphi 0, %s331
      %s333 = sphi 0, %s331
      %s334 = sphi 0, %s333
      %s348 = sphi 0, %s334
      %s352 = sphi 0, %s352
      %s354 = sphi 0, %s352
      %s355 = sphi 0, %s354
      %s369 = sphi 0, %s355
      %s373 = sphi 0, %s373
      %s375 = sphi 0, %s373
      %s376 = sphi 0, %s375
      %s390 = sphi 0, %s376
      %s394 = sphi 0, %s394
      %s396 = sphi 0, %s394
      %s397 = sphi 0, %s396
      %s411 = sphi 0, %s397
      %s419 = sphi 0, %s421
      %s422 = sphi 0, %s419
      %s423 = sphi 0, %s422
      %s439 = sphi 0, %s423
    $region4: #{tpu_custom_call.1} parent=1 // loop_header_branch
      %36 = sbr.rel (%p34) target = $region8
    $region5: #{tpu_custom_call.1} parent=1 // loop_body
      %s38 = ssub.s32 %s33, 1
      %s39 = ssub.s32 %s33, 2
      %s46 = sadd.s32 1, %s41
      %p47 = scmp.ge.s32.totalorder %s46, 2
      %s48 = scalar_select %p47, 0, %s46
      %s49 = sadd.s32 1, %s40
      %s50 = scalar_select %p47, %s49, %s40
      %p51 = scmp.ge.s32.totalorder %s50, 2
      %s52 = scalar_select %p51, 0, %s50
      %s53 = ssub.s32 %s40, %s52
      %p54 = scmp.eq.s32.totalorder %s53, 0
      %s56 = sadd.s32 %s55, 1
      %s57 = scalar_select %p54, %s55, %s56
      %p60 = pneg %p54
      %p61 = scmp.eq.s32.totalorder %s33, 3
      %p62 = por %p60, %p61
      %p63 = scmp.ne.s32.totalorder %s55, %s58
      %p64 = scmp.eq.s32.totalorder %s33, 0
      %p65 = por %p63, %p64
      %p66 = scmp.ne.s32.totalorder %s55, %s58
      %p67 = scmp.eq.s32.totalorder %s38, 3
      %p68 = por %p66, %p67
      %p69 = scmp.ne.s32.totalorder %s58, %s59
      %p70 = scmp.eq.s32.totalorder %s38, 0
      %p71 = por %p69, %p70
      %p72 = scmp.ne.s32.totalorder %s58, %s59
      %p73 = scmp.eq.s32.totalorder %s39, 3
      %p74 = por %p72, %p73
      %p76 = scmp.ne.s32.totalorder %s59, %s75
      %p77 = scmp.eq.s32.totalorder %s39, 0
      %p78 = por %p76, %p77
      %s80 = sadd.s32 %s79, 1
      %p83 = scmp.eq.s32.totalorder %s33, 3
      %p84 = scmp.ne.s32.totalorder %s79, %s81
      %p85 = scmp.eq.s32.totalorder %s33, 0
      %p86 = por %p84, %p85
      %p87 = scmp.ne.s32.totalorder %s79, %s81
      %p88 = scmp.eq.s32.totalorder %s38, 3
      %p89 = por %p87, %p88
      %p90 = scmp.ne.s32.totalorder %s81, %s82
      %p91 = scmp.eq.s32.totalorder %s38, 0
      %p92 = por %p90, %p91
      %p93 = scmp.ne.s32.totalorder %s81, %s82
      %p94 = scmp.eq.s32.totalorder %s39, 3
      %p95 = por %p93, %p94
      %p97 = scmp.ne.s32.totalorder %s82, %s96
      %p98 = scmp.eq.s32.totalorder %s39, 0
      %p99 = por %p97, %p98
      %s101 = sadd.s32 %s100, 1
      %p104 = scmp.eq.s32.totalorder %s33, 3
      %p105 = scmp.ne.s32.totalorder %s100, %s102
      %p106 = scmp.eq.s32.totalorder %s33, 0
      %p107 = por %p105, %p106
      %p108 = scmp.ne.s32.totalorder %s100, %s102
      %p109 = scmp.eq.s32.totalorder %s38, 3
      %p110 = por %p108, %p109
      %p111 = scmp.ne.s32.totalorder %s102, %s103
      %p112 = scmp.eq.s32.totalorder %s38, 0
      %p113 = por %p111, %p112
      %p114 = scmp.ne.s32.totalorder %s102, %s103
      %p115 = scmp.eq.s32.totalorder %s39, 3
      %p116 = por %p114, %p115
      %p118 = scmp.ne.s32.totalorder %s103, %s117
      %p119 = scmp.eq.s32.totalorder %s39, 0
      %p120 = por %p118, %p119
      %s122 = sadd.s32 %s121, 1
      %p125 = scmp.eq.s32.totalorder %s33, 3
      %p126 = scmp.ne.s32.totalorder %s121, %s123
      %p127 = scmp.eq.s32.totalorder %s33, 0
      %p128 = por %p126, %p127
      %p129 = scmp.ne.s32.totalorder %s121, %s123
      %p130 = scmp.eq.s32.totalorder %s38, 3
      %p131 = por %p129, %p130
      %p132 = scmp.ne.s32.totalorder %s123, %s124
      %p133 = scmp.eq.s32.totalorder %s38, 0
      %p134 = por %p132, %p133
      %p135 = scmp.ne.s32.totalorder %s123, %s124
      %p136 = scmp.eq.s32.totalorder %s39, 3
      %p137 = por %p135, %p136
      %p139 = scmp.ne.s32.totalorder %s124, %s138
      %p140 = scmp.eq.s32.totalorder %s39, 0
      %p141 = por %p139, %p140
      %s143 = sadd.s32 %s142, 1
      %p146 = scmp.eq.s32.totalorder %s33, 3
      %p147 = scmp.ne.s32.totalorder %s142, %s144
      %p148 = scmp.eq.s32.totalorder %s33, 0
      %p149 = por %p147, %p148
      %p150 = scmp.ne.s32.totalorder %s142, %s144
      %p151 = scmp.eq.s32.totalorder %s38, 3
      %p152 = por %p150, %p151
      %p153 = scmp.ne.s32.totalorder %s144, %s145
      %p154 = scmp.eq.s32.totalorder %s38, 0
      %p155 = por %p153, %p154
      %p156 = scmp.ne.s32.totalorder %s144, %s145
      %p157 = scmp.eq.s32.totalorder %s39, 3
      %p158 = por %p156, %p157
      %p160 = scmp.ne.s32.totalorder %s145, %s159
      %p161 = scmp.eq.s32.totalorder %s39, 0
      %p162 = por %p160, %p161
      %s164 = sadd.s32 %s163, 1
      %p167 = scmp.eq.s32.totalorder %s33, 3
      %p168 = scmp.ne.s32.totalorder %s163, %s165
      %p169 = scmp.eq.s32.totalorder %s33, 0
      %p170 = por %p168, %p169
      %p171 = scmp.ne.s32.totalorder %s163, %s165
      %p172 = scmp.eq.s32.totalorder %s38, 3
      %p173 = por %p171, %p172
      %p174 = scmp.ne.s32.totalorder %s165, %s166
      %p175 = scmp.eq.s32.totalorder %s38, 0
      %p176 = por %p174, %p175
      %p177 = scmp.ne.s32.totalorder %s165, %s166
      %p178 = scmp.eq.s32.totalorder %s39, 3
      %p179 = por %p177, %p178
      %p181 = scmp.ne.s32.totalorder %s166, %s180
      %p182 = scmp.eq.s32.totalorder %s39, 0
      %p183 = por %p181, %p182
      %s185 = sadd.s32 %s184, 1
      %p188 = scmp.eq.s32.totalorder %s33, 3
      %p189 = scmp.ne.s32.totalorder %s184, %s186
      %p190 = scmp.eq.s32.totalorder %s33, 0
      %p191 = por %p189, %p190
      %p192 = scmp.ne.s32.totalorder %s184, %s186
      %p193 = scmp.eq.s32.totalorder %s38, 3
      %p194 = por %p192, %p193
      %p195 = scmp.ne.s32.totalorder %s186, %s187
      %p196 = scmp.eq.s32.totalorder %s38, 0
      %p197 = por %p195, %p196
      %p198 = scmp.ne.s32.totalorder %s186, %s187
      %p199 = scmp.eq.s32.totalorder %s39, 3
      %p200 = por %p198, %p199
      %p202 = scmp.ne.s32.totalorder %s187, %s201
      %p203 = scmp.eq.s32.totalorder %s39, 0
      %p204 = por %p202, %p203
      %s206 = sadd.s32 %s205, 1
      %p209 = scmp.eq.s32.totalorder %s33, 3
      %p210 = scmp.ne.s32.totalorder %s205, %s207
      %p211 = scmp.eq.s32.totalorder %s33, 0
      %p212 = por %p210, %p211
      %p213 = scmp.ne.s32.totalorder %s205, %s207
      %p214 = scmp.eq.s32.totalorder %s38, 3
      %p215 = por %p213, %p214
      %p216 = scmp.ne.s32.totalorder %s207, %s208
      %p217 = scmp.eq.s32.totalorder %s38, 0
      %p218 = por %p216, %p217
      %p219 = scmp.ne.s32.totalorder %s207, %s208
      %p220 = scmp.eq.s32.totalorder %s39, 3
      %p221 = por %p219, %p220
      %p223 = scmp.ne.s32.totalorder %s208, %s222
      %p224 = scmp.eq.s32.totalorder %s39, 0
      %p225 = por %p223, %p224
      %s227 = sadd.s32 %s226, 1
      %p230 = scmp.eq.s32.totalorder %s33, 3
      %p231 = scmp.ne.s32.totalorder %s226, %s228
      %p232 = scmp.eq.s32.totalorder %s33, 0
      %p233 = por %p231, %p232
      %p234 = scmp.ne.s32.totalorder %s226, %s228
      %p235 = scmp.eq.s32.totalorder %s38, 3
      %p236 = por %p234, %p235
      %p237 = scmp.ne.s32.totalorder %s228, %s229
      %p238 = scmp.eq.s32.totalorder %s38, 0
      %p239 = por %p237, %p238
      %p240 = scmp.ne.s32.totalorder %s228, %s229
      %p241 = scmp.eq.s32.totalorder %s39, 3
      %p242 = por %p240, %p241
      %p244 = scmp.ne.s32.totalorder %s229, %s243
      %p245 = scmp.eq.s32.totalorder %s39, 0
      %p246 = por %p244, %p245
      %s248 = sadd.s32 %s247, 1
      %p251 = scmp.eq.s32.totalorder %s33, 3
      %p252 = scmp.ne.s32.totalorder %s247, %s249
      %p253 = scmp.eq.s32.totalorder %s33, 0
      %p254 = por %p252, %p253
      %p255 = scmp.ne.s32.totalorder %s247, %s249
      %p256 = scmp.eq.s32.totalorder %s38, 3
      %p257 = por %p255, %p256
      %p258 = scmp.ne.s32.totalorder %s249, %s250
      %p259 = scmp.eq.s32.totalorder %s38, 0
      %p260 = por %p258, %p259
      %p261 = scmp.ne.s32.totalorder %s249, %s250
      %p262 = scmp.eq.s32.totalorder %s39, 3
      %p263 = por %p261, %p262
      %p265 = scmp.ne.s32.totalorder %s250, %s264
      %p266 = scmp.eq.s32.totalorder %s39, 0
      %p267 = por %p265, %p266
      %s269 = sadd.s32 %s268, 1
      %p272 = scmp.eq.s32.totalorder %s33, 3
      %p273 = scmp.ne.s32.totalorder %s268, %s270
      %p274 = scmp.eq.s32.totalorder %s33, 0
      %p275 = por %p273, %p274
      %p276 = scmp.ne.s32.totalorder %s268, %s270
      %p277 = scmp.eq.s32.totalorder %s38, 3
      %p278 = por %p276, %p277
      %p279 = scmp.ne.s32.totalorder %s270, %s271
      %p280 = scmp.eq.s32.totalorder %s38, 0
      %p281 = por %p279, %p280
      %p282 = scmp.ne.s32.totalorder %s270, %s271
      %p283 = scmp.eq.s32.totalorder %s39, 3
      %p284 = por %p282, %p283
      %p286 = scmp.ne.s32.totalorder %s271, %s285
      %p287 = scmp.eq.s32.totalorder %s39, 0
      %p288 = por %p286, %p287
      %s290 = sadd.s32 %s289, 1
      %p293 = scmp.eq.s32.totalorder %s33, 3
      %p294 = scmp.ne.s32.totalorder %s289, %s291
      %p295 = scmp.eq.s32.totalorder %s33, 0
      %p296 = por %p294, %p295
      %p297 = scmp.ne.s32.totalorder %s289, %s291
      %p298 = scmp.eq.s32.totalorder %s38, 3
      %p299 = por %p297, %p298
      %p300 = scmp.ne.s32.totalorder %s291, %s292
      %p301 = scmp.eq.s32.totalorder %s38, 0
      %p302 = por %p300, %p301
      %p303 = scmp.ne.s32.totalorder %s291, %s292
      %p304 = scmp.eq.s32.totalorder %s39, 3
      %p305 = por %p303, %p304
      %p307 = scmp.ne.s32.totalorder %s292, %s306
      %p308 = scmp.eq.s32.totalorder %s39, 0
      %p309 = por %p307, %p308
      %s311 = sadd.s32 %s310, 1
      %p314 = scmp.eq.s32.totalorder %s33, 3
      %p315 = scmp.ne.s32.totalorder %s310, %s312
      %p316 = scmp.eq.s32.totalorder %s33, 0
      %p317 = por %p315, %p316
      %p318 = scmp.ne.s32.totalorder %s310, %s312
      %p319 = scmp.eq.s32.totalorder %s38, 3
      %p320 = por %p318, %p319
      %p321 = scmp.ne.s32.totalorder %s312, %s313
      %p322 = scmp.eq.s32.totalorder %s38, 0
      %p323 = por %p321, %p322
      %p324 = scmp.ne.s32.totalorder %s312, %s313
      %p325 = scmp.eq.s32.totalorder %s39, 3
      %p326 = por %p324, %p325
      %p328 = scmp.ne.s32.totalorder %s313, %s327
      %p329 = scmp.eq.s32.totalorder %s39, 0
      %p330 = por %p328, %p329
      %s332 = sadd.s32 %s331, 1
      %p335 = scmp.eq.s32.totalorder %s33, 3
      %p336 = scmp.ne.s32.totalorder %s331, %s333
      %p337 = scmp.eq.s32.totalorder %s33, 0
      %p338 = por %p336, %p337
      %p339 = scmp.ne.s32.totalorder %s331, %s333
      %p340 = scmp.eq.s32.totalorder %s38, 3
      %p341 = por %p339, %p340
      %p342 = scmp.ne.s32.totalorder %s333, %s334
      %p343 = scmp.eq.s32.totalorder %s38, 0
      %p344 = por %p342, %p343
      %p345 = scmp.ne.s32.totalorder %s333, %s334
      %p346 = scmp.eq.s32.totalorder %s39, 3
      %p347 = por %p345, %p346
      %p349 = scmp.ne.s32.totalorder %s334, %s348
      %p350 = scmp.eq.s32.totalorder %s39, 0
      %p351 = por %p349, %p350
      %s353 = sadd.s32 %s352, 1
      %p356 = scmp.eq.s32.totalorder %s33, 3
      %p357 = scmp.ne.s32.totalorder %s352, %s354
      %p358 = scmp.eq.s32.totalorder %s33, 0
      %p359 = por %p357, %p358
      %p360 = scmp.ne.s32.totalorder %s352, %s354
      %p361 = scmp.eq.s32.totalorder %s38, 3
      %p362 = por %p360, %p361
      %p363 = scmp.ne.s32.totalorder %s354, %s355
      %p364 = scmp.eq.s32.totalorder %s38, 0
      %p365 = por %p363, %p364
      %p366 = scmp.ne.s32.totalorder %s354, %s355
      %p367 = scmp.eq.s32.totalorder %s39, 3
      %p368 = por %p366, %p367
      %p370 = scmp.ne.s32.totalorder %s355, %s369
      %p371 = scmp.eq.s32.totalorder %s39, 0
      %p372 = por %p370, %p371
      %s374 = sadd.s32 %s373, 1
      %p377 = scmp.eq.s32.totalorder %s33, 3
      %p378 = scmp.ne.s32.totalorder %s373, %s375
      %p379 = scmp.eq.s32.totalorder %s33, 0
      %p380 = por %p378, %p379
      %p381 = scmp.ne.s32.totalorder %s373, %s375
      %p382 = scmp.eq.s32.totalorder %s38, 3
      %p383 = por %p381, %p382
      %p384 = scmp.ne.s32.totalorder %s375, %s376
      %p385 = scmp.eq.s32.totalorder %s38, 0
      %p386 = por %p384, %p385
      %p387 = scmp.ne.s32.totalorder %s375, %s376
      %p388 = scmp.eq.s32.totalorder %s39, 3
      %p389 = por %p387, %p388
      %p391 = scmp.ne.s32.totalorder %s376, %s390
      %p392 = scmp.eq.s32.totalorder %s39, 0
      %p393 = por %p391, %p392
      %s395 = sadd.s32 %s394, 1
      %p398 = scmp.eq.s32.totalorder %s33, 3
      %p399 = scmp.ne.s32.totalorder %s394, %s396
      %p400 = scmp.eq.s32.totalorder %s33, 0
      %p401 = por %p399, %p400
      %p402 = scmp.ne.s32.totalorder %s394, %s396
      %p403 = scmp.eq.s32.totalorder %s38, 3
      %p404 = por %p402, %p403
      %p405 = scmp.ne.s32.totalorder %s396, %s397
      %p406 = scmp.eq.s32.totalorder %s38, 0
      %p407 = por %p405, %p406
      %p408 = scmp.ne.s32.totalorder %s396, %s397
      %p409 = scmp.eq.s32.totalorder %s39, 3
      %p410 = por %p408, %p409
      %p412 = scmp.ne.s32.totalorder %s397, %s411
      %p413 = scmp.eq.s32.totalorder %s39, 0
      %p414 = por %p412, %p413
      %s415 = ssub.s32 %s40, %s52
      %s416 = ssub.s32 %s41, %s48
      %s417 = sor.u32 %s415, %s416
      %p418 = scmp.eq.s32.totalorder %s417, 0
      %s420 = sadd.s32 %s419, 1
      %s421 = scalar_select %p418, %s419, %s420
      %p424 = pneg %p418
      %p425 = scmp.eq.s32.totalorder %s33, 3
      %p426 = por %p424, %p425
      %p427 = scmp.ne.s32.totalorder %s419, %s422
      %p428 = scmp.eq.s32.totalorder %s33, 0
      %p429 = por %p427, %p428
      %p430 = scmp.ne.s32.totalorder %s419, %s422
      %p431 = scmp.eq.s32.totalorder %s38, 3
      %p432 = por %p430, %p431
      %p433 = scmp.ne.s32.totalorder %s422, %s423
      %p434 = scmp.eq.s32.totalorder %s38, 0
      %p435 = por %p433, %p434
      %p436 = scmp.ne.s32.totalorder %s422, %s423
      %p437 = scmp.eq.s32.totalorder %s39, 3
      %p438 = por %p436, %p437
      %p440 = scmp.ne.s32.totalorder %s423, %s439
      %p441 = scmp.eq.s32.totalorder %s39, 0
      %p442 = por %p440, %p441
      %p443 = scmp.le.s32.totalorder 1, %s33
      %p444 = scmp.lt.s32.totalorder %s33, 5
      %p445 = pnand %p443, %p444
      %p446 = pneg %p445
      // Predicated region
      $region9: #{tpu_custom_call.1} parent=5 // pred_check
        _
      $region10: #{tpu_custom_call.1} parent=5 // pred_check_branch
        %448 = sbr.rel (%p445) target = $region12
      $region11: #{tpu_custom_call.1} parent=5 // pred_region
        %s449 = ssub.s32 %s33, 1
        // Predicated region
        $region13: #{tpu_custom_call.1} parent=11 // pred_check
          %p450 = pneg %p92
        $region14: #{tpu_custom_call.1} parent=11 // pred_check_branch
          %452 = sbr.rel (%p450) target = $region16
        $region15: #{tpu_custom_call.1} parent=11 // pred_region
          %s454 = ssub.s32 32, 32
          %455 = vsyncadd [#allocation8], %s454
          %s457 = sshll.u32 [#allocation7], 4
          %s458 = int_to_ptr.vmem [resolvable:$true] %s457
          %460 = dma.hbm_to_vmem [thread:$0]  %s1, 32, %s458, [#allocation8]
        $region16: #{tpu_custom_call.1} parent=11 // pred_fallthru
          _
        // Predicated region
        $region17: #{tpu_custom_call.1} parent=11 // pred_check
          %p461 = pneg %p113
        $region18: #{tpu_custom_call.1} parent=11 // pred_check_branch
          %463 = sbr.rel (%p461) target = $region20
        $region19: #{tpu_custom_call.1} parent=11 // pred_region
          _
        $region20: #{tpu_custom_call.1} parent=11 // pred_fallthru
          _
        // Predicated region
        $region21: #{tpu_custom_call.1} parent=11 // pred_check
          %p464 = pneg %p134
        $region22: #{tpu_custom_call.1} parent=11 // pred_check_branch
          %466 = sbr.rel (%p464) target = $region24
        $region23: #{tpu_custom_call.1} parent=11 // pred_region
          %s468 = ssub.s32 4096, 4096
          %469 = vsyncadd [#allocation8], %s468
          %s470 = sshll.u32 [#allocation9], 4
          %s471 = int_to_ptr.vmem [resolvable:$true] %s470
          %476 = dma.hbm_to_vmem [thread:$0]  %s3, 4096, %s471, [#allocation8], 128, 128, 8
        $region24: #{tpu_custom_call.1} parent=11 // pred_fallthru
          _
        // Predicated region
        $region25: #{tpu_custom_call.1} parent=11 // pred_check
          %p477 = pneg %p155
        $region26: #{tpu_custom_call.1} parent=11 // pred_check_branch
          %479 = sbr.rel (%p477) target = $region28
        $region27: #{tpu_custom_call.1} parent=11 // pred_region
          _
        $region28: #{tpu_custom_call.1} parent=11 // pred_fallthru
          _
        // Predicated region
        $region29: #{tpu_custom_call.1} parent=11 // pred_check
          %p480 = pneg %p176
        $region30: #{tpu_custom_call.1} parent=11 // pred_check_branch
          %482 = sbr.rel (%p480) target = $region32
        $region31: #{tpu_custom_call.1} parent=11 // pred_region
          %s484 = ssub.s32 4096, 4096
          %485 = vsyncadd [#allocation11], %s484
          %s486 = sshll.u32 [#allocation10], 4
          %s487 = int_to_ptr.vmem [resolvable:$true] %s486
          %492 = dma.hbm_to_vmem [thread:$0]  %s5, 4096, %s487, [#allocation11], 128, 128, 8
        $region32: #{tpu_custom_call.1} parent=11 // pred_fallthru
          _
        // Predicated region
        $region33: #{tpu_custom_call.1} parent=11 // pred_check
          %p493 = pneg %p197
        $region34: #{tpu_custom_call.1} parent=11 // pred_check_branch
          %495 = sbr.rel (%p493) target = $region36
        $region35: #{tpu_custom_call.1} parent=11 // pred_region
          _
        $region36: #{tpu_custom_call.1} parent=11 // pred_fallthru
          _
        // Predicated region
        $region37: #{tpu_custom_call.1} parent=11 // pred_check
          %p496 = pneg %p218
        $region38: #{tpu_custom_call.1} parent=11 // pred_check_branch
          %498 = sbr.rel (%p496) target = $region40
        $region39: #{tpu_custom_call.1} parent=11 // pred_region
          %s500 = ssub.s32 4096, 4096
          %501 = vsyncadd [#allocation11], %s500
          %s502 = sshll.u32 [#allocation12], 4
          %s503 = int_to_ptr.vmem [resolvable:$true] %s502
          %508 = dma.hbm_to_vmem [thread:$0]  %s7, 4096, %s503, [#allocation11], 128, 128, 8
        $region40: #{tpu_custom_call.1} parent=11 // pred_fallthru
          _
        // Predicated region
        $region41: #{tpu_custom_call.1} parent=11 // pred_check
          %p509 = pneg %p239
        $region42: #{tpu_custom_call.1} parent=11 // pred_check_branch
          %511 = sbr.rel (%p509) target = $region44
        $region43: #{tpu_custom_call.1} parent=11 // pred_region
          _
        $region44: #{tpu_custom_call.1} parent=11 // pred_fallthru
          _
        // Predicated region
        $region45: #{tpu_custom_call.1} parent=11 // pred_check
          %p512 = pneg %p260
        $region46: #{tpu_custom_call.1} parent=11 // pred_check_branch
          %514 = sbr.rel (%p512) target = $region48
        $region47: #{tpu_custom_call.1} parent=11 // pred_region
          %s516 = ssub.s32 4096, 4096
          %517 = vsyncadd [#allocation14], %s516
          %s518 = sshll.u32 [#allocation13], 4
          %s519 = int_to_ptr.vmem [resolvable:$true] %s518
          %524 = dma.hbm_to_vmem [thread:$0]  %s9, 4096, %s519, [#allocation14], 128, 128, 8
        $region48: #{tpu_custom_call.1} parent=11 // pred_fallthru
          _
        // Predicated region
        $region49: #{tpu_custom_call.1} parent=11 // pred_check
          %p525 = pneg %p281
        $region50: #{tpu_custom_call.1} parent=11 // pred_check_branch
          %527 = sbr.rel (%p525) target = $region52
        $region51: #{tpu_custom_call.1} parent=11 // pred_region
          _
        $region52: #{tpu_custom_call.1} parent=11 // pred_fallthru
          _
        // Predicated region
        $region53: #{tpu_custom_call.1} parent=11 // pred_check
          %p528 = pneg %p302
        $region54: #{tpu_custom_call.1} parent=11 // pred_check_branch
          %530 = sbr.rel (%p528) target = $region56
        $region55: #{tpu_custom_call.1} parent=11 // pred_region
          _
        $region56: #{tpu_custom_call.1} parent=11 // pred_fallthru
          _
        // Predicated region
        $region57: #{tpu_custom_call.1} parent=11 // pred_check
          %p531 = pneg %p323
        $region58: #{tpu_custom_call.1} parent=11 // pred_check_branch
          %533 = sbr.rel (%p531) target = $region60
        $region59: #{tpu_custom_call.1} parent=11 // pred_region
          %s535 = ssub.s32 32, 32
          %536 = vsyncadd [#allocation14], %s535
          %s538 = sshll.u32 [#allocation15], 4
          %s539 = int_to_ptr.vmem [resolvable:$true] %s538
          %541 = dma.hbm_to_vmem [thread:$0]  %s12, 32, %s539, [#allocation14]
        $region60: #{tpu_custom_call.1} parent=11 // pred_fallthru
          _
        // Predicated region
        $region61: #{tpu_custom_call.1} parent=11 // pred_check
          %p542 = pneg %p344
        $region62: #{tpu_custom_call.1} parent=11 // pred_check_branch
          %544 = sbr.rel (%p542) target = $region64
        $region63: #{tpu_custom_call.1} parent=11 // pred_region
          %s546 = ssub.s32 16384, 16384
          %547 = vsyncadd [#allocation17], %s546
          %s548 = sshll.u32 [#allocation16], 4
          %s549 = int_to_ptr.vmem [resolvable:$true] %s548
          %554 = dma.hbm_to_vmem [thread:$0]  %s13, 16384, %s549, [#allocation17], 512, 512, 32
        $region64: #{tpu_custom_call.1} parent=11 // pred_fallthru
          _
        // Predicated region
        $region65: #{tpu_custom_call.1} parent=11 // pred_check
          %p555 = pneg %p365
        $region66: #{tpu_custom_call.1} parent=11 // pred_check_branch
          %557 = sbr.rel (%p555) target = $region68
        $region67: #{tpu_custom_call.1} parent=11 // pred_region
          _
        $region68: #{tpu_custom_call.1} parent=11 // pred_fallthru
          _
        // Predicated region
        $region69: #{tpu_custom_call.1} parent=11 // pred_check
          %p558 = pneg %p386
        $region70: #{tpu_custom_call.1} parent=11 // pred_check_branch
          %560 = sbr.rel (%p558) target = $region72
        $region71: #{tpu_custom_call.1} parent=11 // pred_region
          %s562 = ssub.s32 16384, 16384
          %563 = vsyncadd [#allocation17], %s562
          %s564 = sshll.u32 [#allocation18], 4
          %s565 = int_to_ptr.vmem [resolvable:$true] %s564
          %570 = dma.hbm_to_vmem [thread:$0]  %s15, 16384, %s565, [#allocation17], 128, 128, 8
        $region72: #{tpu_custom_call.1} parent=11 // pred_fallthru
          _
        // Predicated region
        $region73: #{tpu_custom_call.1} parent=11 // pred_check
          %p571 = pneg %p407
        $region74: #{tpu_custom_call.1} parent=11 // pred_check_branch
          %573 = sbr.rel (%p571) target = $region76
        $region75: #{tpu_custom_call.1} parent=11 // pred_region
          _
        $region76: #{tpu_custom_call.1} parent=11 // pred_fallthru
          _
      $region12: #{tpu_custom_call.1} parent=5 // pred_fallthru
        _
      %p574 = scmp.lt.s32.totalorder %s33, 4
      // Predicated region
      $region77: #{tpu_custom_call.1} parent=5 // pred_check
        %p575 = pneg %p574
      $region78: #{tpu_custom_call.1} parent=5 // pred_check_branch
        %577 = sbr.rel (%p575) target = $region80
      $region79: #{tpu_custom_call.1} parent=5 // pred_region
        // Predicated region
        $region81: #{tpu_custom_call.1} parent=79 // pred_check
          %p578 = pneg %p65
        $region82: #{tpu_custom_call.1} parent=79 // pred_check_branch
          %580 = sbr.rel (%p578) target = $region84
        $region83: #{tpu_custom_call.1} parent=79 // pred_region
          %s581 = sand.u32 %s55, 1
          %s582 = scalar_lea.sflag [#allocation5], %s581
          %s583 = sand.u32 %s55, 1
          %s584 = smul.addr %s583, 32
          %s585 = scalar_lea.vmem [#allocation4], %s584
          %s587 = ssub.s32 512, 512
          %588 = vsyncadd %s582, %s587
          %s589 = smul.addr %s40, 4
          %s590 = smul.addr %s589, 128
          %s591 = scalar_lea.hbm %s0, %s590
          %s592 = sshll.u32 %s585, 4
          %s593 = int_to_ptr.vmem [resolvable:$true] %s592
          %598 = dma.hbm_to_vmem [thread:$0]  %s591, 512, %s593, %s582, 256, 256, 16
        $region84: #{tpu_custom_call.1} parent=79 // pred_fallthru
          _
      $region80: #{tpu_custom_call.1} parent=5 // pred_fallthru
        _
      %p599 = scmp.le.s32.totalorder 1, %s33
      %p600 = scmp.lt.s32.totalorder %s33, 5
      %p601 = pnand %p599, %p600
      %p602 = pneg %p601
      // Predicated region
      $region85: #{tpu_custom_call.1} parent=5 // pred_check
        _
      $region86: #{tpu_custom_call.1} parent=5 // pred_check_branch
        %604 = sbr.rel (%p601) target = $region88
      $region87: #{tpu_custom_call.1} parent=5 // pred_region
        %s605 = ssub.s32 %s33, 1
        %s606 = sand.u32 %s58, 1
        %s607 = scalar_lea.sflag [#allocation5], %s606
        %s608 = sand.u32 %s58, 1
        %s609 = smul.addr %s608, 32
        %s610 = scalar_lea.vmem [#allocation4], %s609
        // Predicated region
        $region89: #{tpu_custom_call.1} parent=87 // pred_check
          %p611 = pneg %p71
        $region90: #{tpu_custom_call.1} parent=87 // pred_check_branch
          %613 = sbr.rel (%p611) target = $region92
        $region91: #{tpu_custom_call.1} parent=87 // pred_region
          %614 = dma.done %s607, 512
        $region92: #{tpu_custom_call.1} parent=87 // pred_fallthru
          _
        // Predicated region
        $region93: #{tpu_custom_call.1} parent=87 // pred_check
          %p615 = pneg %p92
        $region94: #{tpu_custom_call.1} parent=87 // pred_check_branch
          %617 = sbr.rel (%p615) target = $region96
        $region95: #{tpu_custom_call.1} parent=87 // pred_region
          %618 = dma.done [#allocation8], 32
        $region96: #{tpu_custom_call.1} parent=87 // pred_fallthru
          _
        // Predicated region
        $region97: #{tpu_custom_call.1} parent=87 // pred_check
          %p619 = pneg %p134
        $region98: #{tpu_custom_call.1} parent=87 // pred_check_branch
          %621 = sbr.rel (%p619) target = $region100
        $region99: #{tpu_custom_call.1} parent=87 // pred_region
          %622 = dma.done [#allocation8], 4096
        $region100: #{tpu_custom_call.1} parent=87 // pred_fallthru
          _
        // Predicated region
        $region101: #{tpu_custom_call.1} parent=87 // pred_check
          %p623 = pneg %p176
        $region102: #{tpu_custom_call.1} parent=87 // pred_check_branch
          %625 = sbr.rel (%p623) target = $region104
        $region103: #{tpu_custom_call.1} parent=87 // pred_region
          %626 = dma.done [#allocation11], 4096
        $region104: #{tpu_custom_call.1} parent=87 // pred_fallthru
          _
        // Predicated region
        $region105: #{tpu_custom_call.1} parent=87 // pred_check
          %p627 = pneg %p218
        $region106: #{tpu_custom_call.1} parent=87 // pred_check_branch
          %629 = sbr.rel (%p627) target = $region108
        $region107: #{tpu_custom_call.1} parent=87 // pred_region
          %630 = dma.done [#allocation11], 4096
        $region108: #{tpu_custom_call.1} parent=87 // pred_fallthru
          _
        // Predicated region
        $region109: #{tpu_custom_call.1} parent=87 // pred_check
          %p631 = pneg %p260
        $region110: #{tpu_custom_call.1} parent=87 // pred_check_branch
          %633 = sbr.rel (%p631) target = $region112
        $region111: #{tpu_custom_call.1} parent=87 // pred_region
          %634 = dma.done [#allocation14], 4096
        $region112: #{tpu_custom_call.1} parent=87 // pred_fallthru
          _
        // Predicated region
        $region113: #{tpu_custom_call.1} parent=87 // pred_check
          %p635 = pneg %p323
        $region114: #{tpu_custom_call.1} parent=87 // pred_check_branch
          %637 = sbr.rel (%p635) target = $region116
        $region115: #{tpu_custom_call.1} parent=87 // pred_region
          %638 = dma.done [#allocation14], 32
        $region116: #{tpu_custom_call.1} parent=87 // pred_fallthru
          _
        // Predicated region
        $region117: #{tpu_custom_call.1} parent=87 // pred_check
          %p639 = pneg %p344
        $region118: #{tpu_custom_call.1} parent=87 // pred_check_branch
          %641 = sbr.rel (%p639) target = $region120
        $region119: #{tpu_custom_call.1} parent=87 // pred_region
          %642 = dma.done [#allocation17], 16384
        $region120: #{tpu_custom_call.1} parent=87 // pred_fallthru
          _
        // Predicated region
        $region121: #{tpu_custom_call.1} parent=87 // pred_check
          %p643 = pneg %p386
        $region122: #{tpu_custom_call.1} parent=87 // pred_check_branch
          %645 = sbr.rel (%p643) target = $region124
        $region123: #{tpu_custom_call.1} parent=87 // pred_region
          %646 = dma.done [#allocation17], 16384
        $region124: #{tpu_custom_call.1} parent=87 // pred_fallthru
          _
        %s647 = sand.u32 %s58, 1
        %s648 = scalar_lea.sflag [#allocation5], %s647
        %s649 = sand.u32 %s58, 1
        %s650 = smul.addr %s649, 32
        %s651 = scalar_lea.vmem [#allocation4], %s650
        %p652 = pneg %p71
        %p653 = pneg %p68
        %p654 = pneg %p92
        %p655 = pneg %p89
        %p656 = pneg %p113
        %p657 = pneg %p110
        %p658 = pneg %p134
        %p659 = pneg %p131
        %p660 = pneg %p155
        %p661 = pneg %p152
        %p662 = pneg %p176
        %p663 = pneg %p173
        %p664 = pneg %p197
        %p665 = pneg %p194
        %p666 = pneg %p218
        %p667 = pneg %p215
        %p668 = pneg %p239
        %p669 = pneg %p236
        %p670 = pneg %p260
        %p671 = pneg %p257
        %p672 = pneg %p281
        %p673 = pneg %p278
        %p674 = pneg %p302
        %p675 = pneg %p299
        %p676 = pneg %p323
        %p677 = pneg %p320
        %p678 = pneg %p344
        %p679 = pneg %p341
        %p680 = pneg %p365
        %p681 = pneg %p362
        %p682 = pneg %p386
        %p683 = pneg %p383
        %p684 = pneg %p407
        %p685 = pneg %p404
        %p686 = pneg %p435
        %p687 = pneg %p432
        %s688 = sand.u32 %s422, 1
        %s689 = scalar_lea.sflag [#allocation6], %s688
        %s690 = sand.u32 %s422, 1
        %s691 = smul.addr %s690, 16
        %s692 = scalar_lea.vmem [#allocation19], %s691
        %s694 = smul.u32 %s43, 8
        %p695 = scmp.eq.s32.totalorder %s43, 0
        // Predicated region
        $region125: #{tpu_custom_call.1} parent=87 // pred_check
          %p696 = pneg %p695
        $region126: #{tpu_custom_call.1} parent=87 // pred_check_branch
          %698 = sbr.rel (%p696) target = $region128
        $region127: #{tpu_custom_call.1} parent=87 // pred_region
          %v699 = vld [vmem:[%s610] sm:$0xff]
          %v700 = vld [vmem:[%s610 + $0x8] sm:$0xff]
          %v701 = vld [vmem:[%s610 + $0x10] sm:$0xff]
          %v702 = vld [vmem:[%s610 + $0x18] sm:$0xff]
          %v703 = vld [vmem:[#allocation7] sm:$0x3]
          %v704 = vld [vmem:[%s2] sm:$0x3]
          %v705 = vadd.f32 %v699, %v700
          %706 = vadd.xlane.f32.xlu0 %v705
          %v707 = vpop.xlane.xlu0 %706
          %v708 = vadd.f32 %v701, %v702
          %709 = vadd.xlane.f32.xlu0 %v708
          %v710 = vpop.xlane.xlu0 %709
          %v711 = vrcp.pop 256.0
          %v712 = vmul.f32 %v707, %v711
          %v713 = vmul.f32 %v710, %v711
          %v714 = vsub.f32 %v699, %v712
          %v715 = vsub.f32 %v700, %v712
          %v716 = vsub.f32 %v701, %v713
          %v717 = vsub.f32 %v702, %v713
          %v718 = vmul.f32 %v714, %v714
          %v719 = vmul.f32 %v715, %v715
          %v720 = vmul.f32 %v716, %v716
          %v721 = vmul.f32 %v717, %v717
          %v722 = vadd.f32 %v718, %v719
          %723 = vadd.xlane.f32.xlu0 %v722
          %v724 = vpop.xlane.xlu0 %723
          %v725 = vadd.f32 %v720, %v721
          %726 = vadd.xlane.f32.xlu0 %v725
          %v727 = vpop.xlane.xlu0 %726
          %v728 = vmul.f32 %v724, %v711
          %v729 = vmul.f32 %v727, %v711
          %v730 = vadd.f32 %v728, 1e-05
          %v731 = vadd.f32 %v729, 1e-05
          %v732 = vrsqrt.pop %v730
          %v733 = vmul.f32 %v730, %v732
          %vm734 = vcmp.eq.f32.partialorder %v730, inf
          %v735 = vsel %vm734, %v730, %v733
          %vm736 = vcmp.eq.f32.partialorder %v730, 0.0
          %v737 = vand.u32 %v730, 2147483648
          %v738 = vsel %vm736, %v737, %v735
          %v739 = vrsqrt.pop %v731
          %v740 = vmul.f32 %v731, %v739
          %vm741 = vcmp.eq.f32.partialorder %v731, inf
          %v742 = vsel %vm741, %v731, %v740
          %vm743 = vcmp.eq.f32.partialorder %v731, 0.0
          %v744 = vand.u32 %v731, 2147483648
          %v745 = vsel %vm743, %v744, %v742
          %v746 = vrcp.pop %v738
          %v747 = vmul.f32 %v714, %v746
          %v748 = vmul.f32 %v715, %v746
          %v749 = vrcp.pop %v745
          %v750 = vmul.f32 %v716, %v749
          %v751 = vmul.f32 %v717, %v749
          %v753 = vlaneseq
          %v754 = vshrl.u32 %v753, 7
          %v755 = vsub.s32 0, %v754
          %v756 = vrot.slane %v703, %v755
          %v757 = vlaneseq
          %v758 = vshrl.u32 %v757, 7
          %v759 = vsub.s32 1, %v758
          %v760 = vrot.slane %v703, %v759
          %v763 = vmul.f32 %v747, %v756
          %v764 = vmul.f32 %v748, %v760
          %v765 = vmul.f32 %v750, %v756
          %v766 = vmul.f32 %v751, %v760
          %v768 = vlaneseq
          %v769 = vshrl.u32 %v768, 7
          %v770 = vsub.s32 0, %v769
          %v771 = vrot.slane %v704, %v770
          %v772 = vlaneseq
          %v773 = vshrl.u32 %v772, 7
          %v774 = vsub.s32 1, %v773
          %v775 = vrot.slane %v704, %v774
          %v778 = vadd.f32 %v763, %v771
          %v779 = vadd.f32 %v764, %v775
          %v780 = vadd.f32 %v765, %v771
          %v781 = vadd.f32 %v766, %v775
          %v782 = vpack.c.bf16 %v780, %v778
          %v783 = vpack.c.bf16 %v781, %v779
          %v784 = vld [vmem:[#allocation10] sm:$0xff]
          %v785 = vld [vmem:[#allocation10 + $0x8] sm:$0xff]
          %v786 = vld [vmem:[#allocation10 + $0x10] sm:$0xff]
          %v787 = vld [vmem:[#allocation10 + $0x18] sm:$0xff]
          %v788 = vld [vmem:[#allocation10 + $0x20] sm:$0xff]
          %v789 = vld [vmem:[#allocation10 + $0x28] sm:$0xff]
          %v790 = vld [vmem:[#allocation10 + $0x30] sm:$0xff]
          %v791 = vld [vmem:[#allocation10 + $0x38] sm:$0xff]
          %v792 = vld [vmem:[#allocation10 + $0x40] sm:$0xff]
          %v793 = vld [vmem:[#allocation10 + $0x48] sm:$0xff]
          %v794 = vld [vmem:[#allocation10 + $0x50] sm:$0xff]
          %v795 = vld [vmem:[#allocation10 + $0x58] sm:$0xff]
          %v796 = vld [vmem:[#allocation10 + $0x60] sm:$0xff]
          %v797 = vld [vmem:[#allocation10 + $0x68] sm:$0xff]
          %v798 = vld [vmem:[#allocation10 + $0x70] sm:$0xff]
          %v799 = vld [vmem:[#allocation10 + $0x78] sm:$0xff]
          %v800 = vld [vmem:[#allocation10 + $0x80] sm:$0xff]
          %v801 = vld [vmem:[#allocation10 + $0x88] sm:$0xff]
          %v802 = vld [vmem:[#allocation10 + $0x90] sm:$0xff]
          %v803 = vld [vmem:[#allocation10 + $0x98] sm:$0xff]
          %v804 = vld [vmem:[#allocation10 + $0xa0] sm:$0xff]
          %v805 = vld [vmem:[#allocation10 + $0xa8] sm:$0xff]
          %v806 = vld [vmem:[#allocation10 + $0xb0] sm:$0xff]
          %v807 = vld [vmem:[#allocation10 + $0xb8] sm:$0xff]
          %v808 = vld [vmem:[#allocation10 + $0xc0] sm:$0xff]
          %v809 = vld [vmem:[#allocation10 + $0xc8] sm:$0xff]
          %v810 = vld [vmem:[#allocation10 + $0xd0] sm:$0xff]
          %v811 = vld [vmem:[#allocation10 + $0xd8] sm:$0xff]
          %v812 = vld [vmem:[#allocation10 + $0xe0] sm:$0xff]
          %v813 = vld [vmem:[#allocation10 + $0xe8] sm:$0xff]
          %v814 = vld [vmem:[#allocation10 + $0xf0] sm:$0xff]
          %v815 = vld [vmem:[#allocation10 + $0xf8] sm:$0xff]
          %v816 = vld [vmem:[%s6] sm:$0x3]
          %v818 = vlaneseq
          %v819 = vshrl.u32 %v818, 7
          %v820 = vsub.s32 0, %v819
          %v821 = vrot.slane %v816, %v820
          %v822 = vlaneseq
          %v823 = vshrl.u32 %v822, 7
          %v824 = vsub.s32 1, %v823
          %v825 = vrot.slane %v816, %v824
          %v860 = vunpack.c.l.b16 %v784
          %v861 = vunpack.c.h.b16 %v784
          %v862 = vunpack.c.l.b16 %v785
          %v863 = vunpack.c.h.b16 %v785
          %v864 = vunpack.c.l.b16 %v786
          %v865 = vunpack.c.h.b16 %v786
          %v866 = vunpack.c.l.b16 %v787
          %v867 = vunpack.c.h.b16 %v787
          %v868 = vunpack.c.l.b16 %v788
          %v869 = vunpack.c.h.b16 %v788
          %v870 = vunpack.c.l.b16 %v789
          %v871 = vunpack.c.h.b16 %v789
          %v872 = vunpack.c.l.b16 %v790
          %v873 = vunpack.c.h.b16 %v790
          %v874 = vunpack.c.l.b16 %v791
          %v875 = vunpack.c.h.b16 %v791
          %v876 = vunpack.c.l.b16 %v792
          %v877 = vunpack.c.h.b16 %v792
          %v878 = vunpack.c.l.b16 %v793
          %v879 = vunpack.c.h.b16 %v793
          %v880 = vunpack.c.l.b16 %v794
          %v881 = vunpack.c.h.b16 %v794
          %v882 = vunpack.c.l.b16 %v795
          %v883 = vunpack.c.h.b16 %v795
          %v884 = vunpack.c.l.b16 %v796
          %v885 = vunpack.c.h.b16 %v796
          %v886 = vunpack.c.l.b16 %v797
          %v887 = vunpack.c.h.b16 %v797
          %v888 = vunpack.c.l.b16 %v798
          %v889 = vunpack.c.h.b16 %v798
          %v890 = vunpack.c.l.b16 %v799
          %v891 = vunpack.c.h.b16 %v799
          %v892 = vunpack.c.l.b16 %v800
          %v893 = vunpack.c.h.b16 %v800
          %v894 = vunpack.c.l.b16 %v801
          %v895 = vunpack.c.h.b16 %v801
          %v896 = vunpack.c.l.b16 %v802
          %v897 = vunpack.c.h.b16 %v802
          %v898 = vunpack.c.l.b16 %v803
          %v899 = vunpack.c.h.b16 %v803
          %v900 = vunpack.c.l.b16 %v804
          %v901 = vunpack.c.h.b16 %v804
          %v902 = vunpack.c.l.b16 %v805
          %v903 = vunpack.c.h.b16 %v805
          %v904 = vunpack.c.l.b16 %v806
          %v905 = vunpack.c.h.b16 %v806
          %v906 = vunpack.c.l.b16 %v807
          %v907 = vunpack.c.h.b16 %v807
          %v908 = vunpack.c.l.b16 %v808
          %v909 = vunpack.c.h.b16 %v808
          %v910 = vunpack.c.l.b16 %v809
          %v911 = vunpack.c.h.b16 %v809
          %v912 = vunpack.c.l.b16 %v810
          %v913 = vunpack.c.h.b16 %v810
          %v914 = vunpack.c.l.b16 %v811
          %v915 = vunpack.c.h.b16 %v811
          %v916 = vunpack.c.l.b16 %v812
          %v917 = vunpack.c.h.b16 %v812
          %v918 = vunpack.c.l.b16 %v813
          %v919 = vunpack.c.h.b16 %v813
          %v920 = vunpack.c.l.b16 %v814
          %v921 = vunpack.c.h.b16 %v814
          %v922 = vunpack.c.l.b16 %v815
          %v923 = vunpack.c.h.b16 %v815
          %v924 = vpack.c.b16 %v862, %v860
          %v925 = vpack.c.b16 %v863, %v861
          %v926 = vpack.c.b16 %v866, %v864
          %v927 = vpack.c.b16 %v867, %v865
          %v928 = vpack.c.b16 %v870, %v868
          %v929 = vpack.c.b16 %v871, %v869
          %v930 = vpack.c.b16 %v874, %v872
          %v931 = vpack.c.b16 %v875, %v873
          %v932 = vpack.c.b16 %v878, %v876
          %v933 = vpack.c.b16 %v879, %v877
          %v934 = vpack.c.b16 %v882, %v880
          %v935 = vpack.c.b16 %v883, %v881
          %v936 = vpack.c.b16 %v886, %v884
          %v937 = vpack.c.b16 %v887, %v885
          %v938 = vpack.c.b16 %v890, %v888
          %v939 = vpack.c.b16 %v891, %v889
          %v940 = vpack.c.b16 %v894, %v892
          %v941 = vpack.c.b16 %v895, %v893
          %v942 = vpack.c.b16 %v898, %v896
          %v943 = vpack.c.b16 %v899, %v897
          %v944 = vpack.c.b16 %v902, %v900
          %v945 = vpack.c.b16 %v903, %v901
          %v946 = vpack.c.b16 %v906, %v904
          %v947 = vpack.c.b16 %v907, %v905
          %v948 = vpack.c.b16 %v910, %v908
          %v949 = vpack.c.b16 %v911, %v909
          %v950 = vpack.c.b16 %v914, %v912
          %v951 = vpack.c.b16 %v915, %v913
          %v952 = vpack.c.b16 %v918, %v916
          %v953 = vpack.c.b16 %v919, %v917
          %v954 = vpack.c.b16 %v922, %v920
          %v955 = vpack.c.b16 %v923, %v921
          %988 = vmatprep.subr.bf16.mxu0 %v939
          %989 = vmatpush1.bf16.msra.mxu0 %v938
          %990 = vmatprep.subr.bf16.mxu0 %v937
          %991 = vmatpush1.bf16.msra.mxu0 %v936
          %992 = vmatprep.subr.bf16.mxu0 %v935
          %993 = vmatpush1.bf16.msra.mxu0 %v934
          %994 = vmatprep.subr.bf16.mxu0 %v933
          %995 = vmatpush1.bf16.msra.mxu0 %v932
          %996 = vmatprep.subr.bf16.mxu0 %v931
          %997 = vmatpush1.bf16.msra.mxu0 %v930
          %998 = vmatprep.subr.bf16.mxu0 %v929
          %999 = vmatpush1.bf16.msra.mxu0 %v928
          %1000 = vmatprep.subr.bf16.mxu0 %v927
          %1001 = vmatpush1.bf16.msra.mxu0 %v926
          %1002 = vmatprep.subr.bf16.mxu0 %v925
          %1003 = vmatpush1.bf16.msra.mxu0 %v924
          %1004 = vmatprep.subr.bf16.mxu0 %v955
          %1005 = vmatpush2.bf16.msra.mxu0 %v954
          %1006 = vmatprep.subr.bf16.mxu0 %v953
          %1007 = vmatpush2.bf16.msra.mxu0 %v952
          %1008 = vmatprep.subr.bf16.mxu0 %v951
          %1009 = vmatpush2.bf16.msra.mxu0 %v950
          %1010 = vmatprep.subr.bf16.mxu0 %v949
          %1011 = vmatpush2.bf16.msra.mxu0 %v948
          %1012 = vmatprep.subr.bf16.mxu0 %v947
          %1013 = vmatpush2.bf16.msra.mxu0 %v946
          %1014 = vmatprep.subr.bf16.mxu0 %v945
          %1015 = vmatpush2.bf16.msra.mxu0 %v944
          %1016 = vmatprep.subr.bf16.mxu0 %v943
          %1017 = vmatpush2.bf16.msra.mxu0 %v942
          %1018 = vmatprep.subr.bf16.mxu0 %v941
          %1019 = vmatpush2.bf16.msra.mxu0 %v940
          %1020 = vmatprep.mubr.bf16.mxu0 %v783
          %1021 = vmatmul.mubr.bf16.gmra.mxu0 %v782
          %v1022 = vpop.f32.mrf.mxu0
          %v1023 = vadd.f32 %v821, %v1022
          %v1024 = vpop.f32.mrf.mxu0
          %v1025 = vadd.f32 %v825, %v1024
          %v1026 = vpop.f32.mrf.mxu0
          %v1027 = vadd.f32 %v821, %v1026
          %v1028 = vpop.f32.mrf.mxu0
          %v1029 = vadd.f32 %v825, %v1028
          %1030 = vdwg.mxu0
          %v1031 = vld [vmem:[#allocation12] sm:$0xff]
          %v1032 = vld [vmem:[#allocation12 + $0x8] sm:$0xff]
          %v1033 = vld [vmem:[#allocation12 + $0x10] sm:$0xff]
          %v1034 = vld [vmem:[#allocation12 + $0x18] sm:$0xff]
          %v1035 = vld [vmem:[#allocation12 + $0x20] sm:$0xff]
          %v1036 = vld [vmem:[#allocation12 + $0x28] sm:$0xff]
          %v1037 = vld [vmem:[#allocation12 + $0x30] sm:$0xff]
          %v1038 = vld [vmem:[#allocation12 + $0x38] sm:$0xff]
          %v1039 = vld [vmem:[#allocation12 + $0x40] sm:$0xff]
          %v1040 = vld [vmem:[#allocation12 + $0x48] sm:$0xff]
          %v1041 = vld [vmem:[#allocation12 + $0x50] sm:$0xff]
          %v1042 = vld [vmem:[#allocation12 + $0x58] sm:$0xff]
          %v1043 = vld [vmem:[#allocation12 + $0x60] sm:$0xff]
          %v1044 = vld [vmem:[#allocation12 + $0x68] sm:$0xff]
          %v1045 = vld [vmem:[#allocation12 + $0x70] sm:$0xff]
          %v1046 = vld [vmem:[#allocation12 + $0x78] sm:$0xff]
          %v1047 = vld [vmem:[#allocation12 + $0x80] sm:$0xff]
          %v1048 = vld [vmem:[#allocation12 + $0x88] sm:$0xff]
          %v1049 = vld [vmem:[#allocation12 + $0x90] sm:$0xff]
          %v1050 = vld [vmem:[#allocation12 + $0x98] sm:$0xff]
          %v1051 = vld [vmem:[#allocation12 + $0xa0] sm:$0xff]
          %v1052 = vld [vmem:[#allocation12 + $0xa8] sm:$0xff]
          %v1053 = vld [vmem:[#allocation12 + $0xb0] sm:$0xff]
          %v1054 = vld [vmem:[#allocation12 + $0xb8] sm:$0xff]
          %v1055 = vld [vmem:[#allocation12 + $0xc0] sm:$0xff]
          %v1056 = vld [vmem:[#allocation12 + $0xc8] sm:$0xff]
          %v1057 = vld [vmem:[#allocation12 + $0xd0] sm:$0xff]
          %v1058 = vld [vmem:[#allocation12 + $0xd8] sm:$0xff]
          %v1059 = vld [vmem:[#allocation12 + $0xe0] sm:$0xff]
          %v1060 = vld [vmem:[#allocation12 + $0xe8] sm:$0xff]
          %v1061 = vld [vmem:[#allocation12 + $0xf0] sm:$0xff]
          %v1062 = vld [vmem:[#allocation12 + $0xf8] sm:$0xff]
          %v1063 = vld [vmem:[%s8] sm:$0x3]
          %v1065 = vlaneseq
          %v1066 = vshrl.u32 %v1065, 7
          %v1067 = vsub.s32 0, %v1066
          %v1068 = vrot.slane %v1063, %v1067
          %v1069 = vlaneseq
          %v1070 = vshrl.u32 %v1069, 7
          %v1071 = vsub.s32 1, %v1070
          %v1072 = vrot.slane %v1063, %v1071
          %v1107 = vunpack.c.l.b16 %v1031
          %v1108 = vunpack.c.h.b16 %v1031
          %v1109 = vunpack.c.l.b16 %v1032
          %v1110 = vunpack.c.h.b16 %v1032
          %v1111 = vunpack.c.l.b16 %v1033
          %v1112 = vunpack.c.h.b16 %v1033
          %v1113 = vunpack.c.l.b16 %v1034
          %v1114 = vunpack.c.h.b16 %v1034
          %v1115 = vunpack.c.l.b16 %v1035
          %v1116 = vunpack.c.h.b16 %v1035
          %v1117 = vunpack.c.l.b16 %v1036
          %v1118 = vunpack.c.h.b16 %v1036
          %v1119 = vunpack.c.l.b16 %v1037
          %v1120 = vunpack.c.h.b16 %v1037
          %v1121 = vunpack.c.l.b16 %v1038
          %v1122 = vunpack.c.h.b16 %v1038
          %v1123 = vunpack.c.l.b16 %v1039
          %v1124 = vunpack.c.h.b16 %v1039
          %v1125 = vunpack.c.l.b16 %v1040
          %v1126 = vunpack.c.h.b16 %v1040
          %v1127 = vunpack.c.l.b16 %v1041
          %v1128 = vunpack.c.h.b16 %v1041
          %v1129 = vunpack.c.l.b16 %v1042
          %v1130 = vunpack.c.h.b16 %v1042
          %v1131 = vunpack.c.l.b16 %v1043
          %v1132 = vunpack.c.h.b16 %v1043
          %v1133 = vunpack.c.l.b16 %v1044
          %v1134 = vunpack.c.h.b16 %v1044
          %v1135 = vunpack.c.l.b16 %v1045
          %v1136 = vunpack.c.h.b16 %v1045
          %v1137 = vunpack.c.l.b16 %v1046
          %v1138 = vunpack.c.h.b16 %v1046
          %v1139 = vunpack.c.l.b16 %v1047
          %v1140 = vunpack.c.h.b16 %v1047
          %v1141 = vunpack.c.l.b16 %v1048
          %v1142 = vunpack.c.h.b16 %v1048
          %v1143 = vunpack.c.l.b16 %v1049
          %v1144 = vunpack.c.h.b16 %v1049
          %v1145 = vunpack.c.l.b16 %v1050
          %v1146 = vunpack.c.h.b16 %v1050
          %v1147 = vunpack.c.l.b16 %v1051
          %v1148 = vunpack.c.h.b16 %v1051
          %v1149 = vunpack.c.l.b16 %v1052
          %v1150 = vunpack.c.h.b16 %v1052
          %v1151 = vunpack.c.l.b16 %v1053
          %v1152 = vunpack.c.h.b16 %v1053
          %v1153 = vunpack.c.l.b16 %v1054
          %v1154 = vunpack.c.h.b16 %v1054
          %v1155 = vunpack.c.l.b16 %v1055
          %v1156 = vunpack.c.h.b16 %v1055
          %v1157 = vunpack.c.l.b16 %v1056
          %v1158 = vunpack.c.h.b16 %v1056
          %v1159 = vunpack.c.l.b16 %v1057
          %v1160 = vunpack.c.h.b16 %v1057
          %v1161 = vunpack.c.l.b16 %v1058
          %v1162 = vunpack.c.h.b16 %v1058
          %v1163 = vunpack.c.l.b16 %v1059
          %v1164 = vunpack.c.h.b16 %v1059
          %v1165 = vunpack.c.l.b16 %v1060
          %v1166 = vunpack.c.h.b16 %v1060
          %v1167 = vunpack.c.l.b16 %v1061
          %v1168 = vunpack.c.h.b16 %v1061
          %v1169 = vunpack.c.l.b16 %v1062
          %v1170 = vunpack.c.h.b16 %v1062
          %v1171 = vpack.c.b16 %v1109, %v1107
          %v1172 = vpack.c.b16 %v1110, %v1108
          %v1173 = vpack.c.b16 %v1113, %v1111
          %v1174 = vpack.c.b16 %v1114, %v1112
          %v1175 = vpack.c.b16 %v1117, %v1115
          %v1176 = vpack.c.b16 %v1118, %v1116
          %v1177 = vpack.c.b16 %v1121, %v1119
          %v1178 = vpack.c.b16 %v1122, %v1120
          %v1179 = vpack.c.b16 %v1125, %v1123
          %v1180 = vpack.c.b16 %v1126, %v1124
          %v1181 = vpack.c.b16 %v1129, %v1127
          %v1182 = vpack.c.b16 %v1130, %v1128
          %v1183 = vpack.c.b16 %v1133, %v1131
          %v1184 = vpack.c.b16 %v1134, %v1132
          %v1185 = vpack.c.b16 %v1137, %v1135
          %v1186 = vpack.c.b16 %v1138, %v1136
          %v1187 = vpack.c.b16 %v1141, %v1139
          %v1188 = vpack.c.b16 %v1142, %v1140
          %v1189 = vpack.c.b16 %v1145, %v1143
          %v1190 = vpack.c.b16 %v1146, %v1144
          %v1191 = vpack.c.b16 %v1149, %v1147
          %v1192 = vpack.c.b16 %v1150, %v1148
          %v1193 = vpack.c.b16 %v1153, %v1151
          %v1194 = vpack.c.b16 %v1154, %v1152
          %v1195 = vpack.c.b16 %v1157, %v1155
          %v1196 = vpack.c.b16 %v1158, %v1156
          %v1197 = vpack.c.b16 %v1161, %v1159
          %v1198 = vpack.c.b16 %v1162, %v1160
          %v1199 = vpack.c.b16 %v1165, %v1163
          %v1200 = vpack.c.b16 %v1166, %v1164
          %v1201 = vpack.c.b16 %v1169, %v1167
          %v1202 = vpack.c.b16 %v1170, %v1168
          %1235 = vmatprep.subr.bf16.mxu0 %v1186
          %1236 = vmatpush1.bf16.msra.mxu0 %v1185
          %1237 = vmatprep.subr.bf16.mxu0 %v1184
          %1238 = vmatpush1.bf16.msra.mxu0 %v1183
          %1239 = vmatprep.subr.bf16.mxu0 %v1182
          %1240 = vmatpush1.bf16.msra.mxu0 %v1181
          %1241 = vmatprep.subr.bf16.mxu0 %v1180
          %1242 = vmatpush1.bf16.msra.mxu0 %v1179
          %1243 = vmatprep.subr.bf16.mxu0 %v1178
          %1244 = vmatpush1.bf16.msra.mxu0 %v1177
          %1245 = vmatprep.subr.bf16.mxu0 %v1176
          %1246 = vmatpush1.bf16.msra.mxu0 %v1175
          %1247 = vmatprep.subr.bf16.mxu0 %v1174
          %1248 = vmatpush1.bf16.msra.mxu0 %v1173
          %1249 = vmatprep.subr.bf16.mxu0 %v1172
          %1250 = vmatpush1.bf16.msra.mxu0 %v1171
          %1251 = vmatprep.subr.bf16.mxu0 %v1202
          %1252 = vmatpush2.bf16.msra.mxu0 %v1201
          %1253 = vmatprep.subr.bf16.mxu0 %v1200
          %1254 = vmatpush2.bf16.msra.mxu0 %v1199
          %1255 = vmatprep.subr.bf16.mxu0 %v1198
          %1256 = vmatpush2.bf16.msra.mxu0 %v1197
          %1257 = vmatprep.subr.bf16.mxu0 %v1196
          %1258 = vmatpush2.bf16.msra.mxu0 %v1195
          %1259 = vmatprep.subr.bf16.mxu0 %v1194
          %1260 = vmatpush2.bf16.msra.mxu0 %v1193
          %1261 = vmatprep.subr.bf16.mxu0 %v1192
          %1262 = vmatpush2.bf16.msra.mxu0 %v1191
          %1263 = vmatprep.subr.bf16.mxu0 %v1190
          %1264 = vmatpush2.bf16.msra.mxu0 %v1189
          %1265 = vmatprep.subr.bf16.mxu0 %v1188
          %1266 = vmatpush2.bf16.msra.mxu0 %v1187
          %1267 = vmatprep.mubr.bf16.mxu0 %v783
          %1268 = vmatmul.mubr.bf16.gmra.mxu0 %v782
          %v1269 = vpop.f32.mrf.mxu0
          %v1270 = vadd.f32 %v1068, %v1269
          %v1271 = vpop.f32.mrf.mxu0
          %v1272 = vadd.f32 %v1072, %v1271
          %v1273 = vpop.f32.mrf.mxu0
          %v1274 = vadd.f32 %v1068, %v1273
          %v1275 = vpop.f32.mrf.mxu0
          %v1276 = vadd.f32 %v1072, %v1275
          %1277 = vdwg.mxu0
          %v1278 = vpack.c.bf16 %v1027, %v1023
          %v1279 = vpack.c.bf16 %v1029, %v1025
          %v1282 = vunpack.c.l.b16 %v1278
          %v1283 = vunpack.c.l.b16 %v1279
          %v1284 = vunpack.c.h.b16 %v1278
          %v1285 = vunpack.c.h.b16 %v1279
          %v1286 = vpack.c.b16 %v1283, %v1282
          %v1287 = vpack.c.b16 %v1285, %v1284
          %1290 = vst [vmem:[#allocation2] sm:$0xff] %v1286
          %1291 = vst [vmem:[#allocation2 + $0x8] sm:$0xff] %v1287
          %v1292 = vpack.c.bf16 %v1274, %v1270
          %v1293 = vpack.c.bf16 %v1276, %v1272
          %v1296 = vunpack.c.l.b16 %v1292
          %v1297 = vunpack.c.l.b16 %v1293
          %v1298 = vunpack.c.h.b16 %v1292
          %v1299 = vunpack.c.h.b16 %v1293
          %v1300 = vpack.c.b16 %v1297, %v1296
          %v1301 = vpack.c.b16 %v1299, %v1298
          %1304 = vst [vmem:[#allocation3] sm:$0xff] %v1300
          %1305 = vst [vmem:[#allocation3 + $0x8] sm:$0xff] %v1301
        $region128: #{tpu_custom_call.1} parent=87 // pred_fallthru
          _
        %s1306 = sshra.s32 %s694, 3
        %s1307 = sand.u32 %s694, 7
        %s1308 = smul.u32 %s1306, 2
        %s1309 = smul.addr %s1308, 8
        %s1310 = scalar_lea.vmem %s610, %s1309 [#allocation4]
        %v1311 = vld [vmem:[%s1310] sm:$0xff]
        %v1312 = vld [vmem:[%s1310 + $0x8] sm:$0xff]
        %v1313 = vld [vmem:[#allocation7] sm:$0x3]
        %v1314 = vld [vmem:[%s2] sm:$0x3]
        %v1315 = vadd.f32 %v1311, %v1312
        %1316 = vadd.xlane.f32.xlu0 %v1315
        %v1317 = vpop.xlane.xlu0 %1316
        %v1318 = vrcp.pop 256.0
        %v1319 = vmul.f32 %v1317, %v1318
        %v1320 = vsub.f32 %v1311, %v1319
        %v1321 = vsub.f32 %v1312, %v1319
        %v1322 = vmul.f32 %v1320, %v1320
        %v1323 = vmul.f32 %v1321, %v1321
        %v1324 = vadd.f32 %v1322, %v1323
        %1325 = vadd.xlane.f32.xlu0 %v1324
        %v1326 = vpop.xlane.xlu0 %1325
        %v1327 = vmul.f32 %v1326, %v1318
        %v1328 = vadd.f32 %v1327, 1e-05
        %v1329 = vrsqrt.pop %v1328
        %v1330 = vmul.f32 %v1328, %v1329
        %vm1331 = vcmp.eq.f32.partialorder %v1328, inf
        %v1332 = vsel %vm1331, %v1328, %v1330
        %vm1333 = vcmp.eq.f32.partialorder %v1328, 0.0
        %v1334 = vand.u32 %v1328, 2147483648
        %v1335 = vsel %vm1333, %v1334, %v1332
        %v1336 = vrcp.pop %v1335
        %v1337 = vmul.f32 %v1320, %v1336
        %v1338 = vmul.f32 %v1321, %v1336
        %v1340 = vlaneseq
        %v1341 = vshrl.u32 %v1340, 7
        %v1342 = vsub.s32 0, %v1341
        %v1343 = vrot.slane %v1313, %v1342
        %v1344 = vlaneseq
        %v1345 = vshrl.u32 %v1344, 7
        %v1346 = vsub.s32 1, %v1345
        %v1347 = vrot.slane %v1313, %v1346
        %v1350 = vmul.f32 %v1337, %v1343
        %v1351 = vmul.f32 %v1338, %v1347
        %v1353 = vlaneseq
        %v1354 = vshrl.u32 %v1353, 7
        %v1355 = vsub.s32 0, %v1354
        %v1356 = vrot.slane %v1314, %v1355
        %v1357 = vlaneseq
        %v1358 = vshrl.u32 %v1357, 7
        %v1359 = vsub.s32 1, %v1358
        %v1360 = vrot.slane %v1314, %v1359
        %v1363 = vadd.f32 %v1350, %v1356
        %v1364 = vadd.f32 %v1351, %v1360
        %v1365 = vpack.c.bf16 %v1363, %v1363
        %v1366 = vpack.c.bf16 %v1364, %v1364
        %v1367 = vld [vmem:[#allocation9] sm:$0xff]
        %v1368 = vld [vmem:[#allocation9 + $0x8] sm:$0xff]
        %v1369 = vld [vmem:[#allocation9 + $0x10] sm:$0xff]
        %v1370 = vld [vmem:[#allocation9 + $0x18] sm:$0xff]
        %v1371 = vld [vmem:[#allocation9 + $0x20] sm:$0xff]
        %v1372 = vld [vmem:[#allocation9 + $0x28] sm:$0xff]
        %v1373 = vld [vmem:[#allocation9 + $0x30] sm:$0xff]
        %v1374 = vld [vmem:[#allocation9 + $0x38] sm:$0xff]
        %v1375 = vld [vmem:[#allocation9 + $0x40] sm:$0xff]
        %v1376 = vld [vmem:[#allocation9 + $0x48] sm:$0xff]
        %v1377 = vld [vmem:[#allocation9 + $0x50] sm:$0xff]
        %v1378 = vld [vmem:[#allocation9 + $0x58] sm:$0xff]
        %v1379 = vld [vmem:[#allocation9 + $0x60] sm:$0xff]
        %v1380 = vld [vmem:[#allocation9 + $0x68] sm:$0xff]
        %v1381 = vld [vmem:[#allocation9 + $0x70] sm:$0xff]
        %v1382 = vld [vmem:[#allocation9 + $0x78] sm:$0xff]
        %v1383 = vld [vmem:[#allocation9 + $0x80] sm:$0xff]
        %v1384 = vld [vmem:[#allocation9 + $0x88] sm:$0xff]
        %v1385 = vld [vmem:[#allocation9 + $0x90] sm:$0xff]
        %v1386 = vld [vmem:[#allocation9 + $0x98] sm:$0xff]
        %v1387 = vld [vmem:[#allocation9 + $0xa0] sm:$0xff]
        %v1388 = vld [vmem:[#allocation9 + $0xa8] sm:$0xff]
        %v1389 = vld [vmem:[#allocation9 + $0xb0] sm:$0xff]
        %v1390 = vld [vmem:[#allocation9 + $0xb8] sm:$0xff]
        %v1391 = vld [vmem:[#allocation9 + $0xc0] sm:$0xff]
        %v1392 = vld [vmem:[#allocation9 + $0xc8] sm:$0xff]
        %v1393 = vld [vmem:[#allocation9 + $0xd0] sm:$0xff]
        %v1394 = vld [vmem:[#allocation9 + $0xd8] sm:$0xff]
        %v1395 = vld [vmem:[#allocation9 + $0xe0] sm:$0xff]
        %v1396 = vld [vmem:[#allocation9 + $0xe8] sm:$0xff]
        %v1397 = vld [vmem:[#allocation9 + $0xf0] sm:$0xff]
        %v1398 = vld [vmem:[#allocation9 + $0xf8] sm:$0xff]
        %v1399 = vld [vmem:[%s4] sm:$0x3]
        %v1401 = vlaneseq
        %v1402 = vshrl.u32 %v1401, 7
        %v1403 = vsub.s32 0, %v1402
        %v1404 = vrot.slane %v1399, %v1403
        %v1405 = vlaneseq
        %v1406 = vshrl.u32 %v1405, 7
        %v1407 = vsub.s32 1, %v1406
        %v1408 = vrot.slane %v1399, %v1407
        %v1443 = vunpack.c.l.b16 %v1367
        %v1444 = vunpack.c.h.b16 %v1367
        %v1445 = vunpack.c.l.b16 %v1368
        %v1446 = vunpack.c.h.b16 %v1368
        %v1447 = vunpack.c.l.b16 %v1369
        %v1448 = vunpack.c.h.b16 %v1369
        %v1449 = vunpack.c.l.b16 %v1370
        %v1450 = vunpack.c.h.b16 %v1370
        %v1451 = vunpack.c.l.b16 %v1371
        %v1452 = vunpack.c.h.b16 %v1371
        %v1453 = vunpack.c.l.b16 %v1372
        %v1454 = vunpack.c.h.b16 %v1372
        %v1455 = vunpack.c.l.b16 %v1373
        %v1456 = vunpack.c.h.b16 %v1373
        %v1457 = vunpack.c.l.b16 %v1374
        %v1458 = vunpack.c.h.b16 %v1374
        %v1459 = vunpack.c.l.b16 %v1375
        %v1460 = vunpack.c.h.b16 %v1375
        %v1461 = vunpack.c.l.b16 %v1376
        %v1462 = vunpack.c.h.b16 %v1376
        %v1463 = vunpack.c.l.b16 %v1377
        %v1464 = vunpack.c.h.b16 %v1377
        %v1465 = vunpack.c.l.b16 %v1378
        %v1466 = vunpack.c.h.b16 %v1378
        %v1467 = vunpack.c.l.b16 %v1379
        %v1468 = vunpack.c.h.b16 %v1379
        %v1469 = vunpack.c.l.b16 %v1380
        %v1470 = vunpack.c.h.b16 %v1380
        %v1471 = vunpack.c.l.b16 %v1381
        %v1472 = vunpack.c.h.b16 %v1381
        %v1473 = vunpack.c.l.b16 %v1382
        %v1474 = vunpack.c.h.b16 %v1382
        %v1475 = vunpack.c.l.b16 %v1383
        %v1476 = vunpack.c.h.b16 %v1383
        %v1477 = vunpack.c.l.b16 %v1384
        %v1478 = vunpack.c.h.b16 %v1384
        %v1479 = vunpack.c.l.b16 %v1385
        %v1480 = vunpack.c.h.b16 %v1385
        %v1481 = vunpack.c.l.b16 %v1386
        %v1482 = vunpack.c.h.b16 %v1386
        %v1483 = vunpack.c.l.b16 %v1387
        %v1484 = vunpack.c.h.b16 %v1387
        %v1485 = vunpack.c.l.b16 %v1388
        %v1486 = vunpack.c.h.b16 %v1388
        %v1487 = vunpack.c.l.b16 %v1389
        %v1488 = vunpack.c.h.b16 %v1389
        %v1489 = vunpack.c.l.b16 %v1390
        %v1490 = vunpack.c.h.b16 %v1390
        %v1491 = vunpack.c.l.b16 %v1391
        %v1492 = vunpack.c.h.b16 %v1391
        %v1493 = vunpack.c.l.b16 %v1392
        %v1494 = vunpack.c.h.b16 %v1392
        %v1495 = vunpack.c.l.b16 %v1393
        %v1496 = vunpack.c.h.b16 %v1393
        %v1497 = vunpack.c.l.b16 %v1394
        %v1498 = vunpack.c.h.b16 %v1394
        %v1499 = vunpack.c.l.b16 %v1395
        %v1500 = vunpack.c.h.b16 %v1395
        %v1501 = vunpack.c.l.b16 %v1396
        %v1502 = vunpack.c.h.b16 %v1396
        %v1503 = vunpack.c.l.b16 %v1397
        %v1504 = vunpack.c.h.b16 %v1397
        %v1505 = vunpack.c.l.b16 %v1398
        %v1506 = vunpack.c.h.b16 %v1398
        %v1507 = vpack.c.b16 %v1445, %v1443
        %v1508 = vpack.c.b16 %v1446, %v1444
        %v1509 = vpack.c.b16 %v1449, %v1447
        %v1510 = vpack.c.b16 %v1450, %v1448
        %v1511 = vpack.c.b16 %v1453, %v1451
        %v1512 = vpack.c.b16 %v1454, %v1452
        %v1513 = vpack.c.b16 %v1457, %v1455
        %v1514 = vpack.c.b16 %v1458, %v1456
        %v1515 = vpack.c.b16 %v1461, %v1459
        %v1516 = vpack.c.b16 %v1462, %v1460
        %v1517 = vpack.c.b16 %v1465, %v1463
        %v1518 = vpack.c.b16 %v1466, %v1464
        %v1519 = vpack.c.b16 %v1469, %v1467
        %v1520 = vpack.c.b16 %v1470, %v1468
        %v1521 = vpack.c.b16 %v1473, %v1471
        %v1522 = vpack.c.b16 %v1474, %v1472
        %v1523 = vpack.c.b16 %v1477, %v1475
        %v1524 = vpack.c.b16 %v1478, %v1476
        %v1525 = vpack.c.b16 %v1481, %v1479
        %v1526 = vpack.c.b16 %v1482, %v1480
        %v1527 = vpack.c.b16 %v1485, %v1483
        %v1528 = vpack.c.b16 %v1486, %v1484
        %v1529 = vpack.c.b16 %v1489, %v1487
        %v1530 = vpack.c.b16 %v1490, %v1488
        %v1531 = vpack.c.b16 %v1493, %v1491
        %v1532 = vpack.c.b16 %v1494, %v1492
        %v1533 = vpack.c.b16 %v1497, %v1495
        %v1534 = vpack.c.b16 %v1498, %v1496
        %v1535 = vpack.c.b16 %v1501, %v1499
        %v1536 = vpack.c.b16 %v1502, %v1500
        %v1537 = vpack.c.b16 %v1505, %v1503
        %v1538 = vpack.c.b16 %v1506, %v1504
        %1571 = vmatprep.subr.bf16.mxu0 %v1522
        %1572 = vmatpush1.bf16.msra.mxu0 %v1521
        %1573 = vmatprep.subr.bf16.mxu0 %v1520
        %1574 = vmatpush1.bf16.msra.mxu0 %v1519
        %1575 = vmatprep.subr.bf16.mxu0 %v1518
        %1576 = vmatpush1.bf16.msra.mxu0 %v1517
        %1577 = vmatprep.subr.bf16.mxu0 %v1516
        %1578 = vmatpush1.bf16.msra.mxu0 %v1515
        %1579 = vmatprep.subr.bf16.mxu0 %v1514
        %1580 = vmatpush1.bf16.msra.mxu0 %v1513
        %1581 = vmatprep.subr.bf16.mxu0 %v1512
        %1582 = vmatpush1.bf16.msra.mxu0 %v1511
        %1583 = vmatprep.subr.bf16.mxu0 %v1510
        %1584 = vmatpush1.bf16.msra.mxu0 %v1509
        %1585 = vmatprep.subr.bf16.mxu0 %v1508
        %1586 = vmatpush1.bf16.msra.mxu0 %v1507
        %1587 = vmatprep.subr.bf16.mxu0 %v1538
        %1588 = vmatpush2.bf16.msra.mxu0 %v1537
        %1589 = vmatprep.subr.bf16.mxu0 %v1536
        %1590 = vmatpush2.bf16.msra.mxu0 %v1535
        %1591 = vmatprep.subr.bf16.mxu0 %v1534
        %1592 = vmatpush2.bf16.msra.mxu0 %v1533
        %1593 = vmatprep.subr.bf16.mxu0 %v1532
        %1594 = vmatpush2.bf16.msra.mxu0 %v1531
        %1595 = vmatprep.subr.bf16.mxu0 %v1530
        %1596 = vmatpush2.bf16.msra.mxu0 %v1529
        %1597 = vmatprep.subr.bf16.mxu0 %v1528
        %1598 = vmatpush2.bf16.msra.mxu0 %v1527
        %1599 = vmatprep.subr.bf16.mxu0 %v1526
        %1600 = vmatpush2.bf16.msra.mxu0 %v1525
        %1601 = vmatprep.subr.bf16.mxu0 %v1524
        %1602 = vmatpush2.bf16.msra.mxu0 %v1523
        %1603 = vmatprep.mubr.bf16.mxu0 %v1366
        %1604 = vmatmul.mubr.bf16.gmra.mxu0 %v1365
        %v1605 = vpop.f32.mrf.mxu0
        %v1606 = vadd.f32 %v1404, %v1605
        %v1607 = vpop.f32.mrf.mxu0
        %v1608 = vadd.f32 %v1408, %v1607
        %v1609 = vpop.f32.mrf.mxu0
        %v1610 = vpop.f32.mrf.mxu0
        %1611 = vdwg.mxu0
        %v1612 = vpack.c.bf16 %v1606, %v1606
        %v1614 = vunpack.c.l.s4 1983009808
        %v1615 = vunpack.c.0.s8 %v1614
        %v1616 = vlaneseq
        %v1617 = vshrl.u32 %v1616, 7
        %v1618 = vsub.s32 %v1615, %v1617
        %v1619 = vrot.slane %v1612, %v1618
        %v1620 = vcombine.high %v1619, 0
        %v1622 = vunpack.c.l.s4 1934713408
        %v1623 = vunpack.c.0.s8 %v1622
        %v1624 = vlaneseq
        %v1625 = vshrl.u32 %v1624, 7
        %v1626 = vsub.s32 %v1623, %v1625
        %v1627 = vrot.slane %v1619, %v1626
        %v1629 = vunpack.c.l.s4 1934713408
        %v1630 = vunpack.c.0.s8 %v1629
        %v1631 = vlaneseq
        %v1632 = vshrl.u32 %v1631, 7
        %v1633 = vsub.s32 %v1630, %v1632
        %v1634 = vrot.slane %v1620, %v1633
        %v1635 = vcombine.high %v1627, 0
        %v1636 = vcombine.high %v1634, 0
        %v1637 = vpack.c.bf16 %v1608, %v1608
        %v1639 = vunpack.c.l.s4 1983009808
        %v1640 = vunpack.c.0.s8 %v1639
        %v1641 = vlaneseq
        %v1642 = vshrl.u32 %v1641, 7
        %v1643 = vsub.s32 %v1640, %v1642
        %v1644 = vrot.slane %v1637, %v1643
        %v1645 = vcombine.high %v1644, 0
        %v1647 = vunpack.c.l.s4 1934713408
        %v1648 = vunpack.c.0.s8 %v1647
        %v1649 = vlaneseq
        %v1650 = vshrl.u32 %v1649, 7
        %v1651 = vsub.s32 %v1648, %v1650
        %v1652 = vrot.slane %v1644, %v1651
        %v1654 = vunpack.c.l.s4 1934713408
        %v1655 = vunpack.c.0.s8 %v1654
        %v1656 = vlaneseq
        %v1657 = vshrl.u32 %v1656, 7
        %v1658 = vsub.s32 %v1655, %v1657
        %v1659 = vrot.slane %v1645, %v1658
        %v1660 = vcombine.high %v1652, 0
        %v1661 = vcombine.high %v1659, 0
        %v1664 = vpack.i.b16 %v1652, %v1627
        %v1666 = vshrl.u32 %v1627, 16
        %v1667 = vshrl.u32 %v1652, 16
        %v1668 = vpack.i.b16 %v1667, %v1666
        %v1672 = vpack.i.b16 %v1660, %v1635
        %v1674 = vshrl.u32 %v1635, 16
        %v1675 = vshrl.u32 %v1660, 16
        %v1676 = vpack.i.b16 %v1675, %v1674
        %v1680 = vpack.i.b16 %v1659, %v1634
        %v1682 = vshrl.u32 %v1634, 16
        %v1683 = vshrl.u32 %v1659, 16
        %v1684 = vpack.i.b16 %v1683, %v1682
        %v1688 = vpack.i.b16 %v1661, %v1636
        %v1690 = vshrl.u32 %v1636, 16
        %v1691 = vshrl.u32 %v1661, 16
        %v1692 = vpack.i.b16 %v1691, %v1690
        %v1694 = vcombine.low %v1664, %v1680
        %v1696 = vunpack.c.l.s4 1983009808
        %v1697 = vunpack.c.0.s8 %v1696
        %v1698 = vlaneseq
        %v1699 = vshrl.u32 %v1698, 7
        %v1700 = vsub.s32 %v1697, %v1699
        %v1701 = vrot.slane %v1694, %v1700
        %v1702 = vcombine.low %v1672, %v1688
        %v1704 = vunpack.c.l.s4 1983009808
        %v1705 = vunpack.c.0.s8 %v1704
        %v1706 = vlaneseq
        %v1707 = vshrl.u32 %v1706, 7
        %v1708 = vsub.s32 %v1705, %v1707
        %v1709 = vrot.slane %v1702, %v1708
        %v1710 = vcombine.low %v1701, %v1709
        %v1712 = vunpack.c.l.s4 1934713408
        %v1713 = vunpack.c.0.s8 %v1712
        %v1714 = vlaneseq
        %v1715 = vshrl.u32 %v1714, 7
        %v1716 = vsub.s32 %v1713, %v1715
        %v1717 = vrot.slane %v1710, %v1716
        %v1718 = vcombine.low %v1668, %v1684
        %v1720 = vunpack.c.l.s4 1983009808
        %v1721 = vunpack.c.0.s8 %v1720
        %v1722 = vlaneseq
        %v1723 = vshrl.u32 %v1722, 7
        %v1724 = vsub.s32 %v1721, %v1723
        %v1725 = vrot.slane %v1718, %v1724
        %v1726 = vcombine.low %v1676, %v1692
        %v1728 = vunpack.c.l.s4 1983009808
        %v1729 = vunpack.c.0.s8 %v1728
        %v1730 = vlaneseq
        %v1731 = vshrl.u32 %v1730, 7
        %v1732 = vsub.s32 %v1729, %v1731
        %v1733 = vrot.slane %v1726, %v1732
        %v1734 = vcombine.low %v1725, %v1733
        %v1736 = vunpack.c.l.s4 1934713408
        %v1737 = vunpack.c.0.s8 %v1736
        %v1738 = vlaneseq
        %v1739 = vshrl.u32 %v1738, 7
        %v1740 = vsub.s32 %v1737, %v1739
        %v1741 = vrot.slane %v1734, %v1740
        %v1744 = vpack.i.b16 %v1741, %v1717
        %v1746 = vshrl.u32 %v1717, 16
        %v1747 = vshrl.u32 %v1741, 16
        %v1748 = vpack.i.b16 %v1747, %v1746
        %v1750 = vld [vmem:[#allocation2] sm:$0xff]
        %v1751 = vld [vmem:[#allocation2 + $0x8] sm:$0xff]
        %v1754 = vrot.slane %v1750, 4
        %v1755 = vrot.slane %v1751, 4
        %v1758 = vpack.i.b16 %v1754, %v1750
        %v1759 = vshrl.u32 %v1750, 16
        %v1760 = vshrl.u32 %v1754, 16
        %v1761 = vpack.i.b16 %v1760, %v1759
        %v1764 = vpack.i.b16 %v1755, %v1751
        %v1765 = vshrl.u32 %v1751, 16
        %v1766 = vshrl.u32 %v1755, 16
        %v1767 = vpack.i.b16 %v1766, %v1765
        %v1770 = vunpack.c.l.s4 1983009808
        %v1771 = vunpack.c.0.s8 %v1770
        %v1772 = vlaneseq
        %v1773 = vshrl.u32 %v1772, 7
        %v1774 = vsub.s32 %v1771, %v1773
        %v1775 = vrot.slane %v1758, %v1774
        %v1776 = vcombine.high %v1775, 0
        %v1778 = vunpack.c.l.s4 1934713408
        %v1779 = vunpack.c.0.s8 %v1778
        %v1780 = vlaneseq
        %v1781 = vshrl.u32 %v1780, 7
        %v1782 = vsub.s32 %v1779, %v1781
        %v1783 = vrot.slane %v1775, %v1782
        %v1785 = vunpack.c.l.s4 1934713408
        %v1786 = vunpack.c.0.s8 %v1785
        %v1787 = vlaneseq
        %v1788 = vshrl.u32 %v1787, 7
        %v1789 = vsub.s32 %v1786, %v1788
        %v1790 = vrot.slane %v1776, %v1789
        %v1791 = vcombine.high %v1783, 0
        %v1792 = vcombine.high %v1790, 0
        %v1795 = vunpack.c.l.s4 1983009808
        %v1796 = vunpack.c.0.s8 %v1795
        %v1797 = vlaneseq
        %v1798 = vshrl.u32 %v1797, 7
        %v1799 = vsub.s32 %v1796, %v1798
        %v1800 = vrot.slane %v1761, %v1799
        %v1801 = vcombine.high %v1800, 0
        %v1803 = vunpack.c.l.s4 1934713408
        %v1804 = vunpack.c.0.s8 %v1803
        %v1805 = vlaneseq
        %v1806 = vshrl.u32 %v1805, 7
        %v1807 = vsub.s32 %v1804, %v1806
        %v1808 = vrot.slane %v1800, %v1807
        %v1810 = vunpack.c.l.s4 1934713408
        %v1811 = vunpack.c.0.s8 %v1810
        %v1812 = vlaneseq
        %v1813 = vshrl.u32 %v1812, 7
        %v1814 = vsub.s32 %v1811, %v1813
        %v1815 = vrot.slane %v1801, %v1814
        %v1816 = vcombine.high %v1808, 0
        %v1817 = vcombine.high %v1815, 0
        %v1820 = vunpack.c.l.s4 1983009808
        %v1821 = vunpack.c.0.s8 %v1820
        %v1822 = vlaneseq
        %v1823 = vshrl.u32 %v1822, 7
        %v1824 = vsub.s32 %v1821, %v1823
        %v1825 = vrot.slane %v1764, %v1824
        %v1826 = vcombine.high %v1825, 0
        %v1828 = vunpack.c.l.s4 1934713408
        %v1829 = vunpack.c.0.s8 %v1828
        %v1830 = vlaneseq
        %v1831 = vshrl.u32 %v1830, 7
        %v1832 = vsub.s32 %v1829, %v1831
        %v1833 = vrot.slane %v1825, %v1832
        %v1835 = vunpack.c.l.s4 1934713408
        %v1836 = vunpack.c.0.s8 %v1835
        %v1837 = vlaneseq
        %v1838 = vshrl.u32 %v1837, 7
        %v1839 = vsub.s32 %v1836, %v1838
        %v1840 = vrot.slane %v1826, %v1839
        %v1841 = vcombine.high %v1833, 0
        %v1842 = vcombine.high %v1840, 0
        %v1845 = vunpack.c.l.s4 1983009808
        %v1846 = vunpack.c.0.s8 %v1845
        %v1847 = vlaneseq
        %v1848 = vshrl.u32 %v1847, 7
        %v1849 = vsub.s32 %v1846, %v1848
        %v1850 = vrot.slane %v1767, %v1849
        %v1851 = vcombine.high %v1850, 0
        %v1853 = vunpack.c.l.s4 1934713408
        %v1854 = vunpack.c.0.s8 %v1853
        %v1855 = vlaneseq
        %v1856 = vshrl.u32 %v1855, 7
        %v1857 = vsub.s32 %v1854, %v1856
        %v1858 = vrot.slane %v1850, %v1857
        %v1860 = vunpack.c.l.s4 1934713408
        %v1861 = vunpack.c.0.s8 %v1860
        %v1862 = vlaneseq
        %v1863 = vshrl.u32 %v1862, 7
        %v1864 = vsub.s32 %v1861, %v1863
        %v1865 = vrot.slane %v1851, %v1864
        %v1866 = vcombine.high %v1858, 0
        %v1867 = vcombine.high %v1865, 0
        %v1868 = vcombine.low %v1783, %v1790
        %v1870 = vunpack.c.l.s4 1983009808
        %v1871 = vunpack.c.0.s8 %v1870
        %v1872 = vlaneseq
        %v1873 = vshrl.u32 %v1872, 7
        %v1874 = vsub.s32 %v1871, %v1873
        %v1875 = vrot.slane %v1868, %v1874
        %v1876 = vcombine.low %v1791, %v1792
        %v1878 = vunpack.c.l.s4 1983009808
        %v1879 = vunpack.c.0.s8 %v1878
        %v1880 = vlaneseq
        %v1881 = vshrl.u32 %v1880, 7
        %v1882 = vsub.s32 %v1879, %v1881
        %v1883 = vrot.slane %v1876, %v1882
        %v1884 = vcombine.low %v1875, %v1883
        %v1886 = vunpack.c.l.s4 1934713408
        %v1887 = vunpack.c.0.s8 %v1886
        %v1888 = vlaneseq
        %v1889 = vshrl.u32 %v1888, 7
        %v1890 = vsub.s32 %v1887, %v1889
        %v1891 = vrot.slane %v1884, %v1890
        %v1892 = vcombine.low %v1808, %v1815
        %v1894 = vunpack.c.l.s4 1983009808
        %v1895 = vunpack.c.0.s8 %v1894
        %v1896 = vlaneseq
        %v1897 = vshrl.u32 %v1896, 7
        %v1898 = vsub.s32 %v1895, %v1897
        %v1899 = vrot.slane %v1892, %v1898
        %v1900 = vcombine.low %v1816, %v1817
        %v1902 = vunpack.c.l.s4 1983009808
        %v1903 = vunpack.c.0.s8 %v1902
        %v1904 = vlaneseq
        %v1905 = vshrl.u32 %v1904, 7
        %v1906 = vsub.s32 %v1903, %v1905
        %v1907 = vrot.slane %v1900, %v1906
        %v1908 = vcombine.low %v1899, %v1907
        %v1910 = vunpack.c.l.s4 1934713408
        %v1911 = vunpack.c.0.s8 %v1910
        %v1912 = vlaneseq
        %v1913 = vshrl.u32 %v1912, 7
        %v1914 = vsub.s32 %v1911, %v1913
        %v1915 = vrot.slane %v1908, %v1914
        %v1916 = vcombine.low %v1833, %v1840
        %v1918 = vunpack.c.l.s4 1983009808
        %v1919 = vunpack.c.0.s8 %v1918
        %v1920 = vlaneseq
        %v1921 = vshrl.u32 %v1920, 7
        %v1922 = vsub.s32 %v1919, %v1921
        %v1923 = vrot.slane %v1916, %v1922
        %v1924 = vcombine.low %v1841, %v1842
        %v1926 = vunpack.c.l.s4 1983009808
        %v1927 = vunpack.c.0.s8 %v1926
        %v1928 = vlaneseq
        %v1929 = vshrl.u32 %v1928, 7
        %v1930 = vsub.s32 %v1927, %v1929
        %v1931 = vrot.slane %v1924, %v1930
        %v1932 = vcombine.low %v1923, %v1931
        %v1934 = vunpack.c.l.s4 1934713408
        %v1935 = vunpack.c.0.s8 %v1934
        %v1936 = vlaneseq
        %v1937 = vshrl.u32 %v1936, 7
        %v1938 = vsub.s32 %v1935, %v1937
        %v1939 = vrot.slane %v1932, %v1938
        %v1940 = vcombine.low %v1858, %v1865
        %v1942 = vunpack.c.l.s4 1983009808
        %v1943 = vunpack.c.0.s8 %v1942
        %v1944 = vlaneseq
        %v1945 = vshrl.u32 %v1944, 7
        %v1946 = vsub.s32 %v1943, %v1945
        %v1947 = vrot.slane %v1940, %v1946
        %v1948 = vcombine.low %v1866, %v1867
        %v1950 = vunpack.c.l.s4 1983009808
        %v1951 = vunpack.c.0.s8 %v1950
        %v1952 = vlaneseq
        %v1953 = vshrl.u32 %v1952, 7
        %v1954 = vsub.s32 %v1951, %v1953
        %v1955 = vrot.slane %v1948, %v1954
        %v1956 = vcombine.low %v1947, %v1955
        %v1958 = vunpack.c.l.s4 1934713408
        %v1959 = vunpack.c.0.s8 %v1958
        %v1960 = vlaneseq
        %v1961 = vshrl.u32 %v1960, 7
        %v1962 = vsub.s32 %v1959, %v1961
        %v1963 = vrot.slane %v1956, %v1962
        %v1966 = vpack.i.b16 %v1915, %v1891
        %v1967 = vshrl.u32 %v1891, 16
        %v1968 = vshrl.u32 %v1915, 16
        %v1969 = vpack.i.b16 %v1968, %v1967
        %v1972 = vpack.i.b16 %v1963, %v1939
        %v1973 = vshrl.u32 %v1939, 16
        %v1974 = vshrl.u32 %v1963, 16
        %v1975 = vpack.i.b16 %v1974, %v1973
        %v1976 = vld [vmem:[#allocation3] sm:$0xff]
        %v1977 = vld [vmem:[#allocation3 + $0x8] sm:$0xff]
        %v1980 = vrot.slane %v1976, 4
        %v1981 = vrot.slane %v1977, 4
        %v1984 = vpack.i.b16 %v1980, %v1976
        %v1985 = vshrl.u32 %v1976, 16
        %v1986 = vshrl.u32 %v1980, 16
        %v1987 = vpack.i.b16 %v1986, %v1985
        %v1990 = vpack.i.b16 %v1981, %v1977
        %v1991 = vshrl.u32 %v1977, 16
        %v1992 = vshrl.u32 %v1981, 16
        %v1993 = vpack.i.b16 %v1992, %v1991
        %v1996 = vunpack.c.l.s4 1983009808
        %v1997 = vunpack.c.0.s8 %v1996
        %v1998 = vlaneseq
        %v1999 = vshrl.u32 %v1998, 7
        %v2000 = vsub.s32 %v1997, %v1999
        %v2001 = vrot.slane %v1984, %v2000
        %v2002 = vcombine.high %v2001, 0
        %v2004 = vunpack.c.l.s4 1934713408
        %v2005 = vunpack.c.0.s8 %v2004
        %v2006 = vlaneseq
        %v2007 = vshrl.u32 %v2006, 7
        %v2008 = vsub.s32 %v2005, %v2007
        %v2009 = vrot.slane %v2001, %v2008
        %v2011 = vunpack.c.l.s4 1934713408
        %v2012 = vunpack.c.0.s8 %v2011
        %v2013 = vlaneseq
        %v2014 = vshrl.u32 %v2013, 7
        %v2015 = vsub.s32 %v2012, %v2014
        %v2016 = vrot.slane %v2002, %v2015
        %v2017 = vcombine.high %v2009, 0
        %v2018 = vcombine.high %v2016, 0
        %v2021 = vunpack.c.l.s4 1983009808
        %v2022 = vunpack.c.0.s8 %v2021
        %v2023 = vlaneseq
        %v2024 = vshrl.u32 %v2023, 7
        %v2025 = vsub.s32 %v2022, %v2024
        %v2026 = vrot.slane %v1987, %v2025
        %v2027 = vcombine.high %v2026, 0
        %v2029 = vunpack.c.l.s4 1934713408
        %v2030 = vunpack.c.0.s8 %v2029
        %v2031 = vlaneseq
        %v2032 = vshrl.u32 %v2031, 7
        %v2033 = vsub.s32 %v2030, %v2032
        %v2034 = vrot.slane %v2026, %v2033
        %v2036 = vunpack.c.l.s4 1934713408
        %v2037 = vunpack.c.0.s8 %v2036
        %v2038 = vlaneseq
        %v2039 = vshrl.u32 %v2038, 7
        %v2040 = vsub.s32 %v2037, %v2039
        %v2041 = vrot.slane %v2027, %v2040
        %v2042 = vcombine.high %v2034, 0
        %v2043 = vcombine.high %v2041, 0
        %v2046 = vunpack.c.l.s4 1983009808
        %v2047 = vunpack.c.0.s8 %v2046
        %v2048 = vlaneseq
        %v2049 = vshrl.u32 %v2048, 7
        %v2050 = vsub.s32 %v2047, %v2049
        %v2051 = vrot.slane %v1990, %v2050
        %v2052 = vcombine.high %v2051, 0
        %v2054 = vunpack.c.l.s4 1934713408
        %v2055 = vunpack.c.0.s8 %v2054
        %v2056 = vlaneseq
        %v2057 = vshrl.u32 %v2056, 7
        %v2058 = vsub.s32 %v2055, %v2057
        %v2059 = vrot.slane %v2051, %v2058
        %v2061 = vunpack.c.l.s4 1934713408
        %v2062 = vunpack.c.0.s8 %v2061
        %v2063 = vlaneseq
        %v2064 = vshrl.u32 %v2063, 7
        %v2065 = vsub.s32 %v2062, %v2064
        %v2066 = vrot.slane %v2052, %v2065
        %v2067 = vcombine.high %v2059, 0
        %v2068 = vcombine.high %v2066, 0
        %v2071 = vunpack.c.l.s4 1983009808
        %v2072 = vunpack.c.0.s8 %v2071
        %v2073 = vlaneseq
        %v2074 = vshrl.u32 %v2073, 7
        %v2075 = vsub.s32 %v2072, %v2074
        %v2076 = vrot.slane %v1993, %v2075
        %v2077 = vcombine.high %v2076, 0
        %v2079 = vunpack.c.l.s4 1934713408
        %v2080 = vunpack.c.0.s8 %v2079
        %v2081 = vlaneseq
        %v2082 = vshrl.u32 %v2081, 7
        %v2083 = vsub.s32 %v2080, %v2082
        %v2084 = vrot.slane %v2076, %v2083
        %v2086 = vunpack.c.l.s4 1934713408
        %v2087 = vunpack.c.0.s8 %v2086
        %v2088 = vlaneseq
        %v2089 = vshrl.u32 %v2088, 7
        %v2090 = vsub.s32 %v2087, %v2089
        %v2091 = vrot.slane %v2077, %v2090
        %v2092 = vcombine.high %v2084, 0
        %v2093 = vcombine.high %v2091, 0
        %v2094 = vcombine.low %v2009, %v2016
        %v2096 = vunpack.c.l.s4 1983009808
        %v2097 = vunpack.c.0.s8 %v2096
        %v2098 = vlaneseq
        %v2099 = vshrl.u32 %v2098, 7
        %v2100 = vsub.s32 %v2097, %v2099
        %v2101 = vrot.slane %v2094, %v2100
        %v2102 = vcombine.low %v2017, %v2018
        %v2104 = vunpack.c.l.s4 1983009808
        %v2105 = vunpack.c.0.s8 %v2104
        %v2106 = vlaneseq
        %v2107 = vshrl.u32 %v2106, 7
        %v2108 = vsub.s32 %v2105, %v2107
        %v2109 = vrot.slane %v2102, %v2108
        %v2110 = vcombine.low %v2101, %v2109
        %v2112 = vunpack.c.l.s4 1934713408
        %v2113 = vunpack.c.0.s8 %v2112
        %v2114 = vlaneseq
        %v2115 = vshrl.u32 %v2114, 7
        %v2116 = vsub.s32 %v2113, %v2115
        %v2117 = vrot.slane %v2110, %v2116
        %v2118 = vcombine.low %v2034, %v2041
        %v2120 = vunpack.c.l.s4 1983009808
        %v2121 = vunpack.c.0.s8 %v2120
        %v2122 = vlaneseq
        %v2123 = vshrl.u32 %v2122, 7
        %v2124 = vsub.s32 %v2121, %v2123
        %v2125 = vrot.slane %v2118, %v2124
        %v2126 = vcombine.low %v2042, %v2043
        %v2128 = vunpack.c.l.s4 1983009808
        %v2129 = vunpack.c.0.s8 %v2128
        %v2130 = vlaneseq
        %v2131 = vshrl.u32 %v2130, 7
        %v2132 = vsub.s32 %v2129, %v2131
        %v2133 = vrot.slane %v2126, %v2132
        %v2134 = vcombine.low %v2125, %v2133
        %v2136 = vunpack.c.l.s4 1934713408
        %v2137 = vunpack.c.0.s8 %v2136
        %v2138 = vlaneseq
        %v2139 = vshrl.u32 %v2138, 7
        %v2140 = vsub.s32 %v2137, %v2139
        %v2141 = vrot.slane %v2134, %v2140
        %v2142 = vcombine.low %v2059, %v2066
        %v2144 = vunpack.c.l.s4 1983009808
        %v2145 = vunpack.c.0.s8 %v2144
        %v2146 = vlaneseq
        %v2147 = vshrl.u32 %v2146, 7
        %v2148 = vsub.s32 %v2145, %v2147
        %v2149 = vrot.slane %v2142, %v2148
        %v2150 = vcombine.low %v2067, %v2068
        %v2152 = vunpack.c.l.s4 1983009808
        %v2153 = vunpack.c.0.s8 %v2152
        %v2154 = vlaneseq
        %v2155 = vshrl.u32 %v2154, 7
        %v2156 = vsub.s32 %v2153, %v2155
        %v2157 = vrot.slane %v2150, %v2156
        %v2158 = vcombine.low %v2149, %v2157
        %v2160 = vunpack.c.l.s4 1934713408
        %v2161 = vunpack.c.0.s8 %v2160
        %v2162 = vlaneseq
        %v2163 = vshrl.u32 %v2162, 7
        %v2164 = vsub.s32 %v2161, %v2163
        %v2165 = vrot.slane %v2158, %v2164
        %v2166 = vcombine.low %v2084, %v2091
        %v2168 = vunpack.c.l.s4 1983009808
        %v2169 = vunpack.c.0.s8 %v2168
        %v2170 = vlaneseq
        %v2171 = vshrl.u32 %v2170, 7
        %v2172 = vsub.s32 %v2169, %v2171
        %v2173 = vrot.slane %v2166, %v2172
        %v2174 = vcombine.low %v2092, %v2093
        %v2176 = vunpack.c.l.s4 1983009808
        %v2177 = vunpack.c.0.s8 %v2176
        %v2178 = vlaneseq
        %v2179 = vshrl.u32 %v2178, 7
        %v2180 = vsub.s32 %v2177, %v2179
        %v2181 = vrot.slane %v2174, %v2180
        %v2182 = vcombine.low %v2173, %v2181
        %v2184 = vunpack.c.l.s4 1934713408
        %v2185 = vunpack.c.0.s8 %v2184
        %v2186 = vlaneseq
        %v2187 = vshrl.u32 %v2186, 7
        %v2188 = vsub.s32 %v2185, %v2187
        %v2189 = vrot.slane %v2182, %v2188
        %v2192 = vpack.i.b16 %v2141, %v2117
        %v2193 = vshrl.u32 %v2117, 16
        %v2194 = vshrl.u32 %v2141, 16
        %v2195 = vpack.i.b16 %v2194, %v2193
        %v2198 = vpack.i.b16 %v2189, %v2165
        %v2199 = vshrl.u32 %v2165, 16
        %v2200 = vshrl.u32 %v2189, 16
        %v2201 = vpack.i.b16 %v2200, %v2199
        %v2202 = vunpack.c.l.b16 %v1966
        %v2203 = vunpack.c.l.b16 %v1972
        %v2204 = vpack.c.b16 %v2203, %v2202
        %2206 = vmatprep.subr.bf16.mxu0 0
        %2207 = vmatpush1.bf16.xpose.msra.mxu0 0
        %2208 = vmatprep.subr.bf16.mxu0 0
        %2209 = vmatpush1.bf16.xpose.msra.mxu0 0
        %2210 = vmatprep.subr.bf16.mxu0 0
        %2211 = vmatpush1.bf16.xpose.msra.mxu0 0
        %2212 = vmatprep.subr.bf16.mxu0 0
        %2213 = vmatpush1.bf16.xpose.msra.mxu0 0
        %2214 = vmatprep.subr.bf16.mxu0 0
        %2215 = vmatpush1.bf16.xpose.msra.mxu0 0
        %2216 = vmatprep.subr.bf16.mxu0 0
        %2217 = vmatpush1.bf16.xpose.msra.mxu0 0
        %2218 = vmatprep.subr.bf16.mxu0 0
        %2219 = vmatpush1.bf16.xpose.msra.mxu0 0
        %2220 = vmatprep.subr.bf16.mxu0 0
        %2221 = vmatpush1.bf16.xpose.msra.mxu0 %v2204
        %2222 = vmatprep.subr.bf16.mxu0 0
        %2223 = vmatpush2.bf16.xpose.msra.mxu0 0
        %2224 = vmatprep.subr.bf16.mxu0 0
        %2225 = vmatpush2.bf16.xpose.msra.mxu0 0
        %2226 = vmatprep.subr.bf16.mxu0 0
        %2227 = vmatpush2.bf16.xpose.msra.mxu0 0
        %2228 = vmatprep.subr.bf16.mxu0 0
        %2229 = vmatpush2.bf16.xpose.msra.mxu0 0
        %2230 = vmatprep.subr.bf16.mxu0 0
        %2231 = vmatpush2.bf16.xpose.msra.mxu0 0
        %2232 = vmatprep.subr.bf16.mxu0 0
        %2233 = vmatpush2.bf16.xpose.msra.mxu0 0
        %2234 = vmatprep.subr.bf16.mxu0 0
        %2235 = vmatpush2.bf16.xpose.msra.mxu0 0
        %2236 = vmatprep.subr.bf16.mxu0 0
        %2237 = vmatpush2.bf16.xpose.msra.mxu0 0
        %2238 = vmatprep.mubr.bf16.mxu0 0
        %2239 = vmatmul.mubr.bf16.gmra.mxu0 %v1744
        %v2240 = vpop.f32.mrf.mxu0
        %v2241 = vadd.f32 0.0, %v2240
        %v2242 = vpop.f32.mrf.mxu0
        %v2243 = vpop.f32.mrf.mxu0
        %v2244 = vpop.f32.mrf.mxu0
        %2245 = vdwg.mxu0
        %v2246 = vunpack.c.l.b16 %v1969
        %v2247 = vunpack.c.l.b16 %v1975
        %v2248 = vpack.c.b16 %v2247, %v2246
        %2250 = vmatprep.subr.bf16.mxu0 0
        %2251 = vmatpush1.bf16.xpose.msra.mxu0 0
        %2252 = vmatprep.subr.bf16.mxu0 0
        %2253 = vmatpush1.bf16.xpose.msra.mxu0 0
        %2254 = vmatprep.subr.bf16.mxu0 0
        %2255 = vmatpush1.bf16.xpose.msra.mxu0 0
        %2256 = vmatprep.subr.bf16.mxu0 0
        %2257 = vmatpush1.bf16.xpose.msra.mxu0 0
        %2258 = vmatprep.subr.bf16.mxu0 0
        %2259 = vmatpush1.bf16.xpose.msra.mxu0 0
        %2260 = vmatprep.subr.bf16.mxu0 0
        %2261 = vmatpush1.bf16.xpose.msra.mxu0 0
        %2262 = vmatprep.subr.bf16.mxu0 0
        %2263 = vmatpush1.bf16.xpose.msra.mxu0 0
        %2264 = vmatprep.subr.bf16.mxu0 0
        %2265 = vmatpush1.bf16.xpose.msra.mxu0 %v2248
        %2266 = vmatprep.subr.bf16.mxu0 0
        %2267 = vmatpush2.bf16.xpose.msra.mxu0 0
        %2268 = vmatprep.subr.bf16.mxu0 0
        %2269 = vmatpush2.bf16.xpose.msra.mxu0 0
        %2270 = vmatprep.subr.bf16.mxu0 0
        %2271 = vmatpush2.bf16.xpose.msra.mxu0 0
        %2272 = vmatprep.subr.bf16.mxu0 0
        %2273 = vmatpush2.bf16.xpose.msra.mxu0 0
        %2274 = vmatprep.subr.bf16.mxu0 0
        %2275 = vmatpush2.bf16.xpose.msra.mxu0 0
        %2276 = vmatprep.subr.bf16.mxu0 0
        %2277 = vmatpush2.bf16.xpose.msra.mxu0 0
        %2278 = vmatprep.subr.bf16.mxu0 0
        %2279 = vmatpush2.bf16.xpose.msra.mxu0 0
        %2280 = vmatprep.subr.bf16.mxu0 0
        %2281 = vmatpush2.bf16.xpose.msra.mxu0 0
        %2282 = vmatprep.mubr.bf16.mxu0 0
        %2283 = vmatmul.mubr.bf16.gmra.mxu0 %v1748
        %v2284 = vpop.f32.mrf.mxu0
        %v2285 = vadd.f32 0.0, %v2284
        %v2286 = vpop.f32.mrf.mxu0
        %v2287 = vpop.f32.mrf.mxu0
        %v2288 = vpop.f32.mrf.mxu0
        %2289 = vdwg.mxu0
        %v2290 = vmul.f32 %v2241, 0.088388346
        %v2291 = vmul.f32 %v2285, 0.088388346
        %v2292 = vlaneseq
        %v2293 = vshrl.u32 %v2292, 7
        %v2294 = vstv %s694
        %v2295 = vadd.s32 %v2294, %v2293
        %v2296 = vlaneseq
        %v2297 = vand.u32 %v2296, 127
        %vm2298 = vcmp.le.s32.totalorder %v2297, %v2295
        %v2299 = vsel %vm2298, 1, 0
        %vm2300 = vcmp.eq.s32.totalorder %v2299, 1
        %v2301 = vsel %vm2300, %v2290, -1e+30
        %v2302 = vsel %vm2300, %v2291, -1e+30
        %vm2303 = vcmask 130048
        %v2304 = vsel %vm2303, %v2301, -inf
        %2305 = vmax.xlane.f32.xlu0 %v2304
        %v2306 = vpop.xlane.xlu0 %2305
        %v2307 = vsel %vm2303, %v2302, -inf
        %2308 = vmax.xlane.f32.xlu0 %v2307
        %v2309 = vpop.xlane.xlu0 %2308
        %v2310 = vsub.f32 %v2301, %v2306
        %v2311 = vsub.f32 %v2302, %v2309
        %v2312 = vmul.f32 %v2310, 1.442695
        %v2313 = vpow.pop %v2312
        %v2314 = vmul.f32 %v2311, 1.442695
        %v2315 = vpow.pop %v2314
        %v2316 = vsel %vm2303, %v2313, 0.0
        %2317 = vadd.xlane.f32.xlu0 %v2316
        %v2318 = vpop.xlane.xlu0 %2317
        %v2319 = vsel %vm2303, %v2315, 0.0
        %2320 = vadd.xlane.f32.xlu0 %v2319
        %v2321 = vpop.xlane.xlu0 %2320
        %v2322 = vrcp.pop %v2318
        %v2323 = vrcp.pop %v2321
        %v2324 = vmul.f32 %v2313, %v2322
        %v2325 = vmul.f32 %v2315, %v2323
        %v2326 = vpack.c.bf16 %v2324, %v2324
        %v2327 = vpack.c.bf16 %v2325, %v2325
        %v2328 = vunpack.c.l.b16 %v2192
        %v2329 = vunpack.c.l.b16 %v2198
        %v2330 = vpack.c.b16 %v2329, %v2328
        %v2333 = vsel %vm2303, %v2326, 0
        %2335 = vmatprep.subr.bf16.mxu0 0
        %2336 = vmatpush1.bf16.msra.mxu0 0
        %2337 = vmatprep.subr.bf16.mxu0 0
        %2338 = vmatpush1.bf16.msra.mxu0 0
        %2339 = vmatprep.subr.bf16.mxu0 0
        %2340 = vmatpush1.bf16.msra.mxu0 0
        %2341 = vmatprep.subr.bf16.mxu0 0
        %2342 = vmatpush1.bf16.msra.mxu0 0
        %2343 = vmatprep.subr.bf16.mxu0 0
        %2344 = vmatpush1.bf16.msra.mxu0 0
        %2345 = vmatprep.subr.bf16.mxu0 0
        %2346 = vmatpush1.bf16.msra.mxu0 0
        %2347 = vmatprep.subr.bf16.mxu0 0
        %2348 = vmatpush1.bf16.msra.mxu0 0
        %2349 = vmatprep.subr.bf16.mxu0 0
        %2350 = vmatpush1.bf16.msra.mxu0 %v2330
        %2351 = vmatprep.subr.bf16.mxu0 0
        %2352 = vmatpush2.bf16.msra.mxu0 0
        %2353 = vmatprep.subr.bf16.mxu0 0
        %2354 = vmatpush2.bf16.msra.mxu0 0
        %2355 = vmatprep.subr.bf16.mxu0 0
        %2356 = vmatpush2.bf16.msra.mxu0 0
        %2357 = vmatprep.subr.bf16.mxu0 0
        %2358 = vmatpush2.bf16.msra.mxu0 0
        %2359 = vmatprep.subr.bf16.mxu0 0
        %2360 = vmatpush2.bf16.msra.mxu0 0
        %2361 = vmatprep.subr.bf16.mxu0 0
        %2362 = vmatpush2.bf16.msra.mxu0 0
        %2363 = vmatprep.subr.bf16.mxu0 0
        %2364 = vmatpush2.bf16.msra.mxu0 0
        %2365 = vmatprep.subr.bf16.mxu0 0
        %2366 = vmatpush2.bf16.msra.mxu0 0
        %2367 = vmatprep.mubr.bf16.mxu0 0
        %2368 = vmatmul.mubr.bf16.gmra.mxu0 %v2333
        %v2369 = vpop.f32.mrf.mxu0
        %v2370 = vadd.f32 0.0, %v2369
        %v2371 = vpop.f32.mrf.mxu0
        %v2372 = vpop.f32.mrf.mxu0
        %v2373 = vpop.f32.mrf.mxu0
        %2374 = vdwg.mxu0
        %v2375 = vunpack.c.l.b16 %v2195
        %v2376 = vunpack.c.l.b16 %v2201
        %v2377 = vpack.c.b16 %v2376, %v2375
        %v2380 = vsel %vm2303, %v2327, 0
        %2382 = vmatprep.subr.bf16.mxu0 0
        %2383 = vmatpush1.bf16.msra.mxu0 0
        %2384 = vmatprep.subr.bf16.mxu0 0
        %2385 = vmatpush1.bf16.msra.mxu0 0
        %2386 = vmatprep.subr.bf16.mxu0 0
        %2387 = vmatpush1.bf16.msra.mxu0 0
        %2388 = vmatprep.subr.bf16.mxu0 0
        %2389 = vmatpush1.bf16.msra.mxu0 0
        %2390 = vmatprep.subr.bf16.mxu0 0
        %2391 = vmatpush1.bf16.msra.mxu0 0
        %2392 = vmatprep.subr.bf16.mxu0 0
        %2393 = vmatpush1.bf16.msra.mxu0 0
        %2394 = vmatprep.subr.bf16.mxu0 0
        %2395 = vmatpush1.bf16.msra.mxu0 0
        %2396 = vmatprep.subr.bf16.mxu0 0
        %2397 = vmatpush1.bf16.msra.mxu0 %v2377
        %2398 = vmatprep.subr.bf16.mxu0 0
        %2399 = vmatpush2.bf16.msra.mxu0 0
        %2400 = vmatprep.subr.bf16.mxu0 0
        %2401 = vmatpush2.bf16.msra.mxu0 0
        %2402 = vmatprep.subr.bf16.mxu0 0
        %2403 = vmatpush2.bf16.msra.mxu0 0
        %2404 = vmatprep.subr.bf16.mxu0 0
        %2405 = vmatpush2.bf16.msra.mxu0 0
        %2406 = vmatprep.subr.bf16.mxu0 0
        %2407 = vmatpush2.bf16.msra.mxu0 0
        %2408 = vmatprep.subr.bf16.mxu0 0
        %2409 = vmatpush2.bf16.msra.mxu0 0
        %2410 = vmatprep.subr.bf16.mxu0 0
        %2411 = vmatpush2.bf16.msra.mxu0 0
        %2412 = vmatprep.subr.bf16.mxu0 0
        %2413 = vmatpush2.bf16.msra.mxu0 0
        %2414 = vmatprep.mubr.bf16.mxu0 0
        %2415 = vmatmul.mubr.bf16.gmra.mxu0 %v2380
        %v2416 = vpop.f32.mrf.mxu0
        %v2417 = vadd.f32 0.0, %v2416
        %v2418 = vpop.f32.mrf.mxu0
        %v2419 = vpop.f32.mrf.mxu0
        %v2420 = vpop.f32.mrf.mxu0
        %2421 = vdwg.mxu0
        %v2422 = vcombine.high %v2370, 0.0
        %v2424 = vunpack.c.l.s4 1983009808
        %v2425 = vunpack.c.0.s8 %v2424
        %v2426 = vlaneseq
        %v2427 = vshrl.u32 %v2426, 7
        %v2428 = vsub.s32 %v2425, %v2427
        %v2429 = vrot.slane %v2370, %v2428
        %v2431 = vunpack.c.l.s4 1983009808
        %v2432 = vunpack.c.0.s8 %v2431
        %v2433 = vlaneseq
        %v2434 = vshrl.u32 %v2433, 7
        %v2435 = vsub.s32 %v2432, %v2434
        %v2436 = vrot.slane %v2422, %v2435
        %v2437 = vcombine.high %v2417, 0.0
        %v2439 = vunpack.c.l.s4 1983009808
        %v2440 = vunpack.c.0.s8 %v2439
        %v2441 = vlaneseq
        %v2442 = vshrl.u32 %v2441, 7
        %v2443 = vsub.s32 %v2440, %v2442
        %v2444 = vrot.slane %v2417, %v2443
        %v2446 = vunpack.c.l.s4 1983009808
        %v2447 = vunpack.c.0.s8 %v2446
        %v2448 = vlaneseq
        %v2449 = vshrl.u32 %v2448, 7
        %v2450 = vsub.s32 %v2447, %v2449
        %v2451 = vrot.slane %v2437, %v2450
        %v2452 = vcombine.low %v2429, %v2444
        %v2453 = vcombine.high %v2429, %v2444
        %v2455 = vunpack.c.l.s4 1934713408
        %v2456 = vunpack.c.0.s8 %v2455
        %v2457 = vlaneseq
        %v2458 = vshrl.u32 %v2457, 7
        %v2459 = vsub.s32 %v2456, %v2458
        %v2460 = vrot.slane %v2452, %v2459
        %v2462 = vunpack.c.l.s4 1934713408
        %v2463 = vunpack.c.0.s8 %v2462
        %v2464 = vlaneseq
        %v2465 = vshrl.u32 %v2464, 7
        %v2466 = vsub.s32 %v2463, %v2465
        %v2467 = vrot.slane %v2453, %v2466
        %v2468 = vcombine.low %v2436, %v2451
        %v2469 = vcombine.high %v2436, %v2451
        %v2471 = vunpack.c.l.s4 1934713408
        %v2472 = vunpack.c.0.s8 %v2471
        %v2473 = vlaneseq
        %v2474 = vshrl.u32 %v2473, 7
        %v2475 = vsub.s32 %v2472, %v2474
        %v2476 = vrot.slane %v2468, %v2475
        %v2478 = vunpack.c.l.s4 1934713408
        %v2479 = vunpack.c.0.s8 %v2478
        %v2480 = vlaneseq
        %v2481 = vshrl.u32 %v2480, 7
        %v2482 = vsub.s32 %v2479, %v2481
        %v2483 = vrot.slane %v2469, %v2482
        %v2484 = vcombine.high %v2460, 0.0
        %v2485 = vcombine.high %v2467, 0.0
        %v2486 = vcombine.high %v2476, 0.0
        %v2487 = vcombine.high %v2483, 0.0
        %v2488 = vcombine.low %v2460, %v2467
        %v2490 = vunpack.c.l.s4 1983009808
        %v2491 = vunpack.c.0.s8 %v2490
        %v2492 = vlaneseq
        %v2493 = vshrl.u32 %v2492, 7
        %v2494 = vsub.s32 %v2491, %v2493
        %v2495 = vrot.slane %v2488, %v2494
        %v2496 = vcombine.low %v2484, %v2485
        %v2498 = vunpack.c.l.s4 1983009808
        %v2499 = vunpack.c.0.s8 %v2498
        %v2500 = vlaneseq
        %v2501 = vshrl.u32 %v2500, 7
        %v2502 = vsub.s32 %v2499, %v2501
        %v2503 = vrot.slane %v2496, %v2502
        %v2504 = vcombine.low %v2476, %v2483
        %v2506 = vunpack.c.l.s4 1983009808
        %v2507 = vunpack.c.0.s8 %v2506
        %v2508 = vlaneseq
        %v2509 = vshrl.u32 %v2508, 7
        %v2510 = vsub.s32 %v2507, %v2509
        %v2511 = vrot.slane %v2504, %v2510
        %v2512 = vcombine.low %v2486, %v2487
        %v2514 = vunpack.c.l.s4 1983009808
        %v2515 = vunpack.c.0.s8 %v2514
        %v2516 = vlaneseq
        %v2517 = vshrl.u32 %v2516, 7
        %v2518 = vsub.s32 %v2515, %v2517
        %v2519 = vrot.slane %v2512, %v2518
        %v2520 = vcombine.low %v2495, %v2503
        %v2522 = vunpack.c.l.s4 1934713408
        %v2523 = vunpack.c.0.s8 %v2522
        %v2524 = vlaneseq
        %v2525 = vshrl.u32 %v2524, 7
        %v2526 = vsub.s32 %v2523, %v2525
        %v2527 = vrot.slane %v2520, %v2526
        %v2528 = vcombine.low %v2511, %v2519
        %v2530 = vunpack.c.l.s4 1934713408
        %v2531 = vunpack.c.0.s8 %v2530
        %v2532 = vlaneseq
        %v2533 = vshrl.u32 %v2532, 7
        %v2534 = vsub.s32 %v2531, %v2533
        %v2535 = vrot.slane %v2528, %v2534
        %v2536 = vcombine.low %v2527, %v2535
        %v2537 = vcombine.high %v2527, %v2535
        %v2538 = vpack.c.bf16 %v2536, %v2536
        %v2539 = vpack.c.bf16 %v2537, %v2537
        %v2540 = vld [vmem:[#allocation13] sm:$0xff]
        %v2541 = vld [vmem:[#allocation13 + $0x8] sm:$0xff]
        %v2542 = vld [vmem:[#allocation13 + $0x10] sm:$0xff]
        %v2543 = vld [vmem:[#allocation13 + $0x18] sm:$0xff]
        %v2544 = vld [vmem:[#allocation13 + $0x20] sm:$0xff]
        %v2545 = vld [vmem:[#allocation13 + $0x28] sm:$0xff]
        %v2546 = vld [vmem:[#allocation13 + $0x30] sm:$0xff]
        %v2547 = vld [vmem:[#allocation13 + $0x38] sm:$0xff]
        %v2548 = vld [vmem:[#allocation13 + $0x40] sm:$0xff]
        %v2549 = vld [vmem:[#allocation13 + $0x48] sm:$0xff]
        %v2550 = vld [vmem:[#allocation13 + $0x50] sm:$0xff]
        %v2551 = vld [vmem:[#allocation13 + $0x58] sm:$0xff]
        %v2552 = vld [vmem:[#allocation13 + $0x60] sm:$0xff]
        %v2553 = vld [vmem:[#allocation13 + $0x68] sm:$0xff]
        %v2554 = vld [vmem:[#allocation13 + $0x70] sm:$0xff]
        %v2555 = vld [vmem:[#allocation13 + $0x78] sm:$0xff]
        %v2556 = vld [vmem:[#allocation13 + $0x80] sm:$0xff]
        %v2557 = vld [vmem:[#allocation13 + $0x88] sm:$0xff]
        %v2558 = vld [vmem:[#allocation13 + $0x90] sm:$0xff]
        %v2559 = vld [vmem:[#allocation13 + $0x98] sm:$0xff]
        %v2560 = vld [vmem:[#allocation13 + $0xa0] sm:$0xff]
        %v2561 = vld [vmem:[#allocation13 + $0xa8] sm:$0xff]
        %v2562 = vld [vmem:[#allocation13 + $0xb0] sm:$0xff]
        %v2563 = vld [vmem:[#allocation13 + $0xb8] sm:$0xff]
        %v2564 = vld [vmem:[#allocation13 + $0xc0] sm:$0xff]
        %v2565 = vld [vmem:[#allocation13 + $0xc8] sm:$0xff]
        %v2566 = vld [vmem:[#allocation13 + $0xd0] sm:$0xff]
        %v2567 = vld [vmem:[#allocation13 + $0xd8] sm:$0xff]
        %v2568 = vld [vmem:[#allocation13 + $0xe0] sm:$0xff]
        %v2569 = vld [vmem:[#allocation13 + $0xe8] sm:$0xff]
        %v2570 = vld [vmem:[#allocation13 + $0xf0] sm:$0xff]
        %v2571 = vld [vmem:[#allocation13 + $0xf8] sm:$0xff]
        %v2572 = vld [vmem:[%s10] sm:$0x3]
        %v2574 = vlaneseq
        %v2575 = vshrl.u32 %v2574, 7
        %v2576 = vsub.s32 0, %v2575
        %v2577 = vrot.slane %v2572, %v2576
        %v2578 = vlaneseq
        %v2579 = vshrl.u32 %v2578, 7
        %v2580 = vsub.s32 1, %v2579
        %v2581 = vrot.slane %v2572, %v2580
        %v2616 = vunpack.c.l.b16 %v2540
        %v2617 = vunpack.c.h.b16 %v2540
        %v2618 = vunpack.c.l.b16 %v2541
        %v2619 = vunpack.c.h.b16 %v2541
        %v2620 = vunpack.c.l.b16 %v2542
        %v2621 = vunpack.c.h.b16 %v2542
        %v2622 = vunpack.c.l.b16 %v2543
        %v2623 = vunpack.c.h.b16 %v2543
        %v2624 = vunpack.c.l.b16 %v2544
        %v2625 = vunpack.c.h.b16 %v2544
        %v2626 = vunpack.c.l.b16 %v2545
        %v2627 = vunpack.c.h.b16 %v2545
        %v2628 = vunpack.c.l.b16 %v2546
        %v2629 = vunpack.c.h.b16 %v2546
        %v2630 = vunpack.c.l.b16 %v2547
        %v2631 = vunpack.c.h.b16 %v2547
        %v2632 = vunpack.c.l.b16 %v2548
        %v2633 = vunpack.c.h.b16 %v2548
        %v2634 = vunpack.c.l.b16 %v2549
        %v2635 = vunpack.c.h.b16 %v2549
        %v2636 = vunpack.c.l.b16 %v2550
        %v2637 = vunpack.c.h.b16 %v2550
        %v2638 = vunpack.c.l.b16 %v2551
        %v2639 = vunpack.c.h.b16 %v2551
        %v2640 = vunpack.c.l.b16 %v2552
        %v2641 = vunpack.c.h.b16 %v2552
        %v2642 = vunpack.c.l.b16 %v2553
        %v2643 = vunpack.c.h.b16 %v2553
        %v2644 = vunpack.c.l.b16 %v2554
        %v2645 = vunpack.c.h.b16 %v2554
        %v2646 = vunpack.c.l.b16 %v2555
        %v2647 = vunpack.c.h.b16 %v2555
        %v2648 = vunpack.c.l.b16 %v2556
        %v2649 = vunpack.c.h.b16 %v2556
        %v2650 = vunpack.c.l.b16 %v2557
        %v2651 = vunpack.c.h.b16 %v2557
        %v2652 = vunpack.c.l.b16 %v2558
        %v2653 = vunpack.c.h.b16 %v2558
        %v2654 = vunpack.c.l.b16 %v2559
        %v2655 = vunpack.c.h.b16 %v2559
        %v2656 = vunpack.c.l.b16 %v2560
        %v2657 = vunpack.c.h.b16 %v2560
        %v2658 = vunpack.c.l.b16 %v2561
        %v2659 = vunpack.c.h.b16 %v2561
        %v2660 = vunpack.c.l.b16 %v2562
        %v2661 = vunpack.c.h.b16 %v2562
        %v2662 = vunpack.c.l.b16 %v2563
        %v2663 = vunpack.c.h.b16 %v2563
        %v2664 = vunpack.c.l.b16 %v2564
        %v2665 = vunpack.c.h.b16 %v2564
        %v2666 = vunpack.c.l.b16 %v2565
        %v2667 = vunpack.c.h.b16 %v2565
        %v2668 = vunpack.c.l.b16 %v2566
        %v2669 = vunpack.c.h.b16 %v2566
        %v2670 = vunpack.c.l.b16 %v2567
        %v2671 = vunpack.c.h.b16 %v2567
        %v2672 = vunpack.c.l.b16 %v2568
        %v2673 = vunpack.c.h.b16 %v2568
        %v2674 = vunpack.c.l.b16 %v2569
        %v2675 = vunpack.c.h.b16 %v2569
        %v2676 = vunpack.c.l.b16 %v2570
        %v2677 = vunpack.c.h.b16 %v2570
        %v2678 = vunpack.c.l.b16 %v2571
        %v2679 = vunpack.c.h.b16 %v2571
        %v2680 = vpack.c.b16 %v2618, %v2616
        %v2681 = vpack.c.b16 %v2619, %v2617
        %v2682 = vpack.c.b16 %v2622, %v2620
        %v2683 = vpack.c.b16 %v2623, %v2621
        %v2684 = vpack.c.b16 %v2626, %v2624
        %v2685 = vpack.c.b16 %v2627, %v2625
        %v2686 = vpack.c.b16 %v2630, %v2628
        %v2687 = vpack.c.b16 %v2631, %v2629
        %v2688 = vpack.c.b16 %v2634, %v2632
        %v2689 = vpack.c.b16 %v2635, %v2633
        %v2690 = vpack.c.b16 %v2638, %v2636
        %v2691 = vpack.c.b16 %v2639, %v2637
        %v2692 = vpack.c.b16 %v2642, %v2640
        %v2693 = vpack.c.b16 %v2643, %v2641
        %v2694 = vpack.c.b16 %v2646, %v2644
        %v2695 = vpack.c.b16 %v2647, %v2645
        %v2696 = vpack.c.b16 %v2650, %v2648
        %v2697 = vpack.c.b16 %v2651, %v2649
        %v2698 = vpack.c.b16 %v2654, %v2652
        %v2699 = vpack.c.b16 %v2655, %v2653
        %v2700 = vpack.c.b16 %v2658, %v2656
        %v2701 = vpack.c.b16 %v2659, %v2657
        %v2702 = vpack.c.b16 %v2662, %v2660
        %v2703 = vpack.c.b16 %v2663, %v2661
        %v2704 = vpack.c.b16 %v2666, %v2664
        %v2705 = vpack.c.b16 %v2667, %v2665
        %v2706 = vpack.c.b16 %v2670, %v2668
        %v2707 = vpack.c.b16 %v2671, %v2669
        %v2708 = vpack.c.b16 %v2674, %v2672
        %v2709 = vpack.c.b16 %v2675, %v2673
        %v2710 = vpack.c.b16 %v2678, %v2676
        %v2711 = vpack.c.b16 %v2679, %v2677
        %2744 = vmatprep.subr.bf16.mxu0 %v2695
        %2745 = vmatpush1.bf16.msra.mxu0 %v2694
        %2746 = vmatprep.subr.bf16.mxu0 %v2693
        %2747 = vmatpush1.bf16.msra.mxu0 %v2692
        %2748 = vmatprep.subr.bf16.mxu0 %v2691
        %2749 = vmatpush1.bf16.msra.mxu0 %v2690
        %2750 = vmatprep.subr.bf16.mxu0 %v2689
        %2751 = vmatpush1.bf16.msra.mxu0 %v2688
        %2752 = vmatprep.subr.bf16.mxu0 %v2687
        %2753 = vmatpush1.bf16.msra.mxu0 %v2686
        %2754 = vmatprep.subr.bf16.mxu0 %v2685
        %2755 = vmatpush1.bf16.msra.mxu0 %v2684
        %2756 = vmatprep.subr.bf16.mxu0 %v2683
        %2757 = vmatpush1.bf16.msra.mxu0 %v2682
        %2758 = vmatprep.subr.bf16.mxu0 %v2681
        %2759 = vmatpush1.bf16.msra.mxu0 %v2680
        %2760 = vmatprep.subr.bf16.mxu0 %v2711
        %2761 = vmatpush2.bf16.msra.mxu0 %v2710
        %2762 = vmatprep.subr.bf16.mxu0 %v2709
        %2763 = vmatpush2.bf16.msra.mxu0 %v2708
        %2764 = vmatprep.subr.bf16.mxu0 %v2707
        %2765 = vmatpush2.bf16.msra.mxu0 %v2706
        %2766 = vmatprep.subr.bf16.mxu0 %v2705
        %2767 = vmatpush2.bf16.msra.mxu0 %v2704
        %2768 = vmatprep.subr.bf16.mxu0 %v2703
        %2769 = vmatpush2.bf16.msra.mxu0 %v2702
        %2770 = vmatprep.subr.bf16.mxu0 %v2701
        %2771 = vmatpush2.bf16.msra.mxu0 %v2700
        %2772 = vmatprep.subr.bf16.mxu0 %v2699
        %2773 = vmatpush2.bf16.msra.mxu0 %v2698
        %2774 = vmatprep.subr.bf16.mxu0 %v2697
        %2775 = vmatpush2.bf16.msra.mxu0 %v2696
        %2776 = vmatprep.mubr.bf16.mxu0 %v2539
        %2777 = vmatmul.mubr.bf16.gmra.mxu0 %v2538
        %v2778 = vpop.f32.mrf.mxu0
        %v2779 = vadd.f32 %v2577, %v2778
        %v2780 = vpop.f32.mrf.mxu0
        %v2781 = vadd.f32 %v2581, %v2780
        %v2782 = vpop.f32.mrf.mxu0
        %v2783 = vpop.f32.mrf.mxu0
        %2784 = vdwg.mxu0
        %v2785 = vadd.f32 %v1311, %v2779
        %v2786 = vadd.f32 %v1312, %v2781
        %v2787 = vld [vmem:[%s11] sm:$0x3]
        %v2788 = vld [vmem:[#allocation15] sm:$0x3]
        %v2789 = vadd.f32 %v2785, %v2786
        %2790 = vadd.xlane.f32.xlu0 %v2789
        %v2791 = vpop.xlane.xlu0 %2790
        %v2792 = vmul.f32 %v2791, %v1318
        %v2793 = vsub.f32 %v2785, %v2792
        %v2794 = vsub.f32 %v2786, %v2792
        %v2795 = vmul.f32 %v2793, %v2793
        %v2796 = vmul.f32 %v2794, %v2794
        %v2797 = vadd.f32 %v2795, %v2796
        %2798 = vadd.xlane.f32.xlu0 %v2797
        %v2799 = vpop.xlane.xlu0 %2798
        %v2800 = vmul.f32 %v2799, %v1318
        %v2801 = vadd.f32 %v2800, 1e-05
        %v2802 = vrsqrt.pop %v2801
        %v2803 = vmul.f32 %v2801, %v2802
        %vm2804 = vcmp.eq.f32.partialorder %v2801, inf
        %v2805 = vsel %vm2804, %v2801, %v2803
        %vm2806 = vcmp.eq.f32.partialorder %v2801, 0.0
        %v2807 = vand.u32 %v2801, 2147483648
        %v2808 = vsel %vm2806, %v2807, %v2805
        %v2809 = vrcp.pop %v2808
        %v2810 = vmul.f32 %v2793, %v2809
        %v2811 = vmul.f32 %v2794, %v2809
        %v2813 = vlaneseq
        %v2814 = vshrl.u32 %v2813, 7
        %v2815 = vsub.s32 0, %v2814
        %v2816 = vrot.slane %v2787, %v2815
        %v2817 = vlaneseq
        %v2818 = vshrl.u32 %v2817, 7
        %v2819 = vsub.s32 1, %v2818
        %v2820 = vrot.slane %v2787, %v2819
        %v2823 = vmul.f32 %v2810, %v2816
        %v2824 = vmul.f32 %v2811, %v2820
        %v2826 = vlaneseq
        %v2827 = vshrl.u32 %v2826, 7
        %v2828 = vsub.s32 0, %v2827
        %v2829 = vrot.slane %v2788, %v2828
        %v2830 = vlaneseq
        %v2831 = vshrl.u32 %v2830, 7
        %v2832 = vsub.s32 1, %v2831
        %v2833 = vrot.slane %v2788, %v2832
        %v2836 = vadd.f32 %v2823, %v2829
        %v2837 = vadd.f32 %v2824, %v2833
        %v2838 = vpack.c.bf16 %v2836, %v2836
        %v2839 = vpack.c.bf16 %v2837, %v2837
        %v2840 = vld [vmem:[#allocation16] sm:$0xff]
        %v2841 = vld [vmem:[#allocation16 + $0x8] sm:$0xff]
        %v2842 = vld [vmem:[#allocation16 + $0x10] sm:$0xff]
        %v2843 = vld [vmem:[#allocation16 + $0x18] sm:$0xff]
        %v2844 = vld [vmem:[#allocation16 + $0x20] sm:$0xff]
        %v2845 = vld [vmem:[#allocation16 + $0x28] sm:$0xff]
        %v2846 = vld [vmem:[#allocation16 + $0x30] sm:$0xff]
        %v2847 = vld [vmem:[#allocation16 + $0x38] sm:$0xff]
        %v2848 = vld [vmem:[#allocation16 + $0x40] sm:$0xff]
        %v2849 = vld [vmem:[#allocation16 + $0x48] sm:$0xff]
        %v2850 = vld [vmem:[#allocation16 + $0x50] sm:$0xff]
        %v2851 = vld [vmem:[#allocation16 + $0x58] sm:$0xff]
        %v2852 = vld [vmem:[#allocation16 + $0x60] sm:$0xff]
        %v2853 = vld [vmem:[#allocation16 + $0x68] sm:$0xff]
        %v2854 = vld [vmem:[#allocation16 + $0x70] sm:$0xff]
        %v2855 = vld [vmem:[#allocation16 + $0x78] sm:$0xff]
        %v2856 = vld [vmem:[#allocation16 + $0x80] sm:$0xff]
        %v2857 = vld [vmem:[#allocation16 + $0x88] sm:$0xff]
        %v2858 = vld [vmem:[#allocation16 + $0x90] sm:$0xff]
        %v2859 = vld [vmem:[#allocation16 + $0x98] sm:$0xff]
        %v2860 = vld [vmem:[#allocation16 + $0xa0] sm:$0xff]
        %v2861 = vld [vmem:[#allocation16 + $0xa8] sm:$0xff]
        %v2862 = vld [vmem:[#allocation16 + $0xb0] sm:$0xff]
        %v2863 = vld [vmem:[#allocation16 + $0xb8] sm:$0xff]
        %v2864 = vld [vmem:[#allocation16 + $0xc0] sm:$0xff]
        %v2865 = vld [vmem:[#allocation16 + $0xc8] sm:$0xff]
        %v2866 = vld [vmem:[#allocation16 + $0xd0] sm:$0xff]
        %v2867 = vld [vmem:[#allocation16 + $0xd8] sm:$0xff]
        %v2868 = vld [vmem:[#allocation16 + $0xe0] sm:$0xff]
        %v2869 = vld [vmem:[#allocation16 + $0xe8] sm:$0xff]
        %v2870 = vld [vmem:[#allocation16 + $0xf0] sm:$0xff]
        %v2871 = vld [vmem:[#allocation16 + $0xf8] sm:$0xff]
        %v2872 = vld [vmem:[#allocation16 + $0x100] sm:$0xff]
        %v2873 = vld [vmem:[#allocation16 + $0x108] sm:$0xff]
        %v2874 = vld [vmem:[#allocation16 + $0x110] sm:$0xff]
        %v2875 = vld [vmem:[#allocation16 + $0x118] sm:$0xff]
        %v2876 = vld [vmem:[#allocation16 + $0x120] sm:$0xff]
        %v2877 = vld [vmem:[#allocation16 + $0x128] sm:$0xff]
        %v2878 = vld [vmem:[#allocation16 + $0x130] sm:$0xff]
        %v2879 = vld [vmem:[#allocation16 + $0x138] sm:$0xff]
        %v2880 = vld [vmem:[#allocation16 + $0x140] sm:$0xff]
        %v2881 = vld [vmem:[#allocation16 + $0x148] sm:$0xff]
        %v2882 = vld [vmem:[#allocation16 + $0x150] sm:$0xff]
        %v2883 = vld [vmem:[#allocation16 + $0x158] sm:$0xff]
        %v2884 = vld [vmem:[#allocation16 + $0x160] sm:$0xff]
        %v2885 = vld [vmem:[#allocation16 + $0x168] sm:$0xff]
        %v2886 = vld [vmem:[#allocation16 + $0x170] sm:$0xff]
        %v2887 = vld [vmem:[#allocation16 + $0x178] sm:$0xff]
        %v2888 = vld [vmem:[#allocation16 + $0x180] sm:$0xff]
        %v2889 = vld [vmem:[#allocation16 + $0x188] sm:$0xff]
        %v2890 = vld [vmem:[#allocation16 + $0x190] sm:$0xff]
        %v2891 = vld [vmem:[#allocation16 + $0x198] sm:$0xff]
        %v2892 = vld [vmem:[#allocation16 + $0x1a0] sm:$0xff]
        %v2893 = vld [vmem:[#allocation16 + $0x1a8] sm:$0xff]
        %v2894 = vld [vmem:[#allocation16 + $0x1b0] sm:$0xff]
        %v2895 = vld [vmem:[#allocation16 + $0x1b8] sm:$0xff]
        %v2896 = vld [vmem:[#allocation16 + $0x1c0] sm:$0xff]
        %v2897 = vld [vmem:[#allocation16 + $0x1c8] sm:$0xff]
        %v2898 = vld [vmem:[#allocation16 + $0x1d0] sm:$0xff]
        %v2899 = vld [vmem:[#allocation16 + $0x1d8] sm:$0xff]
        %v2900 = vld [vmem:[#allocation16 + $0x1e0] sm:$0xff]
        %v2901 = vld [vmem:[#allocation16 + $0x1e8] sm:$0xff]
        %v2902 = vld [vmem:[#allocation16 + $0x1f0] sm:$0xff]
        %v2903 = vld [vmem:[#allocation16 + $0x1f8] sm:$0xff]
        %v2904 = vld [vmem:[#allocation16 + $0x200] sm:$0xff]
        %v2905 = vld [vmem:[#allocation16 + $0x208] sm:$0xff]
        %v2906 = vld [vmem:[#allocation16 + $0x210] sm:$0xff]
        %v2907 = vld [vmem:[#allocation16 + $0x218] sm:$0xff]
        %v2908 = vld [vmem:[#allocation16 + $0x220] sm:$0xff]
        %v2909 = vld [vmem:[#allocation16 + $0x228] sm:$0xff]
        %v2910 = vld [vmem:[#allocation16 + $0x230] sm:$0xff]
        %v2911 = vld [vmem:[#allocation16 + $0x238] sm:$0xff]
        %v2912 = vld [vmem:[#allocation16 + $0x240] sm:$0xff]
        %v2913 = vld [vmem:[#allocation16 + $0x248] sm:$0xff]
        %v2914 = vld [vmem:[#allocation16 + $0x250] sm:$0xff]
        %v2915 = vld [vmem:[#allocation16 + $0x258] sm:$0xff]
        %v2916 = vld [vmem:[#allocation16 + $0x260] sm:$0xff]
        %v2917 = vld [vmem:[#allocation16 + $0x268] sm:$0xff]
        %v2918 = vld [vmem:[#allocation16 + $0x270] sm:$0xff]
        %v2919 = vld [vmem:[#allocation16 + $0x278] sm:$0xff]
        %v2920 = vld [vmem:[#allocation16 + $0x280] sm:$0xff]
        %v2921 = vld [vmem:[#allocation16 + $0x288] sm:$0xff]
        %v2922 = vld [vmem:[#allocation16 + $0x290] sm:$0xff]
        %v2923 = vld [vmem:[#allocation16 + $0x298] sm:$0xff]
        %v2924 = vld [vmem:[#allocation16 + $0x2a0] sm:$0xff]
        %v2925 = vld [vmem:[#allocation16 + $0x2a8] sm:$0xff]
        %v2926 = vld [vmem:[#allocation16 + $0x2b0] sm:$0xff]
        %v2927 = vld [vmem:[#allocation16 + $0x2b8] sm:$0xff]
        %v2928 = vld [vmem:[#allocation16 + $0x2c0] sm:$0xff]
        %v2929 = vld [vmem:[#allocation16 + $0x2c8] sm:$0xff]
        %v2930 = vld [vmem:[#allocation16 + $0x2d0] sm:$0xff]
        %v2931 = vld [vmem:[#allocation16 + $0x2d8] sm:$0xff]
        %v2932 = vld [vmem:[#allocation16 + $0x2e0] sm:$0xff]
        %v2933 = vld [vmem:[#allocation16 + $0x2e8] sm:$0xff]
        %v2934 = vld [vmem:[#allocation16 + $0x2f0] sm:$0xff]
        %v2935 = vld [vmem:[#allocation16 + $0x2f8] sm:$0xff]
        %v2936 = vld [vmem:[#allocation16 + $0x300] sm:$0xff]
        %v2937 = vld [vmem:[#allocation16 + $0x308] sm:$0xff]
        %v2938 = vld [vmem:[#allocation16 + $0x310] sm:$0xff]
        %v2939 = vld [vmem:[#allocation16 + $0x318] sm:$0xff]
        %v2940 = vld [vmem:[#allocation16 + $0x320] sm:$0xff]
        %v2941 = vld [vmem:[#allocation16 + $0x328] sm:$0xff]
        %v2942 = vld [vmem:[#allocation16 + $0x330] sm:$0xff]
        %v2943 = vld [vmem:[#allocation16 + $0x338] sm:$0xff]
        %v2944 = vld [vmem:[#allocation16 + $0x340] sm:$0xff]
        %v2945 = vld [vmem:[#allocation16 + $0x348] sm:$0xff]
        %v2946 = vld [vmem:[#allocation16 + $0x350] sm:$0xff]
        %v2947 = vld [vmem:[#allocation16 + $0x358] sm:$0xff]
        %v2948 = vld [vmem:[#allocation16 + $0x360] sm:$0xff]
        %v2949 = vld [vmem:[#allocation16 + $0x368] sm:$0xff]
        %v2950 = vld [vmem:[#allocation16 + $0x370] sm:$0xff]
        %v2951 = vld [vmem:[#allocation16 + $0x378] sm:$0xff]
        %v2952 = vld [vmem:[#allocation16 + $0x380] sm:$0xff]
        %v2953 = vld [vmem:[#allocation16 + $0x388] sm:$0xff]
        %v2954 = vld [vmem:[#allocation16 + $0x390] sm:$0xff]
        %v2955 = vld [vmem:[#allocation16 + $0x398] sm:$0xff]
        %v2956 = vld [vmem:[#allocation16 + $0x3a0] sm:$0xff]
        %v2957 = vld [vmem:[#allocation16 + $0x3a8] sm:$0xff]
        %v2958 = vld [vmem:[#allocation16 + $0x3b0] sm:$0xff]
        %v2959 = vld [vmem:[#allocation16 + $0x3b8] sm:$0xff]
        %v2960 = vld [vmem:[#allocation16 + $0x3c0] sm:$0xff]
        %v2961 = vld [vmem:[#allocation16 + $0x3c8] sm:$0xff]
        %v2962 = vld [vmem:[#allocation16 + $0x3d0] sm:$0xff]
        %v2963 = vld [vmem:[#allocation16 + $0x3d8] sm:$0xff]
        %v2964 = vld [vmem:[#allocation16 + $0x3e0] sm:$0xff]
        %v2965 = vld [vmem:[#allocation16 + $0x3e8] sm:$0xff]
        %v2966 = vld [vmem:[#allocation16 + $0x3f0] sm:$0xff]
        %v2967 = vld [vmem:[#allocation16 + $0x3f8] sm:$0xff]
        %v2968 = vld [vmem:[%s14] sm:$0xff]
        %v2970 = vlaneseq
        %v2971 = vshrl.u32 %v2970, 7
        %v2972 = vsub.s32 0, %v2971
        %v2973 = vrot.slane %v2968, %v2972
        %v2974 = vlaneseq
        %v2975 = vshrl.u32 %v2974, 7
        %v2976 = vsub.s32 1, %v2975
        %v2977 = vrot.slane %v2968, %v2976
        %v2978 = vlaneseq
        %v2979 = vshrl.u32 %v2978, 7
        %v2980 = vsub.s32 2, %v2979
        %v2981 = vrot.slane %v2968, %v2980
        %v2982 = vlaneseq
        %v2983 = vshrl.u32 %v2982, 7
        %v2984 = vsub.s32 3, %v2983
        %v2985 = vrot.slane %v2968, %v2984
        %v2986 = vlaneseq
        %v2987 = vshrl.u32 %v2986, 7
        %v2988 = vsub.s32 4, %v2987
        %v2989 = vrot.slane %v2968, %v2988
        %v2990 = vlaneseq
        %v2991 = vshrl.u32 %v2990, 7
        %v2992 = vsub.s32 5, %v2991
        %v2993 = vrot.slane %v2968, %v2992
        %v2994 = vlaneseq
        %v2995 = vshrl.u32 %v2994, 7
        %v2996 = vsub.s32 6, %v2995
        %v2997 = vrot.slane %v2968, %v2996
        %v2998 = vlaneseq
        %v2999 = vshrl.u32 %v2998, 7
        %v3000 = vsub.s32 7, %v2999
        %v3001 = vrot.slane %v2968, %v3000
        %v3138 = vunpack.c.l.b16 %v2840
        %v3139 = vunpack.c.h.b16 %v2840
        %v3140 = vunpack.c.l.b16 %v2841
        %v3141 = vunpack.c.h.b16 %v2841
        %v3142 = vunpack.c.l.b16 %v2842
        %v3143 = vunpack.c.h.b16 %v2842
        %v3144 = vunpack.c.l.b16 %v2843
        %v3145 = vunpack.c.h.b16 %v2843
        %v3146 = vunpack.c.l.b16 %v2844
        %v3147 = vunpack.c.h.b16 %v2844
        %v3148 = vunpack.c.l.b16 %v2845
        %v3149 = vunpack.c.h.b16 %v2845
        %v3150 = vunpack.c.l.b16 %v2846
        %v3151 = vunpack.c.h.b16 %v2846
        %v3152 = vunpack.c.l.b16 %v2847
        %v3153 = vunpack.c.h.b16 %v2847
        %v3154 = vunpack.c.l.b16 %v2848
        %v3155 = vunpack.c.h.b16 %v2848
        %v3156 = vunpack.c.l.b16 %v2849
        %v3157 = vunpack.c.h.b16 %v2849
        %v3158 = vunpack.c.l.b16 %v2850
        %v3159 = vunpack.c.h.b16 %v2850
        %v3160 = vunpack.c.l.b16 %v2851
        %v3161 = vunpack.c.h.b16 %v2851
        %v3162 = vunpack.c.l.b16 %v2852
        %v3163 = vunpack.c.h.b16 %v2852
        %v3164 = vunpack.c.l.b16 %v2853
        %v3165 = vunpack.c.h.b16 %v2853
        %v3166 = vunpack.c.l.b16 %v2854
        %v3167 = vunpack.c.h.b16 %v2854
        %v3168 = vunpack.c.l.b16 %v2855
        %v3169 = vunpack.c.h.b16 %v2855
        %v3170 = vunpack.c.l.b16 %v2856
        %v3171 = vunpack.c.h.b16 %v2856
        %v3172 = vunpack.c.l.b16 %v2857
        %v3173 = vunpack.c.h.b16 %v2857
        %v3174 = vunpack.c.l.b16 %v2858
        %v3175 = vunpack.c.h.b16 %v2858
        %v3176 = vunpack.c.l.b16 %v2859
        %v3177 = vunpack.c.h.b16 %v2859
        %v3178 = vunpack.c.l.b16 %v2860
        %v3179 = vunpack.c.h.b16 %v2860
        %v3180 = vunpack.c.l.b16 %v2861
        %v3181 = vunpack.c.h.b16 %v2861
        %v3182 = vunpack.c.l.b16 %v2862
        %v3183 = vunpack.c.h.b16 %v2862
        %v3184 = vunpack.c.l.b16 %v2863
        %v3185 = vunpack.c.h.b16 %v2863
        %v3186 = vunpack.c.l.b16 %v2864
        %v3187 = vunpack.c.h.b16 %v2864
        %v3188 = vunpack.c.l.b16 %v2865
        %v3189 = vunpack.c.h.b16 %v2865
        %v3190 = vunpack.c.l.b16 %v2866
        %v3191 = vunpack.c.h.b16 %v2866
        %v3192 = vunpack.c.l.b16 %v2867
        %v3193 = vunpack.c.h.b16 %v2867
        %v3194 = vunpack.c.l.b16 %v2868
        %v3195 = vunpack.c.h.b16 %v2868
        %v3196 = vunpack.c.l.b16 %v2869
        %v3197 = vunpack.c.h.b16 %v2869
        %v3198 = vunpack.c.l.b16 %v2870
        %v3199 = vunpack.c.h.b16 %v2870
        %v3200 = vunpack.c.l.b16 %v2871
        %v3201 = vunpack.c.h.b16 %v2871
        %v3202 = vunpack.c.l.b16 %v2872
        %v3203 = vunpack.c.h.b16 %v2872
        %v3204 = vunpack.c.l.b16 %v2873
        %v3205 = vunpack.c.h.b16 %v2873
        %v3206 = vunpack.c.l.b16 %v2874
        %v3207 = vunpack.c.h.b16 %v2874
        %v3208 = vunpack.c.l.b16 %v2875
        %v3209 = vunpack.c.h.b16 %v2875
        %v3210 = vunpack.c.l.b16 %v2876
        %v3211 = vunpack.c.h.b16 %v2876
        %v3212 = vunpack.c.l.b16 %v2877
        %v3213 = vunpack.c.h.b16 %v2877
        %v3214 = vunpack.c.l.b16 %v2878
        %v3215 = vunpack.c.h.b16 %v2878
        %v3216 = vunpack.c.l.b16 %v2879
        %v3217 = vunpack.c.h.b16 %v2879
        %v3218 = vunpack.c.l.b16 %v2880
        %v3219 = vunpack.c.h.b16 %v2880
        %v3220 = vunpack.c.l.b16 %v2881
        %v3221 = vunpack.c.h.b16 %v2881
        %v3222 = vunpack.c.l.b16 %v2882
        %v3223 = vunpack.c.h.b16 %v2882
        %v3224 = vunpack.c.l.b16 %v2883
        %v3225 = vunpack.c.h.b16 %v2883
        %v3226 = vunpack.c.l.b16 %v2884
        %v3227 = vunpack.c.h.b16 %v2884
        %v3228 = vunpack.c.l.b16 %v2885
        %v3229 = vunpack.c.h.b16 %v2885
        %v3230 = vunpack.c.l.b16 %v2886
        %v3231 = vunpack.c.h.b16 %v2886
        %v3232 = vunpack.c.l.b16 %v2887
        %v3233 = vunpack.c.h.b16 %v2887
        %v3234 = vunpack.c.l.b16 %v2888
        %v3235 = vunpack.c.h.b16 %v2888
        %v3236 = vunpack.c.l.b16 %v2889
        %v3237 = vunpack.c.h.b16 %v2889
        %v3238 = vunpack.c.l.b16 %v2890
        %v3239 = vunpack.c.h.b16 %v2890
        %v3240 = vunpack.c.l.b16 %v2891
        %v3241 = vunpack.c.h.b16 %v2891
        %v3242 = vunpack.c.l.b16 %v2892
        %v3243 = vunpack.c.h.b16 %v2892
        %v3244 = vunpack.c.l.b16 %v2893
        %v3245 = vunpack.c.h.b16 %v2893
        %v3246 = vunpack.c.l.b16 %v2894
        %v3247 = vunpack.c.h.b16 %v2894
        %v3248 = vunpack.c.l.b16 %v2895
        %v3249 = vunpack.c.h.b16 %v2895
        %v3250 = vunpack.c.l.b16 %v2896
        %v3251 = vunpack.c.h.b16 %v2896
        %v3252 = vunpack.c.l.b16 %v2897
        %v3253 = vunpack.c.h.b16 %v2897
        %v3254 = vunpack.c.l.b16 %v2898
        %v3255 = vunpack.c.h.b16 %v2898
        %v3256 = vunpack.c.l.b16 %v2899
        %v3257 = vunpack.c.h.b16 %v2899
        %v3258 = vunpack.c.l.b16 %v2900
        %v3259 = vunpack.c.h.b16 %v2900
        %v3260 = vunpack.c.l.b16 %v2901
        %v3261 = vunpack.c.h.b16 %v2901
        %v3262 = vunpack.c.l.b16 %v2902
        %v3263 = vunpack.c.h.b16 %v2902
        %v3264 = vunpack.c.l.b16 %v2903
        %v3265 = vunpack.c.h.b16 %v2903
        %v3266 = vunpack.c.l.b16 %v2904
        %v3267 = vunpack.c.h.b16 %v2904
        %v3268 = vunpack.c.l.b16 %v2905
        %v3269 = vunpack.c.h.b16 %v2905
        %v3270 = vunpack.c.l.b16 %v2906
        %v3271 = vunpack.c.h.b16 %v2906
        %v3272 = vunpack.c.l.b16 %v2907
        %v3273 = vunpack.c.h.b16 %v2907
        %v3274 = vunpack.c.l.b16 %v2908
        %v3275 = vunpack.c.h.b16 %v2908
        %v3276 = vunpack.c.l.b16 %v2909
        %v3277 = vunpack.c.h.b16 %v2909
        %v3278 = vunpack.c.l.b16 %v2910
        %v3279 = vunpack.c.h.b16 %v2910
        %v3280 = vunpack.c.l.b16 %v2911
        %v3281 = vunpack.c.h.b16 %v2911
        %v3282 = vunpack.c.l.b16 %v2912
        %v3283 = vunpack.c.h.b16 %v2912
        %v3284 = vunpack.c.l.b16 %v2913
        %v3285 = vunpack.c.h.b16 %v2913
        %v3286 = vunpack.c.l.b16 %v2914
        %v3287 = vunpack.c.h.b16 %v2914
        %v3288 = vunpack.c.l.b16 %v2915
        %v3289 = vunpack.c.h.b16 %v2915
        %v3290 = vunpack.c.l.b16 %v2916
        %v3291 = vunpack.c.h.b16 %v2916
        %v3292 = vunpack.c.l.b16 %v2917
        %v3293 = vunpack.c.h.b16 %v2917
        %v3294 = vunpack.c.l.b16 %v2918
        %v3295 = vunpack.c.h.b16 %v2918
        %v3296 = vunpack.c.l.b16 %v2919
        %v3297 = vunpack.c.h.b16 %v2919
        %v3298 = vunpack.c.l.b16 %v2920
        %v3299 = vunpack.c.h.b16 %v2920
        %v3300 = vunpack.c.l.b16 %v2921
        %v3301 = vunpack.c.h.b16 %v2921
        %v3302 = vunpack.c.l.b16 %v2922
        %v3303 = vunpack.c.h.b16 %v2922
        %v3304 = vunpack.c.l.b16 %v2923
        %v3305 = vunpack.c.h.b16 %v2923
        %v3306 = vunpack.c.l.b16 %v2924
        %v3307 = vunpack.c.h.b16 %v2924
        %v3308 = vunpack.c.l.b16 %v2925
        %v3309 = vunpack.c.h.b16 %v2925
        %v3310 = vunpack.c.l.b16 %v2926
        %v3311 = vunpack.c.h.b16 %v2926
        %v3312 = vunpack.c.l.b16 %v2927
        %v3313 = vunpack.c.h.b16 %v2927
        %v3314 = vunpack.c.l.b16 %v2928
        %v3315 = vunpack.c.h.b16 %v2928
        %v3316 = vunpack.c.l.b16 %v2929
        %v3317 = vunpack.c.h.b16 %v2929
        %v3318 = vunpack.c.l.b16 %v2930
        %v3319 = vunpack.c.h.b16 %v2930
        %v3320 = vunpack.c.l.b16 %v2931
        %v3321 = vunpack.c.h.b16 %v2931
        %v3322 = vunpack.c.l.b16 %v2932
        %v3323 = vunpack.c.h.b16 %v2932
        %v3324 = vunpack.c.l.b16 %v2933
        %v3325 = vunpack.c.h.b16 %v2933
        %v3326 = vunpack.c.l.b16 %v2934
        %v3327 = vunpack.c.h.b16 %v2934
        %v3328 = vunpack.c.l.b16 %v2935
        %v3329 = vunpack.c.h.b16 %v2935
        %v3330 = vunpack.c.l.b16 %v2936
        %v3331 = vunpack.c.h.b16 %v2936
        %v3332 = vunpack.c.l.b16 %v2937
        %v3333 = vunpack.c.h.b16 %v2937
        %v3334 = vunpack.c.l.b16 %v2938
        %v3335 = vunpack.c.h.b16 %v2938
        %v3336 = vunpack.c.l.b16 %v2939
        %v3337 = vunpack.c.h.b16 %v2939
        %v3338 = vunpack.c.l.b16 %v2940
        %v3339 = vunpack.c.h.b16 %v2940
        %v3340 = vunpack.c.l.b16 %v2941
        %v3341 = vunpack.c.h.b16 %v2941
        %v3342 = vunpack.c.l.b16 %v2942
        %v3343 = vunpack.c.h.b16 %v2942
        %v3344 = vunpack.c.l.b16 %v2943
        %v3345 = vunpack.c.h.b16 %v2943
        %v3346 = vunpack.c.l.b16 %v2944
        %v3347 = vunpack.c.h.b16 %v2944
        %v3348 = vunpack.c.l.b16 %v2945
        %v3349 = vunpack.c.h.b16 %v2945
        %v3350 = vunpack.c.l.b16 %v2946
        %v3351 = vunpack.c.h.b16 %v2946
        %v3352 = vunpack.c.l.b16 %v2947
        %v3353 = vunpack.c.h.b16 %v2947
        %v3354 = vunpack.c.l.b16 %v2948
        %v3355 = vunpack.c.h.b16 %v2948
        %v3356 = vunpack.c.l.b16 %v2949
        %v3357 = vunpack.c.h.b16 %v2949
        %v3358 = vunpack.c.l.b16 %v2950
        %v3359 = vunpack.c.h.b16 %v2950
        %v3360 = vunpack.c.l.b16 %v2951
        %v3361 = vunpack.c.h.b16 %v2951
        %v3362 = vunpack.c.l.b16 %v2952
        %v3363 = vunpack.c.h.b16 %v2952
        %v3364 = vunpack.c.l.b16 %v2953
        %v3365 = vunpack.c.h.b16 %v2953
        %v3366 = vunpack.c.l.b16 %v2954
        %v3367 = vunpack.c.h.b16 %v2954
        %v3368 = vunpack.c.l.b16 %v2955
        %v3369 = vunpack.c.h.b16 %v2955
        %v3370 = vunpack.c.l.b16 %v2956
        %v3371 = vunpack.c.h.b16 %v2956
        %v3372 = vunpack.c.l.b16 %v2957
        %v3373 = vunpack.c.h.b16 %v2957
        %v3374 = vunpack.c.l.b16 %v2958
        %v3375 = vunpack.c.h.b16 %v2958
        %v3376 = vunpack.c.l.b16 %v2959
        %v3377 = vunpack.c.h.b16 %v2959
        %v3378 = vunpack.c.l.b16 %v2960
        %v3379 = vunpack.c.h.b16 %v2960
        %v3380 = vunpack.c.l.b16 %v2961
        %v3381 = vunpack.c.h.b16 %v2961
        %v3382 = vunpack.c.l.b16 %v2962
        %v3383 = vunpack.c.h.b16 %v2962
        %v3384 = vunpack.c.l.b16 %v2963
        %v3385 = vunpack.c.h.b16 %v2963
        %v3386 = vunpack.c.l.b16 %v2964
        %v3387 = vunpack.c.h.b16 %v2964
        %v3388 = vunpack.c.l.b16 %v2965
        %v3389 = vunpack.c.h.b16 %v2965
        %v3390 = vunpack.c.l.b16 %v2966
        %v3391 = vunpack.c.h.b16 %v2966
        %v3392 = vunpack.c.l.b16 %v2967
        %v3393 = vunpack.c.h.b16 %v2967
        %v3394 = vpack.c.b16 %v3146, %v3138
        %v3395 = vpack.c.b16 %v3147, %v3139
        %v3396 = vpack.c.b16 %v3148, %v3140
        %v3397 = vpack.c.b16 %v3149, %v3141
        %v3398 = vpack.c.b16 %v3150, %v3142
        %v3399 = vpack.c.b16 %v3151, %v3143
        %v3400 = vpack.c.b16 %v3152, %v3144
        %v3401 = vpack.c.b16 %v3153, %v3145
        %v3402 = vpack.c.b16 %v3162, %v3154
        %v3403 = vpack.c.b16 %v3163, %v3155
        %v3404 = vpack.c.b16 %v3164, %v3156
        %v3405 = vpack.c.b16 %v3165, %v3157
        %v3406 = vpack.c.b16 %v3166, %v3158
        %v3407 = vpack.c.b16 %v3167, %v3159
        %v3408 = vpack.c.b16 %v3168, %v3160
        %v3409 = vpack.c.b16 %v3169, %v3161
        %v3410 = vpack.c.b16 %v3178, %v3170
        %v3411 = vpack.c.b16 %v3179, %v3171
        %v3412 = vpack.c.b16 %v3180, %v3172
        %v3413 = vpack.c.b16 %v3181, %v3173
        %v3414 = vpack.c.b16 %v3182, %v3174
        %v3415 = vpack.c.b16 %v3183, %v3175
        %v3416 = vpack.c.b16 %v3184, %v3176
        %v3417 = vpack.c.b16 %v3185, %v3177
        %v3418 = vpack.c.b16 %v3194, %v3186
        %v3419 = vpack.c.b16 %v3195, %v3187
        %v3420 = vpack.c.b16 %v3196, %v3188
        %v3421 = vpack.c.b16 %v3197, %v3189
        %v3422 = vpack.c.b16 %v3198, %v3190
        %v3423 = vpack.c.b16 %v3199, %v3191
        %v3424 = vpack.c.b16 %v3200, %v3192
        %v3425 = vpack.c.b16 %v3201, %v3193
        %v3426 = vpack.c.b16 %v3210, %v3202
        %v3427 = vpack.c.b16 %v3211, %v3203
        %v3428 = vpack.c.b16 %v3212, %v3204
        %v3429 = vpack.c.b16 %v3213, %v3205
        %v3430 = vpack.c.b16 %v3214, %v3206
        %v3431 = vpack.c.b16 %v3215, %v3207
        %v3432 = vpack.c.b16 %v3216, %v3208
        %v3433 = vpack.c.b16 %v3217, %v3209
        %v3434 = vpack.c.b16 %v3226, %v3218
        %v3435 = vpack.c.b16 %v3227, %v3219
        %v3436 = vpack.c.b16 %v3228, %v3220
        %v3437 = vpack.c.b16 %v3229, %v3221
        %v3438 = vpack.c.b16 %v3230, %v3222
        %v3439 = vpack.c.b16 %v3231, %v3223
        %v3440 = vpack.c.b16 %v3232, %v3224
        %v3441 = vpack.c.b16 %v3233, %v3225
        %v3442 = vpack.c.b16 %v3242, %v3234
        %v3443 = vpack.c.b16 %v3243, %v3235
        %v3444 = vpack.c.b16 %v3244, %v3236
        %v3445 = vpack.c.b16 %v3245, %v3237
        %v3446 = vpack.c.b16 %v3246, %v3238
        %v3447 = vpack.c.b16 %v3247, %v3239
        %v3448 = vpack.c.b16 %v3248, %v3240
        %v3449 = vpack.c.b16 %v3249, %v3241
        %v3450 = vpack.c.b16 %v3258, %v3250
        %v3451 = vpack.c.b16 %v3259, %v3251
        %v3452 = vpack.c.b16 %v3260, %v3252
        %v3453 = vpack.c.b16 %v3261, %v3253
        %v3454 = vpack.c.b16 %v3262, %v3254
        %v3455 = vpack.c.b16 %v3263, %v3255
        %v3456 = vpack.c.b16 %v3264, %v3256
        %v3457 = vpack.c.b16 %v3265, %v3257
        %v3458 = vpack.c.b16 %v3274, %v3266
        %v3459 = vpack.c.b16 %v3275, %v3267
        %v3460 = vpack.c.b16 %v3276, %v3268
        %v3461 = vpack.c.b16 %v3277, %v3269
        %v3462 = vpack.c.b16 %v3278, %v3270
        %v3463 = vpack.c.b16 %v3279, %v3271
        %v3464 = vpack.c.b16 %v3280, %v3272
        %v3465 = vpack.c.b16 %v3281, %v3273
        %v3466 = vpack.c.b16 %v3290, %v3282
        %v3467 = vpack.c.b16 %v3291, %v3283
        %v3468 = vpack.c.b16 %v3292, %v3284
        %v3469 = vpack.c.b16 %v3293, %v3285
        %v3470 = vpack.c.b16 %v3294, %v3286
        %v3471 = vpack.c.b16 %v3295, %v3287
        %v3472 = vpack.c.b16 %v3296, %v3288
        %v3473 = vpack.c.b16 %v3297, %v3289
        %v3474 = vpack.c.b16 %v3306, %v3298
        %v3475 = vpack.c.b16 %v3307, %v3299
        %v3476 = vpack.c.b16 %v3308, %v3300
        %v3477 = vpack.c.b16 %v3309, %v3301
        %v3478 = vpack.c.b16 %v3310, %v3302
        %v3479 = vpack.c.b16 %v3311, %v3303
        %v3480 = vpack.c.b16 %v3312, %v3304
        %v3481 = vpack.c.b16 %v3313, %v3305
        %v3482 = vpack.c.b16 %v3322, %v3314
        %v3483 = vpack.c.b16 %v3323, %v3315
        %v3484 = vpack.c.b16 %v3324, %v3316
        %v3485 = vpack.c.b16 %v3325, %v3317
        %v3486 = vpack.c.b16 %v3326, %v3318
        %v3487 = vpack.c.b16 %v3327, %v3319
        %v3488 = vpack.c.b16 %v3328, %v3320
        %v3489 = vpack.c.b16 %v3329, %v3321
        %v3490 = vpack.c.b16 %v3338, %v3330
        %v3491 = vpack.c.b16 %v3339, %v3331
        %v3492 = vpack.c.b16 %v3340, %v3332
        %v3493 = vpack.c.b16 %v3341, %v3333
        %v3494 = vpack.c.b16 %v3342, %v3334
        %v3495 = vpack.c.b16 %v3343, %v3335
        %v3496 = vpack.c.b16 %v3344, %v3336
        %v3497 = vpack.c.b16 %v3345, %v3337
        %v3498 = vpack.c.b16 %v3354, %v3346
        %v3499 = vpack.c.b16 %v3355, %v3347
        %v3500 = vpack.c.b16 %v3356, %v3348
        %v3501 = vpack.c.b16 %v3357, %v3349
        %v3502 = vpack.c.b16 %v3358, %v3350
        %v3503 = vpack.c.b16 %v3359, %v3351
        %v3504 = vpack.c.b16 %v3360, %v3352
        %v3505 = vpack.c.b16 %v3361, %v3353
        %v3506 = vpack.c.b16 %v3370, %v3362
        %v3507 = vpack.c.b16 %v3371, %v3363
        %v3508 = vpack.c.b16 %v3372, %v3364
        %v3509 = vpack.c.b16 %v3373, %v3365
        %v3510 = vpack.c.b16 %v3374, %v3366
        %v3511 = vpack.c.b16 %v3375, %v3367
        %v3512 = vpack.c.b16 %v3376, %v3368
        %v3513 = vpack.c.b16 %v3377, %v3369
        %v3514 = vpack.c.b16 %v3386, %v3378
        %v3515 = vpack.c.b16 %v3387, %v3379
        %v3516 = vpack.c.b16 %v3388, %v3380
        %v3517 = vpack.c.b16 %v3389, %v3381
        %v3518 = vpack.c.b16 %v3390, %v3382
        %v3519 = vpack.c.b16 %v3391, %v3383
        %v3520 = vpack.c.b16 %v3392, %v3384
        %v3521 = vpack.c.b16 %v3393, %v3385
        %3650 = vmatprep.subr.bf16.mxu0 %v3451
        %3651 = vmatpush1.bf16.msra.mxu0 %v3450
        %3652 = vmatprep.subr.bf16.mxu0 %v3443
        %3653 = vmatpush1.bf16.msra.mxu0 %v3442
        %3654 = vmatprep.subr.bf16.mxu0 %v3435
        %3655 = vmatpush1.bf16.msra.mxu0 %v3434
        %3656 = vmatprep.subr.bf16.mxu0 %v3427
        %3657 = vmatpush1.bf16.msra.mxu0 %v3426
        %3658 = vmatprep.subr.bf16.mxu0 %v3419
        %3659 = vmatpush1.bf16.msra.mxu0 %v3418
        %3660 = vmatprep.subr.bf16.mxu0 %v3411
        %3661 = vmatpush1.bf16.msra.mxu0 %v3410
        %3662 = vmatprep.subr.bf16.mxu0 %v3403
        %3663 = vmatpush1.bf16.msra.mxu0 %v3402
        %3664 = vmatprep.subr.bf16.mxu0 %v3395
        %3665 = vmatpush1.bf16.msra.mxu0 %v3394
        %3666 = vmatprep.subr.bf16.mxu0 %v3515
        %3667 = vmatpush2.bf16.msra.mxu0 %v3514
        %3668 = vmatprep.subr.bf16.mxu0 %v3507
        %3669 = vmatpush2.bf16.msra.mxu0 %v3506
        %3670 = vmatprep.subr.bf16.mxu0 %v3499
        %3671 = vmatpush2.bf16.msra.mxu0 %v3498
        %3672 = vmatprep.subr.bf16.mxu0 %v3491
        %3673 = vmatpush2.bf16.msra.mxu0 %v3490
        %3674 = vmatprep.subr.bf16.mxu0 %v3483
        %3675 = vmatpush2.bf16.msra.mxu0 %v3482
        %3676 = vmatprep.subr.bf16.mxu0 %v3475
        %3677 = vmatpush2.bf16.msra.mxu0 %v3474
        %3678 = vmatprep.subr.bf16.mxu0 %v3467
        %3679 = vmatpush2.bf16.msra.mxu0 %v3466
        %3680 = vmatprep.subr.bf16.mxu0 %v3459
        %3681 = vmatpush2.bf16.msra.mxu0 %v3458
        %3682 = vmatprep.mubr.bf16.mxu0 %v2839
        %3683 = vmatmul.mubr.bf16.gmra.mxu0 %v2838
        %v3684 = vpop.f32.mrf.mxu0
        %v3685 = vadd.f32 %v2973, %v3684
        %v3686 = vpop.f32.mrf.mxu0
        %v3687 = vadd.f32 %v2977, %v3686
        %v3688 = vpop.f32.mrf.mxu0
        %v3689 = vpop.f32.mrf.mxu0
        %3690 = vdwg.mxu0
        %3691 = vmatprep.subr.bf16.mxu0 %v3453
        %3692 = vmatpush1.bf16.msra.mxu0 %v3452
        %3693 = vmatprep.subr.bf16.mxu0 %v3445
        %3694 = vmatpush1.bf16.msra.mxu0 %v3444
        %3695 = vmatprep.subr.bf16.mxu0 %v3437
        %3696 = vmatpush1.bf16.msra.mxu0 %v3436
        %3697 = vmatprep.subr.bf16.mxu0 %v3429
        %3698 = vmatpush1.bf16.msra.mxu0 %v3428
        %3699 = vmatprep.subr.bf16.mxu0 %v3421
        %3700 = vmatpush1.bf16.msra.mxu0 %v3420
        %3701 = vmatprep.subr.bf16.mxu0 %v3413
        %3702 = vmatpush1.bf16.msra.mxu0 %v3412
        %3703 = vmatprep.subr.bf16.mxu0 %v3405
        %3704 = vmatpush1.bf16.msra.mxu0 %v3404
        %3705 = vmatprep.subr.bf16.mxu0 %v3397
        %3706 = vmatpush1.bf16.msra.mxu0 %v3396
        %3707 = vmatprep.subr.bf16.mxu0 %v3517
        %3708 = vmatpush2.bf16.msra.mxu0 %v3516
        %3709 = vmatprep.subr.bf16.mxu0 %v3509
        %3710 = vmatpush2.bf16.msra.mxu0 %v3508
        %3711 = vmatprep.subr.bf16.mxu0 %v3501
        %3712 = vmatpush2.bf16.msra.mxu0 %v3500
        %3713 = vmatprep.subr.bf16.mxu0 %v3493
        %3714 = vmatpush2.bf16.msra.mxu0 %v3492
        %3715 = vmatprep.subr.bf16.mxu0 %v3485
        %3716 = vmatpush2.bf16.msra.mxu0 %v3484
        %3717 = vmatprep.subr.bf16.mxu0 %v3477
        %3718 = vmatpush2.bf16.msra.mxu0 %v3476
        %3719 = vmatprep.subr.bf16.mxu0 %v3469
        %3720 = vmatpush2.bf16.msra.mxu0 %v3468
        %3721 = vmatprep.subr.bf16.mxu0 %v3461
        %3722 = vmatpush2.bf16.msra.mxu0 %v3460
        %3723 = vmatprep.mubr.bf16.mxu0 %v2839
        %3724 = vmatmul.mubr.bf16.gmra.mxu0 %v2838
        %v3725 = vpop.f32.mrf.mxu0
        %v3726 = vadd.f32 %v2981, %v3725
        %v3727 = vpop.f32.mrf.mxu0
        %v3728 = vadd.f32 %v2985, %v3727
        %v3729 = vpop.f32.mrf.mxu0
        %v3730 = vpop.f32.mrf.mxu0
        %3731 = vdwg.mxu0
        %3732 = vmatprep.subr.bf16.mxu0 %v3455
        %3733 = vmatpush1.bf16.msra.mxu0 %v3454
        %3734 = vmatprep.subr.bf16.mxu0 %v3447
        %3735 = vmatpush1.bf16.msra.mxu0 %v3446
        %3736 = vmatprep.subr.bf16.mxu0 %v3439
        %3737 = vmatpush1.bf16.msra.mxu0 %v3438
        %3738 = vmatprep.subr.bf16.mxu0 %v3431
        %3739 = vmatpush1.bf16.msra.mxu0 %v3430
        %3740 = vmatprep.subr.bf16.mxu0 %v3423
        %3741 = vmatpush1.bf16.msra.mxu0 %v3422
        %3742 = vmatprep.subr.bf16.mxu0 %v3415
        %3743 = vmatpush1.bf16.msra.mxu0 %v3414
        %3744 = vmatprep.subr.bf16.mxu0 %v3407
        %3745 = vmatpush1.bf16.msra.mxu0 %v3406
        %3746 = vmatprep.subr.bf16.mxu0 %v3399
        %3747 = vmatpush1.bf16.msra.mxu0 %v3398
        %3748 = vmatprep.subr.bf16.mxu0 %v3519
        %3749 = vmatpush2.bf16.msra.mxu0 %v3518
        %3750 = vmatprep.subr.bf16.mxu0 %v3511
        %3751 = vmatpush2.bf16.msra.mxu0 %v3510
        %3752 = vmatprep.subr.bf16.mxu0 %v3503
        %3753 = vmatpush2.bf16.msra.mxu0 %v3502
        %3754 = vmatprep.subr.bf16.mxu0 %v3495
        %3755 = vmatpush2.bf16.msra.mxu0 %v3494
        %3756 = vmatprep.subr.bf16.mxu0 %v3487
        %3757 = vmatpush2.bf16.msra.mxu0 %v3486
        %3758 = vmatprep.subr.bf16.mxu0 %v3479
        %3759 = vmatpush2.bf16.msra.mxu0 %v3478
        %3760 = vmatprep.subr.bf16.mxu0 %v3471
        %3761 = vmatpush2.bf16.msra.mxu0 %v3470
        %3762 = vmatprep.subr.bf16.mxu0 %v3463
        %3763 = vmatpush2.bf16.msra.mxu0 %v3462
        %3764 = vmatprep.mubr.bf16.mxu0 %v2839
        %3765 = vmatmul.mubr.bf16.gmra.mxu0 %v2838
        %v3766 = vpop.f32.mrf.mxu0
        %v3767 = vadd.f32 %v2989, %v3766
        %v3768 = vpop.f32.mrf.mxu0
        %v3769 = vadd.f32 %v2993, %v3768
        %v3770 = vpop.f32.mrf.mxu0
        %v3771 = vpop.f32.mrf.mxu0
        %3772 = vdwg.mxu0
        %3773 = vmatprep.subr.bf16.mxu0 %v3457
        %3774 = vmatpush1.bf16.msra.mxu0 %v3456
        %3775 = vmatprep.subr.bf16.mxu0 %v3449
        %3776 = vmatpush1.bf16.msra.mxu0 %v3448
        %3777 = vmatprep.subr.bf16.mxu0 %v3441
        %3778 = vmatpush1.bf16.msra.mxu0 %v3440
        %3779 = vmatprep.subr.bf16.mxu0 %v3433
        %3780 = vmatpush1.bf16.msra.mxu0 %v3432
        %3781 = vmatprep.subr.bf16.mxu0 %v3425
        %3782 = vmatpush1.bf16.msra.mxu0 %v3424
        %3783 = vmatprep.subr.bf16.mxu0 %v3417
        %3784 = vmatpush1.bf16.msra.mxu0 %v3416
        %3785 = vmatprep.subr.bf16.mxu0 %v3409
        %3786 = vmatpush1.bf16.msra.mxu0 %v3408
        %3787 = vmatprep.subr.bf16.mxu0 %v3401
        %3788 = vmatpush1.bf16.msra.mxu0 %v3400
        %3789 = vmatprep.subr.bf16.mxu0 %v3521
        %3790 = vmatpush2.bf16.msra.mxu0 %v3520
        %3791 = vmatprep.subr.bf16.mxu0 %v3513
        %3792 = vmatpush2.bf16.msra.mxu0 %v3512
        %3793 = vmatprep.subr.bf16.mxu0 %v3505
        %3794 = vmatpush2.bf16.msra.mxu0 %v3504
        %3795 = vmatprep.subr.bf16.mxu0 %v3497
        %3796 = vmatpush2.bf16.msra.mxu0 %v3496
        %3797 = vmatprep.subr.bf16.mxu0 %v3489
        %3798 = vmatpush2.bf16.msra.mxu0 %v3488
        %3799 = vmatprep.subr.bf16.mxu0 %v3481
        %3800 = vmatpush2.bf16.msra.mxu0 %v3480
        %3801 = vmatprep.subr.bf16.mxu0 %v3473
        %3802 = vmatpush2.bf16.msra.mxu0 %v3472
        %3803 = vmatprep.subr.bf16.mxu0 %v3465
        %3804 = vmatpush2.bf16.msra.mxu0 %v3464
        %3805 = vmatprep.mubr.bf16.mxu0 %v2839
        %3806 = vmatmul.mubr.bf16.gmra.mxu0 %v2838
        %v3807 = vpop.f32.mrf.mxu0
        %v3808 = vadd.f32 %v2997, %v3807
        %v3809 = vpop.f32.mrf.mxu0
        %v3810 = vadd.f32 %v3001, %v3809
        %v3811 = vpop.f32.mrf.mxu0
        %v3812 = vpop.f32.mrf.mxu0
        %3813 = vdwg.mxu0
        %v3814 = vmul.f32 %v3685, 0.5
        %v3815 = vmul.f32 %v3687, 0.5
        %v3816 = vmul.f32 %v3726, 0.5
        %v3817 = vmul.f32 %v3728, 0.5
        %v3818 = vmul.f32 %v3767, 0.5
        %v3819 = vmul.f32 %v3769, 0.5
        %v3820 = vmul.f32 %v3808, 0.5
        %v3821 = vmul.f32 %v3810, 0.5
        %v3822 = vmul.f32 %v3685, 0.044715
        %v3823 = vmul.f32 %v3687, 0.044715
        %v3824 = vmul.f32 %v3726, 0.044715
        %v3825 = vmul.f32 %v3728, 0.044715
        %v3826 = vmul.f32 %v3767, 0.044715
        %v3827 = vmul.f32 %v3769, 0.044715
        %v3828 = vmul.f32 %v3808, 0.044715
        %v3829 = vmul.f32 %v3810, 0.044715
        %v3830 = vmul.f32 %v3822, %v3685
        %v3831 = vmul.f32 %v3823, %v3687
        %v3832 = vmul.f32 %v3824, %v3726
        %v3833 = vmul.f32 %v3825, %v3728
        %v3834 = vmul.f32 %v3826, %v3767
        %v3835 = vmul.f32 %v3827, %v3769
        %v3836 = vmul.f32 %v3828, %v3808
        %v3837 = vmul.f32 %v3829, %v3810
        %v3838 = vmul.f32 %v3830, %v3685
        %v3839 = vmul.f32 %v3831, %v3687
        %v3840 = vmul.f32 %v3832, %v3726
        %v3841 = vmul.f32 %v3833, %v3728
        %v3842 = vmul.f32 %v3834, %v3767
        %v3843 = vmul.f32 %v3835, %v3769
        %v3844 = vmul.f32 %v3836, %v3808
        %v3845 = vmul.f32 %v3837, %v3810
        %v3846 = vadd.f32 %v3685, %v3838
        %v3847 = vadd.f32 %v3687, %v3839
        %v3848 = vadd.f32 %v3726, %v3840
        %v3849 = vadd.f32 %v3728, %v3841
        %v3850 = vadd.f32 %v3767, %v3842
        %v3851 = vadd.f32 %v3769, %v3843
        %v3852 = vadd.f32 %v3808, %v3844
        %v3853 = vadd.f32 %v3810, %v3845
        %v3854 = vmul.f32 %v3846, 0.7978845
        %v3855 = vmul.f32 %v3847, 0.7978845
        %v3856 = vmul.f32 %v3848, 0.7978845
        %v3857 = vmul.f32 %v3849, 0.7978845
        %v3858 = vmul.f32 %v3850, 0.7978845
        %v3859 = vmul.f32 %v3851, 0.7978845
        %v3860 = vmul.f32 %v3852, 0.7978845
        %v3861 = vmul.f32 %v3853, 0.7978845
        %v3862 = vtanh.pop %v3854
        %v3863 = vtanh.pop %v3855
        %v3864 = vtanh.pop %v3856
        %v3865 = vtanh.pop %v3857
        %v3866 = vtanh.pop %v3858
        %v3867 = vtanh.pop %v3859
        %v3868 = vtanh.pop %v3860
        %v3869 = vtanh.pop %v3861
        %v3870 = vadd.f32 %v3862, 1.0
        %v3871 = vadd.f32 %v3863, 1.0
        %v3872 = vadd.f32 %v3864, 1.0
        %v3873 = vadd.f32 %v3865, 1.0
        %v3874 = vadd.f32 %v3866, 1.0
        %v3875 = vadd.f32 %v3867, 1.0
        %v3876 = vadd.f32 %v3868, 1.0
        %v3877 = vadd.f32 %v3869, 1.0
        %v3878 = vmul.f32 %v3814, %v3870
        %v3879 = vmul.f32 %v3815, %v3871
        %v3880 = vmul.f32 %v3816, %v3872
        %v3881 = vmul.f32 %v3817, %v3873
        %v3882 = vmul.f32 %v3818, %v3874
        %v3883 = vmul.f32 %v3819, %v3875
        %v3884 = vmul.f32 %v3820, %v3876
        %v3885 = vmul.f32 %v3821, %v3877
        %v3886 = vpack.c.bf16 %v3878, %v3878
        %v3887 = vpack.c.bf16 %v3879, %v3879
        %v3888 = vpack.c.bf16 %v3880, %v3880
        %v3889 = vpack.c.bf16 %v3881, %v3881
        %v3890 = vpack.c.bf16 %v3882, %v3882
        %v3891 = vpack.c.bf16 %v3883, %v3883
        %v3892 = vpack.c.bf16 %v3884, %v3884
        %v3893 = vpack.c.bf16 %v3885, %v3885
        %v3894 = vld [vmem:[#allocation18] sm:$0xff]
        %v3895 = vld [vmem:[#allocation18 + $0x8] sm:$0xff]
        %v3896 = vld [vmem:[#allocation18 + $0x10] sm:$0xff]
        %v3897 = vld [vmem:[#allocation18 + $0x18] sm:$0xff]
        %v3898 = vld [vmem:[#allocation18 + $0x20] sm:$0xff]
        %v3899 = vld [vmem:[#allocation18 + $0x28] sm:$0xff]
        %v3900 = vld [vmem:[#allocation18 + $0x30] sm:$0xff]
        %v3901 = vld [vmem:[#allocation18 + $0x38] sm:$0xff]
        %v3902 = vld [vmem:[#allocation18 + $0x40] sm:$0xff]
        %v3903 = vld [vmem:[#allocation18 + $0x48] sm:$0xff]
        %v3904 = vld [vmem:[#allocation18 + $0x50] sm:$0xff]
        %v3905 = vld [vmem:[#allocation18 + $0x58] sm:$0xff]
        %v3906 = vld [vmem:[#allocation18 + $0x60] sm:$0xff]
        %v3907 = vld [vmem:[#allocation18 + $0x68] sm:$0xff]
        %v3908 = vld [vmem:[#allocation18 + $0x70] sm:$0xff]
        %v3909 = vld [vmem:[#allocation18 + $0x78] sm:$0xff]
        %v3910 = vld [vmem:[#allocation18 + $0x80] sm:$0xff]
        %v3911 = vld [vmem:[#allocation18 + $0x88] sm:$0xff]
        %v3912 = vld [vmem:[#allocation18 + $0x90] sm:$0xff]
        %v3913 = vld [vmem:[#allocation18 + $0x98] sm:$0xff]
        %v3914 = vld [vmem:[#allocation18 + $0xa0] sm:$0xff]
        %v3915 = vld [vmem:[#allocation18 + $0xa8] sm:$0xff]
        %v3916 = vld [vmem:[#allocation18 + $0xb0] sm:$0xff]
        %v3917 = vld [vmem:[#allocation18 + $0xb8] sm:$0xff]
        %v3918 = vld [vmem:[#allocation18 + $0xc0] sm:$0xff]
        %v3919 = vld [vmem:[#allocation18 + $0xc8] sm:$0xff]
        %v3920 = vld [vmem:[#allocation18 + $0xd0] sm:$0xff]
        %v3921 = vld [vmem:[#allocation18 + $0xd8] sm:$0xff]
        %v3922 = vld [vmem:[#allocation18 + $0xe0] sm:$0xff]
        %v3923 = vld [vmem:[#allocation18 + $0xe8] sm:$0xff]
        %v3924 = vld [vmem:[#allocation18 + $0xf0] sm:$0xff]
        %v3925 = vld [vmem:[#allocation18 + $0xf8] sm:$0xff]
        %v3926 = vld [vmem:[#allocation18 + $0x100] sm:$0xff]
        %v3927 = vld [vmem:[#allocation18 + $0x108] sm:$0xff]
        %v3928 = vld [vmem:[#allocation18 + $0x110] sm:$0xff]
        %v3929 = vld [vmem:[#allocation18 + $0x118] sm:$0xff]
        %v3930 = vld [vmem:[#allocation18 + $0x120] sm:$0xff]
        %v3931 = vld [vmem:[#allocation18 + $0x128] sm:$0xff]
        %v3932 = vld [vmem:[#allocation18 + $0x130] sm:$0xff]
        %v3933 = vld [vmem:[#allocation18 + $0x138] sm:$0xff]
        %v3934 = vld [vmem:[#allocation18 + $0x140] sm:$0xff]
        %v3935 = vld [vmem:[#allocation18 + $0x148] sm:$0xff]
        %v3936 = vld [vmem:[#allocation18 + $0x150] sm:$0xff]
        %v3937 = vld [vmem:[#allocation18 + $0x158] sm:$0xff]
        %v3938 = vld [vmem:[#allocation18 + $0x160] sm:$0xff]
        %v3939 = vld [vmem:[#allocation18 + $0x168] sm:$0xff]
        %v3940 = vld [vmem:[#allocation18 + $0x170] sm:$0xff]
        %v3941 = vld [vmem:[#allocation18 + $0x178] sm:$0xff]
        %v3942 = vld [vmem:[#allocation18 + $0x180] sm:$0xff]
        %v3943 = vld [vmem:[#allocation18 + $0x188] sm:$0xff]
        %v3944 = vld [vmem:[#allocation18 + $0x190] sm:$0xff]
        %v3945 = vld [vmem:[#allocation18 + $0x198] sm:$0xff]
        %v3946 = vld [vmem:[#allocation18 + $0x1a0] sm:$0xff]
        %v3947 = vld [vmem:[#allocation18 + $0x1a8] sm:$0xff]
        %v3948 = vld [vmem:[#allocation18 + $0x1b0] sm:$0xff]
        %v3949 = vld [vmem:[#allocation18 + $0x1b8] sm:$0xff]
        %v3950 = vld [vmem:[#allocation18 + $0x1c0] sm:$0xff]
        %v3951 = vld [vmem:[#allocation18 + $0x1c8] sm:$0xff]
        %v3952 = vld [vmem:[#allocation18 + $0x1d0] sm:$0xff]
        %v3953 = vld [vmem:[#allocation18 + $0x1d8] sm:$0xff]
        %v3954 = vld [vmem:[#allocation18 + $0x1e0] sm:$0xff]
        %v3955 = vld [vmem:[#allocation18 + $0x1e8] sm:$0xff]
        %v3956 = vld [vmem:[#allocation18 + $0x1f0] sm:$0xff]
        %v3957 = vld [vmem:[#allocation18 + $0x1f8] sm:$0xff]
        %v3958 = vld [vmem:[#allocation18 + $0x200] sm:$0xff]
        %v3959 = vld [vmem:[#allocation18 + $0x208] sm:$0xff]
        %v3960 = vld [vmem:[#allocation18 + $0x210] sm:$0xff]
        %v3961 = vld [vmem:[#allocation18 + $0x218] sm:$0xff]
        %v3962 = vld [vmem:[#allocation18 + $0x220] sm:$0xff]
        %v3963 = vld [vmem:[#allocation18 + $0x228] sm:$0xff]
        %v3964 = vld [vmem:[#allocation18 + $0x230] sm:$0xff]
        %v3965 = vld [vmem:[#allocation18 + $0x238] sm:$0xff]
        %v3966 = vld [vmem:[#allocation18 + $0x240] sm:$0xff]
        %v3967 = vld [vmem:[#allocation18 + $0x248] sm:$0xff]
        %v3968 = vld [vmem:[#allocation18 + $0x250] sm:$0xff]
        %v3969 = vld [vmem:[#allocation18 + $0x258] sm:$0xff]
        %v3970 = vld [vmem:[#allocation18 + $0x260] sm:$0xff]
        %v3971 = vld [vmem:[#allocation18 + $0x268] sm:$0xff]
        %v3972 = vld [vmem:[#allocation18 + $0x270] sm:$0xff]
        %v3973 = vld [vmem:[#allocation18 + $0x278] sm:$0xff]
        %v3974 = vld [vmem:[#allocation18 + $0x280] sm:$0xff]
        %v3975 = vld [vmem:[#allocation18 + $0x288] sm:$0xff]
        %v3976 = vld [vmem:[#allocation18 + $0x290] sm:$0xff]
        %v3977 = vld [vmem:[#allocation18 + $0x298] sm:$0xff]
        %v3978 = vld [vmem:[#allocation18 + $0x2a0] sm:$0xff]
        %v3979 = vld [vmem:[#allocation18 + $0x2a8] sm:$0xff]
        %v3980 = vld [vmem:[#allocation18 + $0x2b0] sm:$0xff]
        %v3981 = vld [vmem:[#allocation18 + $0x2b8] sm:$0xff]
        %v3982 = vld [vmem:[#allocation18 + $0x2c0] sm:$0xff]
        %v3983 = vld [vmem:[#allocation18 + $0x2c8] sm:$0xff]
        %v3984 = vld [vmem:[#allocation18 + $0x2d0] sm:$0xff]
        %v3985 = vld [vmem:[#allocation18 + $0x2d8] sm:$0xff]
        %v3986 = vld [vmem:[#allocation18 + $0x2e0] sm:$0xff]
        %v3987 = vld [vmem:[#allocation18 + $0x2e8] sm:$0xff]
        %v3988 = vld [vmem:[#allocation18 + $0x2f0] sm:$0xff]
        %v3989 = vld [vmem:[#allocation18 + $0x2f8] sm:$0xff]
        %v3990 = vld [vmem:[#allocation18 + $0x300] sm:$0xff]
        %v3991 = vld [vmem:[#allocation18 + $0x308] sm:$0xff]
        %v3992 = vld [vmem:[#allocation18 + $0x310] sm:$0xff]
        %v3993 = vld [vmem:[#allocation18 + $0x318] sm:$0xff]
        %v3994 = vld [vmem:[#allocation18 + $0x320] sm:$0xff]
        %v3995 = vld [vmem:[#allocation18 + $0x328] sm:$0xff]
        %v3996 = vld [vmem:[#allocation18 + $0x330] sm:$0xff]
        %v3997 = vld [vmem:[#allocation18 + $0x338] sm:$0xff]
        %v3998 = vld [vmem:[#allocation18 + $0x340] sm:$0xff]
        %v3999 = vld [vmem:[#allocation18 + $0x348] sm:$0xff]
        %v4000 = vld [vmem:[#allocation18 + $0x350] sm:$0xff]
        %v4001 = vld [vmem:[#allocation18 + $0x358] sm:$0xff]
        %v4002 = vld [vmem:[#allocation18 + $0x360] sm:$0xff]
        %v4003 = vld [vmem:[#allocation18 + $0x368] sm:$0xff]
        %v4004 = vld [vmem:[#allocation18 + $0x370] sm:$0xff]
        %v4005 = vld [vmem:[#allocation18 + $0x378] sm:$0xff]
        %v4006 = vld [vmem:[#allocation18 + $0x380] sm:$0xff]
        %v4007 = vld [vmem:[#allocation18 + $0x388] sm:$0xff]
        %v4008 = vld [vmem:[#allocation18 + $0x390] sm:$0xff]
        %v4009 = vld [vmem:[#allocation18 + $0x398] sm:$0xff]
        %v4010 = vld [vmem:[#allocation18 + $0x3a0] sm:$0xff]
        %v4011 = vld [vmem:[#allocation18 + $0x3a8] sm:$0xff]
        %v4012 = vld [vmem:[#allocation18 + $0x3b0] sm:$0xff]
        %v4013 = vld [vmem:[#allocation18 + $0x3b8] sm:$0xff]
        %v4014 = vld [vmem:[#allocation18 + $0x3c0] sm:$0xff]
        %v4015 = vld [vmem:[#allocation18 + $0x3c8] sm:$0xff]
        %v4016 = vld [vmem:[#allocation18 + $0x3d0] sm:$0xff]
        %v4017 = vld [vmem:[#allocation18 + $0x3d8] sm:$0xff]
        %v4018 = vld [vmem:[#allocation18 + $0x3e0] sm:$0xff]
        %v4019 = vld [vmem:[#allocation18 + $0x3e8] sm:$0xff]
        %v4020 = vld [vmem:[#allocation18 + $0x3f0] sm:$0xff]
        %v4021 = vld [vmem:[#allocation18 + $0x3f8] sm:$0xff]
        %v4022 = vld [vmem:[%s16] sm:$0x3]
        %v4024 = vlaneseq
        %v4025 = vshrl.u32 %v4024, 7
        %v4026 = vsub.s32 0, %v4025
        %v4027 = vrot.slane %v4022, %v4026
        %v4028 = vlaneseq
        %v4029 = vshrl.u32 %v4028, 7
        %v4030 = vsub.s32 1, %v4029
        %v4031 = vrot.slane %v4022, %v4030
        %v4162 = vunpack.c.l.b16 %v3894
        %v4163 = vunpack.c.h.b16 %v3894
        %v4164 = vunpack.c.l.b16 %v3895
        %v4165 = vunpack.c.h.b16 %v3895
        %v4166 = vunpack.c.l.b16 %v3896
        %v4167 = vunpack.c.h.b16 %v3896
        %v4168 = vunpack.c.l.b16 %v3897
        %v4169 = vunpack.c.h.b16 %v3897
        %v4170 = vunpack.c.l.b16 %v3898
        %v4171 = vunpack.c.h.b16 %v3898
        %v4172 = vunpack.c.l.b16 %v3899
        %v4173 = vunpack.c.h.b16 %v3899
        %v4174 = vunpack.c.l.b16 %v3900
        %v4175 = vunpack.c.h.b16 %v3900
        %v4176 = vunpack.c.l.b16 %v3901
        %v4177 = vunpack.c.h.b16 %v3901
        %v4178 = vunpack.c.l.b16 %v3902
        %v4179 = vunpack.c.h.b16 %v3902
        %v4180 = vunpack.c.l.b16 %v3903
        %v4181 = vunpack.c.h.b16 %v3903
        %v4182 = vunpack.c.l.b16 %v3904
        %v4183 = vunpack.c.h.b16 %v3904
        %v4184 = vunpack.c.l.b16 %v3905
        %v4185 = vunpack.c.h.b16 %v3905
        %v4186 = vunpack.c.l.b16 %v3906
        %v4187 = vunpack.c.h.b16 %v3906
        %v4188 = vunpack.c.l.b16 %v3907
        %v4189 = vunpack.c.h.b16 %v3907
        %v4190 = vunpack.c.l.b16 %v3908
        %v4191 = vunpack.c.h.b16 %v3908
        %v4192 = vunpack.c.l.b16 %v3909
        %v4193 = vunpack.c.h.b16 %v3909
        %v4194 = vunpack.c.l.b16 %v3910
        %v4195 = vunpack.c.h.b16 %v3910
        %v4196 = vunpack.c.l.b16 %v3911
        %v4197 = vunpack.c.h.b16 %v3911
        %v4198 = vunpack.c.l.b16 %v3912
        %v4199 = vunpack.c.h.b16 %v3912
        %v4200 = vunpack.c.l.b16 %v3913
        %v4201 = vunpack.c.h.b16 %v3913
        %v4202 = vunpack.c.l.b16 %v3914
        %v4203 = vunpack.c.h.b16 %v3914
        %v4204 = vunpack.c.l.b16 %v3915
        %v4205 = vunpack.c.h.b16 %v3915
        %v4206 = vunpack.c.l.b16 %v3916
        %v4207 = vunpack.c.h.b16 %v3916
        %v4208 = vunpack.c.l.b16 %v3917
        %v4209 = vunpack.c.h.b16 %v3917
        %v4210 = vunpack.c.l.b16 %v3918
        %v4211 = vunpack.c.h.b16 %v3918
        %v4212 = vunpack.c.l.b16 %v3919
        %v4213 = vunpack.c.h.b16 %v3919
        %v4214 = vunpack.c.l.b16 %v3920
        %v4215 = vunpack.c.h.b16 %v3920
        %v4216 = vunpack.c.l.b16 %v3921
        %v4217 = vunpack.c.h.b16 %v3921
        %v4218 = vunpack.c.l.b16 %v3922
        %v4219 = vunpack.c.h.b16 %v3922
        %v4220 = vunpack.c.l.b16 %v3923
        %v4221 = vunpack.c.h.b16 %v3923
        %v4222 = vunpack.c.l.b16 %v3924
        %v4223 = vunpack.c.h.b16 %v3924
        %v4224 = vunpack.c.l.b16 %v3925
        %v4225 = vunpack.c.h.b16 %v3925
        %v4226 = vunpack.c.l.b16 %v3926
        %v4227 = vunpack.c.h.b16 %v3926
        %v4228 = vunpack.c.l.b16 %v3927
        %v4229 = vunpack.c.h.b16 %v3927
        %v4230 = vunpack.c.l.b16 %v3928
        %v4231 = vunpack.c.h.b16 %v3928
        %v4232 = vunpack.c.l.b16 %v3929
        %v4233 = vunpack.c.h.b16 %v3929
        %v4234 = vunpack.c.l.b16 %v3930
        %v4235 = vunpack.c.h.b16 %v3930
        %v4236 = vunpack.c.l.b16 %v3931
        %v4237 = vunpack.c.h.b16 %v3931
        %v4238 = vunpack.c.l.b16 %v3932
        %v4239 = vunpack.c.h.b16 %v3932
        %v4240 = vunpack.c.l.b16 %v3933
        %v4241 = vunpack.c.h.b16 %v3933
        %v4242 = vunpack.c.l.b16 %v3934
        %v4243 = vunpack.c.h.b16 %v3934
        %v4244 = vunpack.c.l.b16 %v3935
        %v4245 = vunpack.c.h.b16 %v3935
        %v4246 = vunpack.c.l.b16 %v3936
        %v4247 = vunpack.c.h.b16 %v3936
        %v4248 = vunpack.c.l.b16 %v3937
        %v4249 = vunpack.c.h.b16 %v3937
        %v4250 = vunpack.c.l.b16 %v3938
        %v4251 = vunpack.c.h.b16 %v3938
        %v4252 = vunpack.c.l.b16 %v3939
        %v4253 = vunpack.c.h.b16 %v3939
        %v4254 = vunpack.c.l.b16 %v3940
        %v4255 = vunpack.c.h.b16 %v3940
        %v4256 = vunpack.c.l.b16 %v3941
        %v4257 = vunpack.c.h.b16 %v3941
        %v4258 = vunpack.c.l.b16 %v3942
        %v4259 = vunpack.c.h.b16 %v3942
        %v4260 = vunpack.c.l.b16 %v3943
        %v4261 = vunpack.c.h.b16 %v3943
        %v4262 = vunpack.c.l.b16 %v3944
        %v4263 = vunpack.c.h.b16 %v3944
        %v4264 = vunpack.c.l.b16 %v3945
        %v4265 = vunpack.c.h.b16 %v3945
        %v4266 = vunpack.c.l.b16 %v3946
        %v4267 = vunpack.c.h.b16 %v3946
        %v4268 = vunpack.c.l.b16 %v3947
        %v4269 = vunpack.c.h.b16 %v3947
        %v4270 = vunpack.c.l.b16 %v3948
        %v4271 = vunpack.c.h.b16 %v3948
        %v4272 = vunpack.c.l.b16 %v3949
        %v4273 = vunpack.c.h.b16 %v3949
        %v4274 = vunpack.c.l.b16 %v3950
        %v4275 = vunpack.c.h.b16 %v3950
        %v4276 = vunpack.c.l.b16 %v3951
        %v4277 = vunpack.c.h.b16 %v3951
        %v4278 = vunpack.c.l.b16 %v3952
        %v4279 = vunpack.c.h.b16 %v3952
        %v4280 = vunpack.c.l.b16 %v3953
        %v4281 = vunpack.c.h.b16 %v3953
        %v4282 = vunpack.c.l.b16 %v3954
        %v4283 = vunpack.c.h.b16 %v3954
        %v4284 = vunpack.c.l.b16 %v3955
        %v4285 = vunpack.c.h.b16 %v3955
        %v4286 = vunpack.c.l.b16 %v3956
        %v4287 = vunpack.c.h.b16 %v3956
        %v4288 = vunpack.c.l.b16 %v3957
        %v4289 = vunpack.c.h.b16 %v3957
        %v4290 = vunpack.c.l.b16 %v3958
        %v4291 = vunpack.c.h.b16 %v3958
        %v4292 = vunpack.c.l.b16 %v3959
        %v4293 = vunpack.c.h.b16 %v3959
        %v4294 = vunpack.c.l.b16 %v3960
        %v4295 = vunpack.c.h.b16 %v3960
        %v4296 = vunpack.c.l.b16 %v3961
        %v4297 = vunpack.c.h.b16 %v3961
        %v4298 = vunpack.c.l.b16 %v3962
        %v4299 = vunpack.c.h.b16 %v3962
        %v4300 = vunpack.c.l.b16 %v3963
        %v4301 = vunpack.c.h.b16 %v3963
        %v4302 = vunpack.c.l.b16 %v3964
        %v4303 = vunpack.c.h.b16 %v3964
        %v4304 = vunpack.c.l.b16 %v3965
        %v4305 = vunpack.c.h.b16 %v3965
        %v4306 = vunpack.c.l.b16 %v3966
        %v4307 = vunpack.c.h.b16 %v3966
        %v4308 = vunpack.c.l.b16 %v3967
        %v4309 = vunpack.c.h.b16 %v3967
        %v4310 = vunpack.c.l.b16 %v3968
        %v4311 = vunpack.c.h.b16 %v3968
        %v4312 = vunpack.c.l.b16 %v3969
        %v4313 = vunpack.c.h.b16 %v3969
        %v4314 = vunpack.c.l.b16 %v3970
        %v4315 = vunpack.c.h.b16 %v3970
        %v4316 = vunpack.c.l.b16 %v3971
        %v4317 = vunpack.c.h.b16 %v3971
        %v4318 = vunpack.c.l.b16 %v3972
        %v4319 = vunpack.c.h.b16 %v3972
        %v4320 = vunpack.c.l.b16 %v3973
        %v4321 = vunpack.c.h.b16 %v3973
        %v4322 = vunpack.c.l.b16 %v3974
        %v4323 = vunpack.c.h.b16 %v3974
        %v4324 = vunpack.c.l.b16 %v3975
        %v4325 = vunpack.c.h.b16 %v3975
        %v4326 = vunpack.c.l.b16 %v3976
        %v4327 = vunpack.c.h.b16 %v3976
        %v4328 = vunpack.c.l.b16 %v3977
        %v4329 = vunpack.c.h.b16 %v3977
        %v4330 = vunpack.c.l.b16 %v3978
        %v4331 = vunpack.c.h.b16 %v3978
        %v4332 = vunpack.c.l.b16 %v3979
        %v4333 = vunpack.c.h.b16 %v3979
        %v4334 = vunpack.c.l.b16 %v3980
        %v4335 = vunpack.c.h.b16 %v3980
        %v4336 = vunpack.c.l.b16 %v3981
        %v4337 = vunpack.c.h.b16 %v3981
        %v4338 = vunpack.c.l.b16 %v3982
        %v4339 = vunpack.c.h.b16 %v3982
        %v4340 = vunpack.c.l.b16 %v3983
        %v4341 = vunpack.c.h.b16 %v3983
        %v4342 = vunpack.c.l.b16 %v3984
        %v4343 = vunpack.c.h.b16 %v3984
        %v4344 = vunpack.c.l.b16 %v3985
        %v4345 = vunpack.c.h.b16 %v3985
        %v4346 = vunpack.c.l.b16 %v3986
        %v4347 = vunpack.c.h.b16 %v3986
        %v4348 = vunpack.c.l.b16 %v3987
        %v4349 = vunpack.c.h.b16 %v3987
        %v4350 = vunpack.c.l.b16 %v3988
        %v4351 = vunpack.c.h.b16 %v3988
        %v4352 = vunpack.c.l.b16 %v3989
        %v4353 = vunpack.c.h.b16 %v3989
        %v4354 = vunpack.c.l.b16 %v3990
        %v4355 = vunpack.c.h.b16 %v3990
        %v4356 = vunpack.c.l.b16 %v3991
        %v4357 = vunpack.c.h.b16 %v3991
        %v4358 = vunpack.c.l.b16 %v3992
        %v4359 = vunpack.c.h.b16 %v3992
        %v4360 = vunpack.c.l.b16 %v3993
        %v4361 = vunpack.c.h.b16 %v3993
        %v4362 = vunpack.c.l.b16 %v3994
        %v4363 = vunpack.c.h.b16 %v3994
        %v4364 = vunpack.c.l.b16 %v3995
        %v4365 = vunpack.c.h.b16 %v3995
        %v4366 = vunpack.c.l.b16 %v3996
        %v4367 = vunpack.c.h.b16 %v3996
        %v4368 = vunpack.c.l.b16 %v3997
        %v4369 = vunpack.c.h.b16 %v3997
        %v4370 = vunpack.c.l.b16 %v3998
        %v4371 = vunpack.c.h.b16 %v3998
        %v4372 = vunpack.c.l.b16 %v3999
        %v4373 = vunpack.c.h.b16 %v3999
        %v4374 = vunpack.c.l.b16 %v4000
        %v4375 = vunpack.c.h.b16 %v4000
        %v4376 = vunpack.c.l.b16 %v4001
        %v4377 = vunpack.c.h.b16 %v4001
        %v4378 = vunpack.c.l.b16 %v4002
        %v4379 = vunpack.c.h.b16 %v4002
        %v4380 = vunpack.c.l.b16 %v4003
        %v4381 = vunpack.c.h.b16 %v4003
        %v4382 = vunpack.c.l.b16 %v4004
        %v4383 = vunpack.c.h.b16 %v4004
        %v4384 = vunpack.c.l.b16 %v4005
        %v4385 = vunpack.c.h.b16 %v4005
        %v4386 = vunpack.c.l.b16 %v4006
        %v4387 = vunpack.c.h.b16 %v4006
        %v4388 = vunpack.c.l.b16 %v4007
        %v4389 = vunpack.c.h.b16 %v4007
        %v4390 = vunpack.c.l.b16 %v4008
        %v4391 = vunpack.c.h.b16 %v4008
        %v4392 = vunpack.c.l.b16 %v4009
        %v4393 = vunpack.c.h.b16 %v4009
        %v4394 = vunpack.c.l.b16 %v4010
        %v4395 = vunpack.c.h.b16 %v4010
        %v4396 = vunpack.c.l.b16 %v4011
        %v4397 = vunpack.c.h.b16 %v4011
        %v4398 = vunpack.c.l.b16 %v4012
        %v4399 = vunpack.c.h.b16 %v4012
        %v4400 = vunpack.c.l.b16 %v4013
        %v4401 = vunpack.c.h.b16 %v4013
        %v4402 = vunpack.c.l.b16 %v4014
        %v4403 = vunpack.c.h.b16 %v4014
        %v4404 = vunpack.c.l.b16 %v4015
        %v4405 = vunpack.c.h.b16 %v4015
        %v4406 = vunpack.c.l.b16 %v4016
        %v4407 = vunpack.c.h.b16 %v4016
        %v4408 = vunpack.c.l.b16 %v4017
        %v4409 = vunpack.c.h.b16 %v4017
        %v4410 = vunpack.c.l.b16 %v4018
        %v4411 = vunpack.c.h.b16 %v4018
        %v4412 = vunpack.c.l.b16 %v4019
        %v4413 = vunpack.c.h.b16 %v4019
        %v4414 = vunpack.c.l.b16 %v4020
        %v4415 = vunpack.c.h.b16 %v4020
        %v4416 = vunpack.c.l.b16 %v4021
        %v4417 = vunpack.c.h.b16 %v4021
        %v4418 = vpack.c.b16 %v4164, %v4162
        %v4419 = vpack.c.b16 %v4165, %v4163
        %v4420 = vpack.c.b16 %v4168, %v4166
        %v4421 = vpack.c.b16 %v4169, %v4167
        %v4422 = vpack.c.b16 %v4172, %v4170
        %v4423 = vpack.c.b16 %v4173, %v4171
        %v4424 = vpack.c.b16 %v4176, %v4174
        %v4425 = vpack.c.b16 %v4177, %v4175
        %v4426 = vpack.c.b16 %v4180, %v4178
        %v4427 = vpack.c.b16 %v4181, %v4179
        %v4428 = vpack.c.b16 %v4184, %v4182
        %v4429 = vpack.c.b16 %v4185, %v4183
        %v4430 = vpack.c.b16 %v4188, %v4186
        %v4431 = vpack.c.b16 %v4189, %v4187
        %v4432 = vpack.c.b16 %v4192, %v4190
        %v4433 = vpack.c.b16 %v4193, %v4191
        %v4434 = vpack.c.b16 %v4196, %v4194
        %v4435 = vpack.c.b16 %v4197, %v4195
        %v4436 = vpack.c.b16 %v4200, %v4198
        %v4437 = vpack.c.b16 %v4201, %v4199
        %v4438 = vpack.c.b16 %v4204, %v4202
        %v4439 = vpack.c.b16 %v4205, %v4203
        %v4440 = vpack.c.b16 %v4208, %v4206
        %v4441 = vpack.c.b16 %v4209, %v4207
        %v4442 = vpack.c.b16 %v4212, %v4210
        %v4443 = vpack.c.b16 %v4213, %v4211
        %v4444 = vpack.c.b16 %v4216, %v4214
        %v4445 = vpack.c.b16 %v4217, %v4215
        %v4446 = vpack.c.b16 %v4220, %v4218
        %v4447 = vpack.c.b16 %v4221, %v4219
        %v4448 = vpack.c.b16 %v4224, %v4222
        %v4449 = vpack.c.b16 %v4225, %v4223
        %v4450 = vpack.c.b16 %v4228, %v4226
        %v4451 = vpack.c.b16 %v4229, %v4227
        %v4452 = vpack.c.b16 %v4232, %v4230
        %v4453 = vpack.c.b16 %v4233, %v4231
        %v4454 = vpack.c.b16 %v4236, %v4234
        %v4455 = vpack.c.b16 %v4237, %v4235
        %v4456 = vpack.c.b16 %v4240, %v4238
        %v4457 = vpack.c.b16 %v4241, %v4239
        %v4458 = vpack.c.b16 %v4244, %v4242
        %v4459 = vpack.c.b16 %v4245, %v4243
        %v4460 = vpack.c.b16 %v4248, %v4246
        %v4461 = vpack.c.b16 %v4249, %v4247
        %v4462 = vpack.c.b16 %v4252, %v4250
        %v4463 = vpack.c.b16 %v4253, %v4251
        %v4464 = vpack.c.b16 %v4256, %v4254
        %v4465 = vpack.c.b16 %v4257, %v4255
        %v4466 = vpack.c.b16 %v4260, %v4258
        %v4467 = vpack.c.b16 %v4261, %v4259
        %v4468 = vpack.c.b16 %v4264, %v4262
        %v4469 = vpack.c.b16 %v4265, %v4263
        %v4470 = vpack.c.b16 %v4268, %v4266
        %v4471 = vpack.c.b16 %v4269, %v4267
        %v4472 = vpack.c.b16 %v4272, %v4270
        %v4473 = vpack.c.b16 %v4273, %v4271
        %v4474 = vpack.c.b16 %v4276, %v4274
        %v4475 = vpack.c.b16 %v4277, %v4275
        %v4476 = vpack.c.b16 %v4280, %v4278
        %v4477 = vpack.c.b16 %v4281, %v4279
        %v4478 = vpack.c.b16 %v4284, %v4282
        %v4479 = vpack.c.b16 %v4285, %v4283
        %v4480 = vpack.c.b16 %v4288, %v4286
        %v4481 = vpack.c.b16 %v4289, %v4287
        %v4482 = vpack.c.b16 %v4292, %v4290
        %v4483 = vpack.c.b16 %v4293, %v4291
        %v4484 = vpack.c.b16 %v4296, %v4294
        %v4485 = vpack.c.b16 %v4297, %v4295
        %v4486 = vpack.c.b16 %v4300, %v4298
        %v4487 = vpack.c.b16 %v4301, %v4299
        %v4488 = vpack.c.b16 %v4304, %v4302
        %v4489 = vpack.c.b16 %v4305, %v4303
        %v4490 = vpack.c.b16 %v4308, %v4306
        %v4491 = vpack.c.b16 %v4309, %v4307
        %v4492 = vpack.c.b16 %v4312, %v4310
        %v4493 = vpack.c.b16 %v4313, %v4311
        %v4494 = vpack.c.b16 %v4316, %v4314
        %v4495 = vpack.c.b16 %v4317, %v4315
        %v4496 = vpack.c.b16 %v4320, %v4318
        %v4497 = vpack.c.b16 %v4321, %v4319
        %v4498 = vpack.c.b16 %v4324, %v4322
        %v4499 = vpack.c.b16 %v4325, %v4323
        %v4500 = vpack.c.b16 %v4328, %v4326
        %v4501 = vpack.c.b16 %v4329, %v4327
        %v4502 = vpack.c.b16 %v4332, %v4330
        %v4503 = vpack.c.b16 %v4333, %v4331
        %v4504 = vpack.c.b16 %v4336, %v4334
        %v4505 = vpack.c.b16 %v4337, %v4335
        %v4506 = vpack.c.b16 %v4340, %v4338
        %v4507 = vpack.c.b16 %v4341, %v4339
        %v4508 = vpack.c.b16 %v4344, %v4342
        %v4509 = vpack.c.b16 %v4345, %v4343
        %v4510 = vpack.c.b16 %v4348, %v4346
        %v4511 = vpack.c.b16 %v4349, %v4347
        %v4512 = vpack.c.b16 %v4352, %v4350
        %v4513 = vpack.c.b16 %v4353, %v4351
        %v4514 = vpack.c.b16 %v4356, %v4354
        %v4515 = vpack.c.b16 %v4357, %v4355
        %v4516 = vpack.c.b16 %v4360, %v4358
        %v4517 = vpack.c.b16 %v4361, %v4359
        %v4518 = vpack.c.b16 %v4364, %v4362
        %v4519 = vpack.c.b16 %v4365, %v4363
        %v4520 = vpack.c.b16 %v4368, %v4366
        %v4521 = vpack.c.b16 %v4369, %v4367
        %v4522 = vpack.c.b16 %v4372, %v4370
        %v4523 = vpack.c.b16 %v4373, %v4371
        %v4524 = vpack.c.b16 %v4376, %v4374
        %v4525 = vpack.c.b16 %v4377, %v4375
        %v4526 = vpack.c.b16 %v4380, %v4378
        %v4527 = vpack.c.b16 %v4381, %v4379
        %v4528 = vpack.c.b16 %v4384, %v4382
        %v4529 = vpack.c.b16 %v4385, %v4383
        %v4530 = vpack.c.b16 %v4388, %v4386
        %v4531 = vpack.c.b16 %v4389, %v4387
        %v4532 = vpack.c.b16 %v4392, %v4390
        %v4533 = vpack.c.b16 %v4393, %v4391
        %v4534 = vpack.c.b16 %v4396, %v4394
        %v4535 = vpack.c.b16 %v4397, %v4395
        %v4536 = vpack.c.b16 %v4400, %v4398
        %v4537 = vpack.c.b16 %v4401, %v4399
        %v4538 = vpack.c.b16 %v4404, %v4402
        %v4539 = vpack.c.b16 %v4405, %v4403
        %v4540 = vpack.c.b16 %v4408, %v4406
        %v4541 = vpack.c.b16 %v4409, %v4407
        %v4542 = vpack.c.b16 %v4412, %v4410
        %v4543 = vpack.c.b16 %v4413, %v4411
        %v4544 = vpack.c.b16 %v4416, %v4414
        %v4545 = vpack.c.b16 %v4417, %v4415
        %4674 = vmatprep.subr.bf16.mxu0 %v4433
        %4675 = vmatpush1.bf16.msra.mxu0 %v4432
        %4676 = vmatprep.subr.bf16.mxu0 %v4431
        %4677 = vmatpush1.bf16.msra.mxu0 %v4430
        %4678 = vmatprep.subr.bf16.mxu0 %v4429
        %4679 = vmatpush1.bf16.msra.mxu0 %v4428
        %4680 = vmatprep.subr.bf16.mxu0 %v4427
        %4681 = vmatpush1.bf16.msra.mxu0 %v4426
        %4682 = vmatprep.subr.bf16.mxu0 %v4425
        %4683 = vmatpush1.bf16.msra.mxu0 %v4424
        %4684 = vmatprep.subr.bf16.mxu0 %v4423
        %4685 = vmatpush1.bf16.msra.mxu0 %v4422
        %4686 = vmatprep.subr.bf16.mxu0 %v4421
        %4687 = vmatpush1.bf16.msra.mxu0 %v4420
        %4688 = vmatprep.subr.bf16.mxu0 %v4419
        %4689 = vmatpush1.bf16.msra.mxu0 %v4418
        %4690 = vmatprep.subr.bf16.mxu0 %v4449
        %4691 = vmatpush2.bf16.msra.mxu0 %v4448
        %4692 = vmatprep.subr.bf16.mxu0 %v4447
        %4693 = vmatpush2.bf16.msra.mxu0 %v4446
        %4694 = vmatprep.subr.bf16.mxu0 %v4445
        %4695 = vmatpush2.bf16.msra.mxu0 %v4444
        %4696 = vmatprep.subr.bf16.mxu0 %v4443
        %4697 = vmatpush2.bf16.msra.mxu0 %v4442
        %4698 = vmatprep.subr.bf16.mxu0 %v4441
        %4699 = vmatpush2.bf16.msra.mxu0 %v4440
        %4700 = vmatprep.subr.bf16.mxu0 %v4439
        %4701 = vmatpush2.bf16.msra.mxu0 %v4438
        %4702 = vmatprep.subr.bf16.mxu0 %v4437
        %4703 = vmatpush2.bf16.msra.mxu0 %v4436
        %4704 = vmatprep.subr.bf16.mxu0 %v4435
        %4705 = vmatpush2.bf16.msra.mxu0 %v4434
        %4706 = vmatprep.mubr.bf16.mxu0 %v3887
        %4707 = vmatmul.mubr.bf16.gmra.mxu0 %v3886
        %v4708 = vpop.f32.mrf.mxu0
        %v4709 = vadd.f32 %v4027, %v4708
        %v4710 = vpop.f32.mrf.mxu0
        %v4711 = vadd.f32 %v4031, %v4710
        %v4712 = vpop.f32.mrf.mxu0
        %v4713 = vpop.f32.mrf.mxu0
        %4714 = vdwg.mxu0
        %4715 = vmatprep.subr.bf16.mxu0 %v4465
        %4716 = vmatpush1.bf16.msra.mxu0 %v4464
        %4717 = vmatprep.subr.bf16.mxu0 %v4463
        %4718 = vmatpush1.bf16.msra.mxu0 %v4462
        %4719 = vmatprep.subr.bf16.mxu0 %v4461
        %4720 = vmatpush1.bf16.msra.mxu0 %v4460
        %4721 = vmatprep.subr.bf16.mxu0 %v4459
        %4722 = vmatpush1.bf16.msra.mxu0 %v4458
        %4723 = vmatprep.subr.bf16.mxu0 %v4457
        %4724 = vmatpush1.bf16.msra.mxu0 %v4456
        %4725 = vmatprep.subr.bf16.mxu0 %v4455
        %4726 = vmatpush1.bf16.msra.mxu0 %v4454
        %4727 = vmatprep.subr.bf16.mxu0 %v4453
        %4728 = vmatpush1.bf16.msra.mxu0 %v4452
        %4729 = vmatprep.subr.bf16.mxu0 %v4451
        %4730 = vmatpush1.bf16.msra.mxu0 %v4450
        %4731 = vmatprep.subr.bf16.mxu0 %v4481
        %4732 = vmatpush2.bf16.msra.mxu0 %v4480
        %4733 = vmatprep.subr.bf16.mxu0 %v4479
        %4734 = vmatpush2.bf16.msra.mxu0 %v4478
        %4735 = vmatprep.subr.bf16.mxu0 %v4477
        %4736 = vmatpush2.bf16.msra.mxu0 %v4476
        %4737 = vmatprep.subr.bf16.mxu0 %v4475
        %4738 = vmatpush2.bf16.msra.mxu0 %v4474
        %4739 = vmatprep.subr.bf16.mxu0 %v4473
        %4740 = vmatpush2.bf16.msra.mxu0 %v4472
        %4741 = vmatprep.subr.bf16.mxu0 %v4471
        %4742 = vmatpush2.bf16.msra.mxu0 %v4470
        %4743 = vmatprep.subr.bf16.mxu0 %v4469
        %4744 = vmatpush2.bf16.msra.mxu0 %v4468
        %4745 = vmatprep.subr.bf16.mxu0 %v4467
        %4746 = vmatpush2.bf16.msra.mxu0 %v4466
        %4747 = vmatprep.mubr.bf16.mxu0 %v3889
        %4748 = vmatmul.mubr.bf16.gmra.mxu0 %v3888
        %v4749 = vpop.f32.mrf.mxu0
        %v4750 = vadd.f32 %v4709, %v4749
        %v4751 = vpop.f32.mrf.mxu0
        %v4752 = vadd.f32 %v4711, %v4751
        %v4753 = vpop.f32.mrf.mxu0
        %v4754 = vpop.f32.mrf.mxu0
        %4755 = vdwg.mxu0
        %4756 = vmatprep.subr.bf16.mxu0 %v4497
        %4757 = vmatpush1.bf16.msra.mxu0 %v4496
        %4758 = vmatprep.subr.bf16.mxu0 %v4495
        %4759 = vmatpush1.bf16.msra.mxu0 %v4494
        %4760 = vmatprep.subr.bf16.mxu0 %v4493
        %4761 = vmatpush1.bf16.msra.mxu0 %v4492
        %4762 = vmatprep.subr.bf16.mxu0 %v4491
        %4763 = vmatpush1.bf16.msra.mxu0 %v4490
        %4764 = vmatprep.subr.bf16.mxu0 %v4489
        %4765 = vmatpush1.bf16.msra.mxu0 %v4488
        %4766 = vmatprep.subr.bf16.mxu0 %v4487
        %4767 = vmatpush1.bf16.msra.mxu0 %v4486
        %4768 = vmatprep.subr.bf16.mxu0 %v4485
        %4769 = vmatpush1.bf16.msra.mxu0 %v4484
        %4770 = vmatprep.subr.bf16.mxu0 %v4483
        %4771 = vmatpush1.bf16.msra.mxu0 %v4482
        %4772 = vmatprep.subr.bf16.mxu0 %v4513
        %4773 = vmatpush2.bf16.msra.mxu0 %v4512
        %4774 = vmatprep.subr.bf16.mxu0 %v4511
        %4775 = vmatpush2.bf16.msra.mxu0 %v4510
        %4776 = vmatprep.subr.bf16.mxu0 %v4509
        %4777 = vmatpush2.bf16.msra.mxu0 %v4508
        %4778 = vmatprep.subr.bf16.mxu0 %v4507
        %4779 = vmatpush2.bf16.msra.mxu0 %v4506
        %4780 = vmatprep.subr.bf16.mxu0 %v4505
        %4781 = vmatpush2.bf16.msra.mxu0 %v4504
        %4782 = vmatprep.subr.bf16.mxu0 %v4503
        %4783 = vmatpush2.bf16.msra.mxu0 %v4502
        %4784 = vmatprep.subr.bf16.mxu0 %v4501
        %4785 = vmatpush2.bf16.msra.mxu0 %v4500
        %4786 = vmatprep.subr.bf16.mxu0 %v4499
        %4787 = vmatpush2.bf16.msra.mxu0 %v4498
        %4788 = vmatprep.mubr.bf16.mxu0 %v3891
        %4789 = vmatmul.mubr.bf16.gmra.mxu0 %v3890
        %v4790 = vpop.f32.mrf.mxu0
        %v4791 = vadd.f32 %v4750, %v4790
        %v4792 = vpop.f32.mrf.mxu0
        %v4793 = vadd.f32 %v4752, %v4792
        %v4794 = vpop.f32.mrf.mxu0
        %v4795 = vpop.f32.mrf.mxu0
        %4796 = vdwg.mxu0
        %4797 = vmatprep.subr.bf16.mxu0 %v4529
        %4798 = vmatpush1.bf16.msra.mxu0 %v4528
        %4799 = vmatprep.subr.bf16.mxu0 %v4527
        %4800 = vmatpush1.bf16.msra.mxu0 %v4526
        %4801 = vmatprep.subr.bf16.mxu0 %v4525
        %4802 = vmatpush1.bf16.msra.mxu0 %v4524
        %4803 = vmatprep.subr.bf16.mxu0 %v4523
        %4804 = vmatpush1.bf16.msra.mxu0 %v4522
        %4805 = vmatprep.subr.bf16.mxu0 %v4521
        %4806 = vmatpush1.bf16.msra.mxu0 %v4520
        %4807 = vmatprep.subr.bf16.mxu0 %v4519
        %4808 = vmatpush1.bf16.msra.mxu0 %v4518
        %4809 = vmatprep.subr.bf16.mxu0 %v4517
        %4810 = vmatpush1.bf16.msra.mxu0 %v4516
        %4811 = vmatprep.subr.bf16.mxu0 %v4515
        %4812 = vmatpush1.bf16.msra.mxu0 %v4514
        %4813 = vmatprep.subr.bf16.mxu0 %v4545
        %4814 = vmatpush2.bf16.msra.mxu0 %v4544
        %4815 = vmatprep.subr.bf16.mxu0 %v4543
        %4816 = vmatpush2.bf16.msra.mxu0 %v4542
        %4817 = vmatprep.subr.bf16.mxu0 %v4541
        %4818 = vmatpush2.bf16.msra.mxu0 %v4540
        %4819 = vmatprep.subr.bf16.mxu0 %v4539
        %4820 = vmatpush2.bf16.msra.mxu0 %v4538
        %4821 = vmatprep.subr.bf16.mxu0 %v4537
        %4822 = vmatpush2.bf16.msra.mxu0 %v4536
        %4823 = vmatprep.subr.bf16.mxu0 %v4535
        %4824 = vmatpush2.bf16.msra.mxu0 %v4534
        %4825 = vmatprep.subr.bf16.mxu0 %v4533
        %4826 = vmatpush2.bf16.msra.mxu0 %v4532
        %4827 = vmatprep.subr.bf16.mxu0 %v4531
        %4828 = vmatpush2.bf16.msra.mxu0 %v4530
        %4829 = vmatprep.mubr.bf16.mxu0 %v3893
        %4830 = vmatmul.mubr.bf16.gmra.mxu0 %v3892
        %v4831 = vpop.f32.mrf.mxu0
        %v4832 = vadd.f32 %v4791, %v4831
        %v4833 = vpop.f32.mrf.mxu0
        %v4834 = vadd.f32 %v4793, %v4833
        %v4835 = vpop.f32.mrf.mxu0
        %v4836 = vpop.f32.mrf.mxu0
        %4837 = vdwg.mxu0
        %v4838 = vadd.f32 %v2785, %v4832
        %v4839 = vadd.f32 %v2786, %v4834
        %4840 = vst [vmem:[%s692] sm:$0xff] %v4838
        %4841 = vst [vmem:[%s692 + $0x8] sm:$0xff] %v4839
        %s4842 = sand.u32 %s422, 1
        %s4843 = scalar_lea.sflag [#allocation6], %s4842
        %s4844 = sand.u32 %s422, 1
        %s4845 = smul.addr %s4844, 16
        %s4846 = scalar_lea.vmem [#allocation19], %s4845
        // Predicated region
        $region129: #{tpu_custom_call.1} parent=87 // pred_check
          %p4847 = pneg %p432
        $region130: #{tpu_custom_call.1} parent=87 // pred_check_branch
          %4849 = sbr.rel (%p4847) target = $region132
        $region131: #{tpu_custom_call.1} parent=87 // pred_region
          %s4851 = ssub.s32 256, 256
          %4852 = vsyncadd %s4843, %s4851
          %s4853 = smul.addr %s43, 2
          %s4854 = smul.addr %s42, 4
          %s4855 = sadd.s32 %s4853, %s4854
          %s4856 = smul.addr %s4855, 128
          %s4857 = scalar_lea.hbm %s17, %s4856
          %s4859 = sshll.u32 %s4846, 4
          %s4860 = int_to_ptr.vmem [resolvable:$true] %s4859
          %4862 = dma.vmem_to_hbm [thread:$0]  %s4860, 256, %s4857, %s4843
        $region132: #{tpu_custom_call.1} parent=87 // pred_fallthru
          _
      $region88: #{tpu_custom_call.1} parent=5 // pred_fallthru
        _
      %p4863 = scmp.le.s32.totalorder 2, %s33
      // Predicated region
      $region133: #{tpu_custom_call.1} parent=5 // pred_check
        %p4864 = pneg %p4863
      $region134: #{tpu_custom_call.1} parent=5 // pred_check_branch
        %4866 = sbr.rel (%p4864) target = $region136
      $region135: #{tpu_custom_call.1} parent=5 // pred_region
        %s4867 = ssub.s32 %s33, 2
        // Predicated region
        $region137: #{tpu_custom_call.1} parent=135 // pred_check
          %p4868 = pneg %p438
        $region138: #{tpu_custom_call.1} parent=135 // pred_check_branch
          %4870 = sbr.rel (%p4868) target = $region140
        $region139: #{tpu_custom_call.1} parent=135 // pred_region
          %s4871 = sand.u32 %s423, 1
          %s4872 = scalar_lea.sflag [#allocation6], %s4871
          %s4873 = sand.u32 %s423, 1
          %s4874 = smul.addr %s4873, 16
          %s4875 = scalar_lea.vmem [#allocation19], %s4874
          %4876 = dma.done %s4872, 256
        $region140: #{tpu_custom_call.1} parent=135 // pred_fallthru
          _
      $region136: #{tpu_custom_call.1} parent=5 // pred_fallthru
        _
    $region6: #{tpu_custom_call.1} parent=1 // loop_footer
      %s37 = sadd.s32 1, %s33
    $region7: #{tpu_custom_call.1} parent=1 // loop_footer_branch
      %32 = sbr.rel target = $region3
    $region8: #{tpu_custom_call.1} parent=1 // loop_exit
      _
    %4877 = vsyncpa [#allocation5], 1
    %s4878 = scalar_lea.sflag [#allocation5], 1
    %4879 = vsyncpa %s4878, 1
    %4880 = vsyncpa [#allocation8], 1
    %4881 = vsyncpa [#allocation11], 1
    %4882 = vsyncpa [#allocation14], 1
    %4883 = vsyncpa [#allocation17], 1
    %4884 = vsyncpa [#allocation6], 1
    %s4885 = scalar_lea.sflag [#allocation6], 1
    %4886 = vsyncpa %s4885, 1

</llo_original>
